<compile_context>
chip_gen: v7x
topology: tpu7x:2x2x1
jax: 0.10.0
libtpu: 0.0.40
codegen_flags: <defaults>
</compile_context>

<pallas_src>
import jax
import jax.numpy as jnp
import numpy as np
from jax import lax
from jax.experimental import pallas as pl
from jax.experimental.pallas import tpu as pltpu


# ----------------------------------------------------------------------------
# Pallas kernel: full SPPF forward for one batch element.
# ----------------------------------------------------------------------------
def sppf_kernel(x_ref, w1_ref, s1_ref, b1_ref, w2_ref, s2_ref, b2_ref,
                o_ref, padw_ref, padh_ref, cat_ref):
    _, H, W, c1 = x_ref.shape
    c_ = w1_ref.shape[1]
    c2p = s2_ref.shape[1]

    # ---- cv1: 1x1 conv as bf16 MXU matmul (f32 accum) + folded BN + SiLU ---
    xf = x_ref[0].reshape(H * W, c1).astype(jnp.bfloat16)
    y = jnp.dot(xf, w1_ref[...], preferred_element_type=jnp.float32)
    y = y * s1_ref[...] + b1_ref[...]
    y = y * jax.nn.sigmoid(y)                         # SiLU (EUP)

    # bf16 copy of y: feeds the pool cascade and channel slice 0 of the cv2
    # concat scratch (single long-K matmul later, no jnp.concatenate).
    y_bf = y.astype(jnp.bfloat16)                     # (H*W, c_)
    cat_ref[:, 0:c_] = y_bf

    # ---- -inf halos of the pool scratch buffers (interiors are overwritten
    #      by every pool call; halos are never written again) ----------------
    neg32 = jnp.float32(-jnp.inf)
    neg16 = jnp.bfloat16(-jnp.inf)
    padw_ref[:, 0:2, :] = jnp.full((H, 2, c_), neg32, jnp.float32)
    padw_ref[:, W + 2:W + 4, :] = jnp.full((H, 2, c_), neg32, jnp.float32)
    padh_ref[0:2, :, :] = jnp.full((2, W, c_), neg16, jnp.bfloat16)
    padh_ref[H + 2:H + 4, :, :] = jnp.full((2, W, c_), neg16, jnp.bfloat16)

    def maxpool5(t_bf16):
        # Separable 5x5/stride-1/pad-2 max pool (8 maxima per output):
        #   1) 1x5 along W: sublane-axis shifts, kept in f32 (proven packed
        #      layout for the odd-offset slices; identical results since max
        #      commutes with monotone rounding),
        #   2) 5x1 along H: leading-axis shifts (pure address arithmetic,
        #      always aligned) in bf16.
        padw_ref[:, 2:W + 2, :] = t_bf16.astype(jnp.float32)
        r = padw_ref[:, 0:W, :]
        for dx in range(1, 5):
            r = jnp.maximum(r, padw_ref[:, dx:dx + W, :])
        padh_ref[2:H + 2, :, :] = r.astype(jnp.bfloat16)
        out = padh_ref[0:H, :, :]
        for dy in range(1, 5):
            out = jnp.maximum(out, padh_ref[dy:dy + H, :, :])
        return out                                    # bf16 (H, W, c_)

    p = y_bf.reshape(H, W, c_)
    for k in range(1, 4):
        p = maxpool5(p)
        cat_ref[:, k * c_:(k + 1) * c_] = p.reshape(H * W, c_)

    # ---- cv2: single K=4*c_ bf16 matmul (f32 accum) + folded BN + SiLU -----
    acc = jnp.dot(cat_ref[...], w2_ref[...], preferred_element_type=jnp.float32)
    acc = acc * s2_ref[...] + b2_ref[...]
    acc = acc * jax.nn.sigmoid(acc)                   # SiLU
    o_ref[...] = acc.reshape(1, H, W, c2p)


# ----------------------------------------------------------------------------
# VMEM budgeting helpers (lane/sublane-padding aware, generation aware)
# ----------------------------------------------------------------------------
def _ceil_to(x, m):
    return ((x + m - 1) // m) * m


def _padded_bytes(shape, dtype):
    """VMEM bytes of a tile after lane padding (128) and sublane padding."""
    item = np.dtype(dtype).itemsize
    dims = list(shape)
    dims[-1] = _ceil_to(dims[-1], 128)
    if len(dims) >= 2:
        dims[-2] = _ceil_to(dims[-2], 8 * (4 // item))   # 8 f32 / 16 bf16
    n = 1
    for d in dims:
        n *= d
    return n * item


def _vmem_capacity_bytes():
    try:
        return int(pltpu.get_tpu_info().vmem_capacity_bytes)
    except Exception:
        return 64 * 1024 * 1024          # conservative (v7x per-core VMEM)


# ----------------------------------------------------------------------------
# Wrapper (NHWC in, NHWC out)
# ----------------------------------------------------------------------------
@jax.jit
def sppf_forward(x_nhwc, w1, s1, b1, w2, s2, b2):
    """x_nhwc: (N, H, W, c1) f32; returns (N, H, W, c2) f32."""
    N, H, W, c1 = x_nhwc.shape
    c_ = w1.shape[1]
    c2 = w2.shape[1]

    # lane-dense output: pad c2 up to a full vreg lane width when it is small
    c2p = 128 if c2 < 128 else c2
    if c2p != c2:
        w2p = jnp.pad(w2, ((0, 0), (0, c2p - c2)))
        s2p = jnp.pad(s2, ((0, c2p - c2),))
        b2p = jnp.pad(b2, ((0, c2p - c2),))
    else:
        w2p, s2p, b2p = w2, s2, b2

    # bf16 weights for the MXU (accumulation stays f32 in-kernel)
    w1b = w1.astype(jnp.bfloat16)
    w2b = w2p.astype(jnp.bfloat16)

    s1r = s1.reshape(1, c_)
    b1r = b1.reshape(1, c_)
    s2r = s2p.reshape(1, c2p)
    b2r = b2p.reshape(1, c2p)

    # ---- VMEM budget: double-buffered I/O and weight blocks + persistent
    #      scratch + in-flight intermediates, with lane/sublane padding ------
    io_bytes = 2 * (_padded_bytes((1, H, W, c1), jnp.float32)
                    + _padded_bytes((1, H, W, c2p), jnp.float32))
    wgt_bytes = 2 * (_padded_bytes((c1, c_), jnp.bfloat16)
                     + _padded_bytes((4 * c_, c2p), jnp.bfloat16)
                     + 2 * _padded_bytes((1, c_), jnp.float32)
                     + 2 * _padded_bytes((1, c2p), jnp.float32))
    scratch_bytes = (_padded_bytes((H, W + 4, c_), jnp.float32)
                     + _padded_bytes((H + 4, W, c_), jnp.bfloat16)
                     + _padded_bytes((H * W, 4 * c_), jnp.bfloat16))
    live_bytes = (_padded_bytes((H * W, c1), jnp.bfloat16)
                  + 4 * _padded_bytes((H * W, c_), jnp.float32)
                  + 4 * _padded_bytes((H, W, c_), jnp.bfloat16)
                  + 3 * _padded_bytes((H * W, c2p), jnp.float32))
    budget = io_bytes + wgt_bytes + scratch_bytes + live_bytes

    cap = int(0.78 * _vmem_capacity_bytes())          # ~100MiB v5e/v6e, ~50MiB v7x
    vmem_limit = int(min(cap, max(int(1.25 * budget), 16 * 1024 * 1024)))

    full2d = lambda n: (0, 0)

    out_p = pl.pallas_call(
        sppf_kernel,
        out_shape=jax.ShapeDtypeStruct((N, H, W, c2p), jnp.float32),
        grid=(N,),
        in_specs=[
            pl.BlockSpec((1, H, W, c1), lambda n: (n, 0, 0, 0)),
            pl.BlockSpec((c1, c_), full2d),
            pl.BlockSpec((1, c_), full2d),
            pl.BlockSpec((1, c_), full2d),
            pl.BlockSpec((4 * c_, c2p), full2d),
            pl.BlockSpec((1, c2p), full2d),
            pl.BlockSpec((1, c2p), full2d),
        ],
        out_specs=pl.BlockSpec((1, H, W, c2p), lambda n: (n, 0, 0, 0)),
        scratch_shapes=[
            pltpu.VMEM((H, W + 4, c_), jnp.float32),    # W-direction halo buf
            pltpu.VMEM((H + 4, W, c_), jnp.bfloat16),   # H-direction halo buf
            pltpu.VMEM((H * W, 4 * c_), jnp.bfloat16),  # cv2 concat buffer
        ],
        compiler_params=pltpu.CompilerParams(
            dimension_semantics=("parallel",),
            vmem_limit_bytes=vmem_limit),
    )(x_nhwc, w1b, s1r, b1r, w2b, s2r, b2r)

    return out_p[..., :c2] if c2p != c2 else out_p


# ----------------------------------------------------------------------------
# Pure-JAX f32 reference (for correctness check), NHWC
# ----------------------------------------------------------------------------
def sppf_reference(x_nhwc, w1, s1, b1, w2, s2, b2):
    N, H, W, c1 = x_nhwc.shape
    c_ = w1.shape[1]
    c2 = w2.shape[1]

    def silu(t):
        return t * jax.nn.sigmoid(t)

    y = x_nhwc.reshape(-1, c1) @ w1
    y = silu(y * s1 + b1).reshape(N, H, W, c_)

    def mp(t):
        return lax.reduce_window(t, -jnp.inf, lax.max,
                                 (1, 5, 5, 1), (1, 1, 1, 1),
                                 [(0, 0), (2, 2), (2, 2), (0, 0)])

    p1 = mp(y)
    p2 = mp(p1)
    p3 = mp(p2)
    cat = jnp.concatenate([y, p1, p2, p3], axis=-1)
    out = cat.reshape(-1, 4 * c_) @ w2
    out = silu(out * s2 + b2).reshape(N, H, W, c2)
    return out


# ----------------------------------------------------------------------------
# Deterministic parameter construction (synthetic, not a checkpoint load)
# ----------------------------------------------------------------------------
def make_params(key, c1, c2):
    c_ = c1 // 2
    ks = jax.random.split(key, 10)
    eps = 1e-5

    # cv1: 1x1 conv weight stored as (c_in, c_out) for the matmul
    w1 = 0.1 * jax.random.normal(ks[0], (c1, c_), jnp.float32)
    g1 = 1.0 + 0.1 * jax.random.normal(ks[1], (c_,), jnp.float32)
    be1 = 0.1 * jax.random.normal(ks[2], (c_,), jnp.float32)
    m1 = 0.1 * jax.random.normal(ks[3], (c_,), jnp.float32)
    v1 = 1.0 + 0.1 * jax.random.uniform(ks[4], (c_,), jnp.float32)
    s1 = g1 / jnp.sqrt(v1 + eps)
    b1 = be1 - m1 * s1

    # cv2: 1x1 conv weight (4*c_, c2)
    w2 = 0.1 * jax.random.normal(ks[5], (4 * c_, c2), jnp.float32)
    g2 = 1.0 + 0.1 * jax.random.normal(ks[6], (c2,), jnp.float32)
    be2 = 0.1 * jax.random.normal(ks[7], (c2,), jnp.float32)
    m2 = 0.1 * jax.random.normal(ks[8], (c2,), jnp.float32)
    v2 = 1.0 + 0.1 * jax.random.uniform(ks[9], (c2,), jnp.float32)
    s2 = g2 / jnp.sqrt(v2 + eps)
    b2 = be2 - m2 * s2

    return w1, s1, b1, w2, s2, b2


if __name__ == "__main__":
    N, H, W, c1 = 2, 16, 16, 32
    c2 = 32

    key = jax.random.PRNGKey(0)
    k_x, k_p = jax.random.split(key)
    x = jax.random.normal(k_x, (N, H, W, c1), jnp.float32)   # NHWC
    w1, s1, b1, w2, s2, b2 = make_params(k_p, c1, c2)

    out = jax.block_until_ready(sppf_forward(x, w1, s1, b1, w2, s2, b2))
    ref = jax.block_until_ready(sppf_reference(x, w1, s1, b1, w2, s2, b2))

    # bf16 MXU inputs (f32 accumulation) vs. full-f32 reference -> loosened tol
    np.testing.assert_allclose(np.asarray(out), np.asarray(ref),
                               rtol=2e-2, atol=3e-2)

    print("KERNEL_OK")
</pallas_src>

<mosaic_0001>
module attributes {stable_mosaic.version = 11 : i64} {
  func.func @sppf_kernel(%arg0: i32, %arg1: memref<1x16x16x32xf32, #tpu.memory_space<vmem>>, %arg2: memref<32x16xbf16, #tpu.memory_space<vmem>>, %arg3: memref<1x16xf32, #tpu.memory_space<vmem>>, %arg4: memref<1x16xf32, #tpu.memory_space<vmem>>, %arg5: memref<64x128xbf16, #tpu.memory_space<vmem>>, %arg6: memref<1x128xf32, #tpu.memory_space<vmem>>, %arg7: memref<1x128xf32, #tpu.memory_space<vmem>>, %arg8: memref<1x16x16x128xf32, #tpu.memory_space<vmem>>, %arg9: memref<16x20x16xf32, #tpu.memory_space<vmem>>, %arg10: memref<20x16x16xbf16, #tpu.memory_space<vmem>>, %arg11: memref<256x64xbf16, #tpu.memory_space<vmem>>) attributes {dimension_semantics = [#tpu.dimension_semantics<parallel>], iteration_bounds = array<i64: 2>, scalar_prefetch = 0 : i64, scratch_operands = 3 : i64, tpu.core_type = #tpu.core_type<tc>, window_params = [{transform_indices = @transform_0, window_bounds = array<i64: 1, 16, 16, 32>}, {pipeline_mode = #tpu.pipeline_mode<synchronous>, transform_indices = @transform_1, window_bounds = array<i64: 32, 16>}, {pipeline_mode = #tpu.pipeline_mode<synchronous>, transform_indices = @transform_2, window_bounds = array<i64: 1, 16>}, {pipeline_mode = #tpu.pipeline_mode<synchronous>, transform_indices = @transform_3, window_bounds = array<i64: 1, 16>}, {pipeline_mode = #tpu.pipeline_mode<synchronous>, transform_indices = @transform_4, window_bounds = array<i64: 64, 128>}, {pipeline_mode = #tpu.pipeline_mode<synchronous>, transform_indices = @transform_5, window_bounds = array<i64: 1, 128>}, {pipeline_mode = #tpu.pipeline_mode<synchronous>, transform_indices = @transform_6, window_bounds = array<i64: 1, 128>}, {transform_indices = @transform_7, window_bounds = array<i64: 1, 16, 16, 128>}]} {
    %c0 = arith.constant 0 : index
    %c0_0 = arith.constant 0 : index
    %c0_1 = arith.constant 0 : index
    %c0_2 = arith.constant 0 : index
    %0 = vector.load %arg1[%c0, %c0_0, %c0_1, %c0_2] : memref<1x16x16x32xf32, #tpu.memory_space<vmem>>, vector<1x16x16x32xf32>
    %1 = vector.shape_cast %0 : vector<1x16x16x32xf32> to vector<16x16x32xf32>
    %2 = vector.shape_cast %1 : vector<16x16x32xf32> to vector<256x32xf32>
    %3 = arith.truncf %2 : vector<256x32xf32> to vector<256x32xbf16>
    %c0_3 = arith.constant 0 : index
    %c0_4 = arith.constant 0 : index
    %4 = vector.load %arg2[%c0_3, %c0_4] : memref<32x16xbf16, #tpu.memory_space<vmem>>, vector<32x16xbf16>
    %cst = arith.constant dense<0.000000e+00> : vector<256x16xf32>
    %5 = tpu.matmul %3, %4, %cst {dimension_numbers = #tpu.dot_dimension_numbers<[1], [0], [0], [1], [0, 0, 1, 1], [], []>} : vector<256x32xbf16>, vector<32x16xbf16>, vector<256x16xf32> -> vector<256x16xf32>
    %c0_5 = arith.constant 0 : index
    %c0_6 = arith.constant 0 : index
    %6 = vector.load %arg3[%c0_5, %c0_6] : memref<1x16xf32, #tpu.memory_space<vmem>>, vector<1x16xf32>
    %7 = vector.broadcast %6 : vector<1x16xf32> to vector<256x16xf32>
    %8 = arith.mulf %5, %7 : vector<256x16xf32>
    %c0_7 = arith.constant 0 : index
    %c0_8 = arith.constant 0 : index
    %9 = vector.load %arg4[%c0_7, %c0_8] : memref<1x16xf32, #tpu.memory_space<vmem>>, vector<1x16xf32>
    %10 = vector.broadcast %9 : vector<1x16xf32> to vector<256x16xf32>
    %11 = arith.addf %8, %10 : vector<256x16xf32>
    %12 = arith.negf %11 : vector<256x16xf32>
    %13 = math.exp %12 : vector<256x16xf32>
    %cst_9 = arith.constant 1.000000e+00 : f32
    %14 = vector.broadcast %cst_9 : f32 to vector<256x16xf32>
    %15 = arith.addf %14, %13 : vector<256x16xf32>
    %16 = arith.divf %14, %15 : vector<256x16xf32>
    %17 = arith.mulf %11, %16 : vector<256x16xf32>
    %18 = arith.truncf %17 : vector<256x16xf32> to vector<256x16xbf16>
    %c0_10 = arith.constant 0 : index
    %c0_11 = arith.constant 0 : index
    %19 = vector.load %arg11[%c0_10, %c0_11] : memref<256x64xbf16, #tpu.memory_space<vmem>>, vector<256x16xbf16>
    tpu.vector_store %arg11[%c0_10, %c0_11], %18 {strides = array<i32>} : memref<256x64xbf16, #tpu.memory_space<vmem>>, vector<256x16xbf16>,
    %cst_12 = arith.constant 0xFF800000 : f32
    %20 = vector.broadcast %cst_12 : f32 to vector<16x2x16xf32>
    %c0_13 = arith.constant 0 : index
    %c0_14 = arith.constant 0 : index
    %c0_15 = arith.constant 0 : index
    %21 = vector.load %arg9[%c0_13, %c0_14, %c0_15] : memref<16x20x16xf32, #tpu.memory_space<vmem>>, vector<16x2x16xf32>
    tpu.vector_store %arg9[%c0_13, %c0_14, %c0_15], %20 {strides = array<i32>} : memref<16x20x16xf32, #tpu.memory_space<vmem>>, vector<16x2x16xf32>,
    %cst_16 = arith.constant 0xFF800000 : f32
    %22 = vector.broadcast %cst_16 : f32 to vector<16x2x16xf32>
    %c0_17 = arith.constant 0 : index
    %c18 = arith.constant 18 : index
    %c0_18 = arith.constant 0 : index
    %23 = vector.load %arg9[%c0_17, %c18, %c0_18] : memref<16x20x16xf32, #tpu.memory_space<vmem>>, vector<16x2x16xf32>
    tpu.vector_store %arg9[%c0_17, %c18, %c0_18], %22 {strides = array<i32>} : memref<16x20x16xf32, #tpu.memory_space<vmem>>, vector<16x2x16xf32>,
    %cst_19 = arith.constant 0xFF80 : bf16
    %24 = vector.broadcast %cst_19 : bf16 to vector<2x16x16xbf16>
    %c0_20 = arith.constant 0 : index
    %c0_21 = arith.constant 0 : index
    %c0_22 = arith.constant 0 : index
    %25 = vector.load %arg10[%c0_20, %c0_21, %c0_22] : memref<20x16x16xbf16, #tpu.memory_space<vmem>>, vector<2x16x16xbf16>
    tpu.vector_store %arg10[%c0_20, %c0_21, %c0_22], %24 {strides = array<i32>} : memref<20x16x16xbf16, #tpu.memory_space<vmem>>, vector<2x16x16xbf16>,
    %cst_23 = arith.constant 0xFF80 : bf16
    %26 = vector.broadcast %cst_23 : bf16 to vector<2x16x16xbf16>
    %c18_24 = arith.constant 18 : index
    %c0_25 = arith.constant 0 : index
    %c0_26 = arith.constant 0 : index
    %27 = vector.load %arg10[%c18_24, %c0_25, %c0_26] : memref<20x16x16xbf16, #tpu.memory_space<vmem>>, vector<2x16x16xbf16>
    tpu.vector_store %arg10[%c18_24, %c0_25, %c0_26], %26 {strides = array<i32>} : memref<20x16x16xbf16, #tpu.memory_space<vmem>>, vector<2x16x16xbf16>,
    %28 = vector.shape_cast %18 : vector<256x16xbf16> to vector<16x16x16xbf16>
    %29 = arith.extf %28 : vector<16x16x16xbf16> to vector<16x16x16xf32>
    %c0_27 = arith.constant 0 : index
    %c2 = arith.constant 2 : index
    %c0_28 = arith.constant 0 : index
    %30 = vector.load %arg9[%c0_27, %c2, %c0_28] : memref<16x20x16xf32, #tpu.memory_space<vmem>>, vector<16x16x16xf32>
    tpu.vector_store %arg9[%c0_27, %c2, %c0_28], %29 {strides = array<i32>} : memref<16x20x16xf32, #tpu.memory_space<vmem>>, vector<16x16x16xf32>,
    %c0_29 = arith.constant 0 : index
    %c0_30 = arith.constant 0 : index
    %c0_31 = arith.constant 0 : index
    %31 = vector.load %arg9[%c0_29, %c0_30, %c0_31] : memref<16x20x16xf32, #tpu.memory_space<vmem>>, vector<16x16x16xf32>
    %c0_32 = arith.constant 0 : index
    %c1 = arith.constant 1 : index
    %c0_33 = arith.constant 0 : index
    %32 = vector.load %arg9[%c0_32, %c1, %c0_33] : memref<16x20x16xf32, #tpu.memory_space<vmem>>, vector<16x16x16xf32>
    %33 = arith.maximumf %31, %32 : vector<16x16x16xf32>
    %c0_34 = arith.constant 0 : index
    %c2_35 = arith.constant 2 : index
    %c0_36 = arith.constant 0 : index
    %34 = vector.load %arg9[%c0_34, %c2_35, %c0_36] : memref<16x20x16xf32, #tpu.memory_space<vmem>>, vector<16x16x16xf32>
    %35 = arith.maximumf %33, %34 : vector<16x16x16xf32>
    %c0_37 = arith.constant 0 : index
    %c3 = arith.constant 3 : index
    %c0_38 = arith.constant 0 : index
    %36 = vector.load %arg9[%c0_37, %c3, %c0_38] : memref<16x20x16xf32, #tpu.memory_space<vmem>>, vector<16x16x16xf32>
    %37 = arith.maximumf %35, %36 : vector<16x16x16xf32>
    %c0_39 = arith.constant 0 : index
    %c4 = arith.constant 4 : index
    %c0_40 = arith.constant 0 : index
    %38 = vector.load %arg9[%c0_39, %c4, %c0_40] : memref<16x20x16xf32, #tpu.memory_space<vmem>>, vector<16x16x16xf32>
    %39 = arith.maximumf %37, %38 : vector<16x16x16xf32>
    %40 = arith.truncf %39 : vector<16x16x16xf32> to vector<16x16x16xbf16>
    %c2_41 = arith.constant 2 : index
    %c0_42 = arith.constant 0 : index
    %c0_43 = arith.constant 0 : index
    %41 = vector.load %arg10[%c2_41, %c0_42, %c0_43] : memref<20x16x16xbf16, #tpu.memory_space<vmem>>, vector<16x16x16xbf16>
    tpu.vector_store %arg10[%c2_41, %c0_42, %c0_43], %40 {strides = array<i32>} : memref<20x16x16xbf16, #tpu.memory_space<vmem>>, vector<16x16x16xbf16>,
    %c0_44 = arith.constant 0 : index
    %c0_45 = arith.constant 0 : index
    %c0_46 = arith.constant 0 : index
    %42 = vector.load %arg10[%c0_44, %c0_45, %c0_46] : memref<20x16x16xbf16, #tpu.memory_space<vmem>>, vector<16x16x16xbf16>
    %c1_47 = arith.constant 1 : index
    %c0_48 = arith.constant 0 : index
    %c0_49 = arith.constant 0 : index
    %43 = vector.load %arg10[%c1_47, %c0_48, %c0_49] : memref<20x16x16xbf16, #tpu.memory_space<vmem>>, vector<16x16x16xbf16>
    %44 = arith.maximumf %42, %43 : vector<16x16x16xbf16>
    %c2_50 = arith.constant 2 : index
    %c0_51 = arith.constant 0 : index
    %c0_52 = arith.constant 0 : index
    %45 = vector.load %arg10[%c2_50, %c0_51, %c0_52] : memref<20x16x16xbf16, #tpu.memory_space<vmem>>, vector<16x16x16xbf16>
    %46 = arith.maximumf %44, %45 : vector<16x16x16xbf16>
    %c3_53 = arith.constant 3 : index
    %c0_54 = arith.constant 0 : index
    %c0_55 = arith.constant 0 : index
    %47 = vector.load %arg10[%c3_53, %c0_54, %c0_55] : memref<20x16x16xbf16, #tpu.memory_space<vmem>>, vector<16x16x16xbf16>
    %48 = arith.maximumf %46, %47 : vector<16x16x16xbf16>
    %c4_56 = arith.constant 4 : index
    %c0_57 = arith.constant 0 : index
    %c0_58 = arith.constant 0 : index
    %49 = vector.load %arg10[%c4_56, %c0_57, %c0_58] : memref<20x16x16xbf16, #tpu.memory_space<vmem>>, vector<16x16x16xbf16>
    %50 = arith.maximumf %48, %49 : vector<16x16x16xbf16>
    %51 = vector.shape_cast %50 : vector<16x16x16xbf16> to vector<256x16xbf16>
    %c0_59 = arith.constant 0 : index
    %c16 = arith.constant 16 : index
    %52 = vector.load %arg11[%c0_59, %c16] : memref<256x64xbf16, #tpu.memory_space<vmem>>, vector<256x16xbf16>
    tpu.vector_store %arg11[%c0_59, %c16], %51 {strides = array<i32>} : memref<256x64xbf16, #tpu.memory_space<vmem>>, vector<256x16xbf16>,
    %53 = arith.extf %50 : vector<16x16x16xbf16> to vector<16x16x16xf32>
    %c0_60 = arith.constant 0 : index
    %c2_61 = arith.constant 2 : index
    %c0_62 = arith.constant 0 : index
    %54 = vector.load %arg9[%c0_60, %c2_61, %c0_62] : memref<16x20x16xf32, #tpu.memory_space<vmem>>, vector<16x16x16xf32>
    tpu.vector_store %arg9[%c0_60, %c2_61, %c0_62], %53 {strides = array<i32>} : memref<16x20x16xf32, #tpu.memory_space<vmem>>, vector<16x16x16xf32>,
    %c0_63 = arith.constant 0 : index
    %c0_64 = arith.constant 0 : index
    %c0_65 = arith.constant 0 : index
    %55 = vector.load %arg9[%c0_63, %c0_64, %c0_65] : memref<16x20x16xf32, #tpu.memory_space<vmem>>, vector<16x16x16xf32>
    %c0_66 = arith.constant 0 : index
    %c1_67 = arith.constant 1 : index
    %c0_68 = arith.constant 0 : index
    %56 = vector.load %arg9[%c0_66, %c1_67, %c0_68] : memref<16x20x16xf32, #tpu.memory_space<vmem>>, vector<16x16x16xf32>
    %57 = arith.maximumf %55, %56 : vector<16x16x16xf32>
    %c0_69 = arith.constant 0 : index
    %c2_70 = arith.constant 2 : index
    %c0_71 = arith.constant 0 : index
    %58 = vector.load %arg9[%c0_69, %c2_70, %c0_71] : memref<16x20x16xf32, #tpu.memory_space<vmem>>, vector<16x16x16xf32>
    %59 = arith.maximumf %57, %58 : vector<16x16x16xf32>
    %c0_72 = arith.constant 0 : index
    %c3_73 = arith.constant 3 : index
    %c0_74 = arith.constant 0 : index
    %60 = vector.load %arg9[%c0_72, %c3_73, %c0_74] : memref<16x20x16xf32, #tpu.memory_space<vmem>>, vector<16x16x16xf32>
    %61 = arith.maximumf %59, %60 : vector<16x16x16xf32>
    %c0_75 = arith.constant 0 : index
    %c4_76 = arith.constant 4 : index
    %c0_77 = arith.constant 0 : index
    %62 = vector.load %arg9[%c0_75, %c4_76, %c0_77] : memref<16x20x16xf32, #tpu.memory_space<vmem>>, vector<16x16x16xf32>
    %63 = arith.maximumf %61, %62 : vector<16x16x16xf32>
    %64 = arith.truncf %63 : vector<16x16x16xf32> to vector<16x16x16xbf16>
    %c2_78 = arith.constant 2 : index
    %c0_79 = arith.constant 0 : index
    %c0_80 = arith.constant 0 : index
    %65 = vector.load %arg10[%c2_78, %c0_79, %c0_80] : memref<20x16x16xbf16, #tpu.memory_space<vmem>>, vector<16x16x16xbf16>
    tpu.vector_store %arg10[%c2_78, %c0_79, %c0_80], %64 {strides = array<i32>} : memref<20x16x16xbf16, #tpu.memory_space<vmem>>, vector<16x16x16xbf16>,
    %c0_81 = arith.constant 0 : index
    %c0_82 = arith.constant 0 : index
    %c0_83 = arith.constant 0 : index
    %66 = vector.load %arg10[%c0_81, %c0_82, %c0_83] : memref<20x16x16xbf16, #tpu.memory_space<vmem>>, vector<16x16x16xbf16>
    %c1_84 = arith.constant 1 : index
    %c0_85 = arith.constant 0 : index
    %c0_86 = arith.constant 0 : index
    %67 = vector.load %arg10[%c1_84, %c0_85, %c0_86] : memref<20x16x16xbf16, #tpu.memory_space<vmem>>, vector<16x16x16xbf16>
    %68 = arith.maximumf %66, %67 : vector<16x16x16xbf16>
    %c2_87 = arith.constant 2 : index
    %c0_88 = arith.constant 0 : index
    %c0_89 = arith.constant 0 : index
    %69 = vector.load %arg10[%c2_87, %c0_88, %c0_89] : memref<20x16x16xbf16, #tpu.memory_space<vmem>>, vector<16x16x16xbf16>
    %70 = arith.maximumf %68, %69 : vector<16x16x16xbf16>
    %c3_90 = arith.constant 3 : index
    %c0_91 = arith.constant 0 : index
    %c0_92 = arith.constant 0 : index
    %71 = vector.load %arg10[%c3_90, %c0_91, %c0_92] : memref<20x16x16xbf16, #tpu.memory_space<vmem>>, vector<16x16x16xbf16>
    %72 = arith.maximumf %70, %71 : vector<16x16x16xbf16>
    %c4_93 = arith.constant 4 : index
    %c0_94 = arith.constant 0 : index
    %c0_95 = arith.constant 0 : index
    %73 = vector.load %arg10[%c4_93, %c0_94, %c0_95] : memref<20x16x16xbf16, #tpu.memory_space<vmem>>, vector<16x16x16xbf16>
    %74 = arith.maximumf %72, %73 : vector<16x16x16xbf16>
    %75 = vector.shape_cast %74 : vector<16x16x16xbf16> to vector<256x16xbf16>
    %c0_96 = arith.constant 0 : index
    %c32 = arith.constant 32 : index
    %76 = vector.load %arg11[%c0_96, %c32] : memref<256x64xbf16, #tpu.memory_space<vmem>>, vector<256x16xbf16>
    tpu.vector_store %arg11[%c0_96, %c32], %75 {strides = array<i32>} : memref<256x64xbf16, #tpu.memory_space<vmem>>, vector<256x16xbf16>,
    %77 = arith.extf %74 : vector<16x16x16xbf16> to vector<16x16x16xf32>
    %c0_97 = arith.constant 0 : index
    %c2_98 = arith.constant 2 : index
    %c0_99 = arith.constant 0 : index
    %78 = vector.load %arg9[%c0_97, %c2_98, %c0_99] : memref<16x20x16xf32, #tpu.memory_space<vmem>>, vector<16x16x16xf32>
    tpu.vector_store %arg9[%c0_97, %c2_98, %c0_99], %77 {strides = array<i32>} : memref<16x20x16xf32, #tpu.memory_space<vmem>>, vector<16x16x16xf32>,
    %c0_100 = arith.constant 0 : index
    %c0_101 = arith.constant 0 : index
    %c0_102 = arith.constant 0 : index
    %79 = vector.load %arg9[%c0_100, %c0_101, %c0_102] : memref<16x20x16xf32, #tpu.memory_space<vmem>>, vector<16x16x16xf32>
    %c0_103 = arith.constant 0 : index
    %c1_104 = arith.constant 1 : index
    %c0_105 = arith.constant 0 : index
    %80 = vector.load %arg9[%c0_103, %c1_104, %c0_105] : memref<16x20x16xf32, #tpu.memory_space<vmem>>, vector<16x16x16xf32>
    %81 = arith.maximumf %79, %80 : vector<16x16x16xf32>
    %c0_106 = arith.constant 0 : index
    %c2_107 = arith.constant 2 : index
    %c0_108 = arith.constant 0 : index
    %82 = vector.load %arg9[%c0_106, %c2_107, %c0_108] : memref<16x20x16xf32, #tpu.memory_space<vmem>>, vector<16x16x16xf32>
    %83 = arith.maximumf %81, %82 : vector<16x16x16xf32>
    %c0_109 = arith.constant 0 : index
    %c3_110 = arith.constant 3 : index
    %c0_111 = arith.constant 0 : index
    %84 = vector.load %arg9[%c0_109, %c3_110, %c0_111] : memref<16x20x16xf32, #tpu.memory_space<vmem>>, vector<16x16x16xf32>
    %85 = arith.maximumf %83, %84 : vector<16x16x16xf32>
    %c0_112 = arith.constant 0 : index
    %c4_113 = arith.constant 4 : index
    %c0_114 = arith.constant 0 : index
    %86 = vector.load %arg9[%c0_112, %c4_113, %c0_114] : memref<16x20x16xf32, #tpu.memory_space<vmem>>, vector<16x16x16xf32>
    %87 = arith.maximumf %85, %86 : vector<16x16x16xf32>
    %88 = arith.truncf %87 : vector<16x16x16xf32> to vector<16x16x16xbf16>
    %c2_115 = arith.constant 2 : index
    %c0_116 = arith.constant 0 : index
    %c0_117 = arith.constant 0 : index
    %89 = vector.load %arg10[%c2_115, %c0_116, %c0_117] : memref<20x16x16xbf16, #tpu.memory_space<vmem>>, vector<16x16x16xbf16>
    tpu.vector_store %arg10[%c2_115, %c0_116, %c0_117], %88 {strides = array<i32>} : memref<20x16x16xbf16, #tpu.memory_space<vmem>>, vector<16x16x16xbf16>,
    %c0_118 = arith.constant 0 : index
    %c0_119 = arith.constant 0 : index
    %c0_120 = arith.constant 0 : index
    %90 = vector.load %arg10[%c0_118, %c0_119, %c0_120] : memref<20x16x16xbf16, #tpu.memory_space<vmem>>, vector<16x16x16xbf16>
    %c1_121 = arith.constant 1 : index
    %c0_122 = arith.constant 0 : index
    %c0_123 = arith.constant 0 : index
    %91 = vector.load %arg10[%c1_121, %c0_122, %c0_123] : memref<20x16x16xbf16, #tpu.memory_space<vmem>>, vector<16x16x16xbf16>
    %92 = arith.maximumf %90, %91 : vector<16x16x16xbf16>
    %c2_124 = arith.constant 2 : index
    %c0_125 = arith.constant 0 : index
    %c0_126 = arith.constant 0 : index
    %93 = vector.load %arg10[%c2_124, %c0_125, %c0_126] : memref<20x16x16xbf16, #tpu.memory_space<vmem>>, vector<16x16x16xbf16>
    %94 = arith.maximumf %92, %93 : vector<16x16x16xbf16>
    %c3_127 = arith.constant 3 : index
    %c0_128 = arith.constant 0 : index
    %c0_129 = arith.constant 0 : index
    %95 = vector.load %arg10[%c3_127, %c0_128, %c0_129] : memref<20x16x16xbf16, #tpu.memory_space<vmem>>, vector<16x16x16xbf16>
    %96 = arith.maximumf %94, %95 : vector<16x16x16xbf16>
    %c4_130 = arith.constant 4 : index
    %c0_131 = arith.constant 0 : index
    %c0_132 = arith.constant 0 : index
    %97 = vector.load %arg10[%c4_130, %c0_131, %c0_132] : memref<20x16x16xbf16, #tpu.memory_space<vmem>>, vector<16x16x16xbf16>
    %98 = arith.maximumf %96, %97 : vector<16x16x16xbf16>
    %99 = vector.shape_cast %98 : vector<16x16x16xbf16> to vector<256x16xbf16>
    %c0_133 = arith.constant 0 : index
    %c48 = arith.constant 48 : index
    %100 = vector.load %arg11[%c0_133, %c48] : memref<256x64xbf16, #tpu.memory_space<vmem>>, vector<256x16xbf16>
    tpu.vector_store %arg11[%c0_133, %c48], %99 {strides = array<i32>} : memref<256x64xbf16, #tpu.memory_space<vmem>>, vector<256x16xbf16>,
    %c0_134 = arith.constant 0 : index
    %c0_135 = arith.constant 0 : index
    %101 = vector.load %arg11[%c0_134, %c0_135] : memref<256x64xbf16, #tpu.memory_space<vmem>>, vector<256x64xbf16>
    %c0_136 = arith.constant 0 : index
    %c0_137 = arith.constant 0 : index
    %102 = vector.load %arg5[%c0_136, %c0_137] : memref<64x128xbf16, #tpu.memory_space<vmem>>, vector<64x128xbf16>
    %cst_138 = arith.constant dense<0.000000e+00> : vector<256x128xf32>
    %103 = tpu.matmul %101, %102, %cst_138 {dimension_numbers = #tpu.dot_dimension_numbers<[1], [0], [0], [1], [0, 0, 1, 1], [], []>} : vector<256x64xbf16>, vector<64x128xbf16>, vector<256x128xf32> -> vector<256x128xf32>
    %c0_139 = arith.constant 0 : index
    %c0_140 = arith.constant 0 : index
    %104 = vector.load %arg6[%c0_139, %c0_140] : memref<1x128xf32, #tpu.memory_space<vmem>>, vector<1x128xf32>
    %105 = vector.broadcast %104 : vector<1x128xf32> to vector<256x128xf32>
    %106 = arith.mulf %103, %105 : vector<256x128xf32>
    %c0_141 = arith.constant 0 : index
    %c0_142 = arith.constant 0 : index
    %107 = vector.load %arg7[%c0_141, %c0_142] : memref<1x128xf32, #tpu.memory_space<vmem>>, vector<1x128xf32>
    %108 = vector.broadcast %107 : vector<1x128xf32> to vector<256x128xf32>
    %109 = arith.addf %106, %108 : vector<256x128xf32>
    %110 = arith.negf %109 : vector<256x128xf32>
    %111 = math.exp %110 : vector<256x128xf32>
    %cst_143 = arith.constant 1.000000e+00 : f32
    %112 = vector.broadcast %cst_143 : f32 to vector<256x128xf32>
    %113 = arith.addf %112, %111 : vector<256x128xf32>
    %114 = arith.divf %112, %113 : vector<256x128xf32>
    %115 = arith.mulf %109, %114 : vector<256x128xf32>
    %116 = vector.shape_cast %115 : vector<256x128xf32> to vector<1x16x16x128xf32>
    %c0_144 = arith.constant 0 : index
    %c0_145 = arith.constant 0 : index
    %c0_146 = arith.constant 0 : index
    %c0_147 = arith.constant 0 : index
    %117 = vector.load %arg8[%c0_144, %c0_145, %c0_146, %c0_147] : memref<1x16x16x128xf32, #tpu.memory_space<vmem>>, vector<1x16x16x128xf32>
    tpu.vector_store %arg8[%c0_144, %c0_145, %c0_146, %c0_147], %116 {strides = array<i32>} : memref<1x16x16x128xf32, #tpu.memory_space<vmem>>, vector<1x16x16x128xf32>,
    return
  }
  func.func @transform_0(%arg0: i32) -> (i32, i32, i32, i32) {
    %c0_i32 = arith.constant 0 : i32
    %c0_i32_0 = arith.constant 0 : i32
    %c0_i32_1 = arith.constant 0 : i32
    %c0_i32_2 = arith.constant 0 : i32
    return %arg0, %c0_i32, %c0_i32_0, %c0_i32_1 : i32, i32, i32, i32
  }
  func.func @transform_1(%arg0: i32) -> (i32, i32) {
    %c0_i32 = arith.constant 0 : i32
    %c0_i32_0 = arith.constant 0 : i32
    %c0_i32_1 = arith.constant 0 : i32
    return %c0_i32, %c0_i32_0 : i32, i32
  }
  func.func @transform_2(%arg0: i32) -> (i32, i32) {
    %c0_i32 = arith.constant 0 : i32
    %c0_i32_0 = arith.constant 0 : i32
    %c0_i32_1 = arith.constant 0 : i32
    return %c0_i32, %c0_i32_0 : i32, i32
  }
  func.func @transform_3(%arg0: i32) -> (i32, i32) {
    %c0_i32 = arith.constant 0 : i32
    %c0_i32_0 = arith.constant 0 : i32
    %c0_i32_1 = arith.constant 0 : i32
    return %c0_i32, %c0_i32_0 : i32, i32
  }
  func.func @transform_4(%arg0: i32) -> (i32, i32) {
    %c0_i32 = arith.constant 0 : i32
    %c0_i32_0 = arith.constant 0 : i32
    %c0_i32_1 = arith.constant 0 : i32
    return %c0_i32, %c0_i32_0 : i32, i32
  }
  func.func @transform_5(%arg0: i32) -> (i32, i32) {
    %c0_i32 = arith.constant 0 : i32
    %c0_i32_0 = arith.constant 0 : i32
    %c0_i32_1 = arith.constant 0 : i32
    return %c0_i32, %c0_i32_0 : i32, i32
  }
  func.func @transform_6(%arg0: i32) -> (i32, i32) {
    %c0_i32 = arith.constant 0 : i32
    %c0_i32_0 = arith.constant 0 : i32
    %c0_i32_1 = arith.constant 0 : i32
    return %c0_i32, %c0_i32_0 : i32, i32
  }
  func.func @transform_7(%arg0: i32) -> (i32, i32, i32, i32) {
    %c0_i32 = arith.constant 0 : i32
    %c0_i32_0 = arith.constant 0 : i32
    %c0_i32_1 = arith.constant 0 : i32
    %c0_i32_2 = arith.constant 0 : i32
    return %arg0, %c0_i32, %c0_i32_0, %c0_i32_1 : i32, i32, i32, i32
  }
}

</mosaic_0001>

<llo_original>
// kernel: sppf_forward.1
$region0: #{sppf_forward.1}
  #allocation0 [shape = 'u32[]', space=smem, size = 0x4, offset = 0x4, fixed_abs, tag = 'smem constant byte address 0x4 - core index']
  #allocation1 [shape = 'u32[144,128]{1,0:T(1,128)}', space=vmem, size = 0x12000, scoped, tag = 'internal scratch']
  #allocation2 [shape = 'f32[16,20,16]{2,1,0:T(8,128)}', space=vmem, size = 0x30000, scoped, tag = 'scratch operand']
  #allocation3 [shape = 'bf16[20,16,16]{2,1,0:T(16,128)(2,1)}', space=vmem, size = 0x14000, scoped, tag = 'scratch operand']
  #allocation4 [shape = 'bf16[256,64]{1,0:T(16,128)(2,1)}', space=vmem, size = 0x10000, scoped, tag = 'scratch operand']
  %s0 = inlined_call_operand.hbm [shape: f32[2,16,16,32], index: 0, kind: input, shape index: {}]
  %s1 = inlined_call_operand.vmem [shape: bf16[32,16], index: 1, kind: input, shape index: {}]
  %s2 = inlined_call_operand.vmem [shape: f32[1,16], index: 2, kind: input, shape index: {}]
  %s3 = inlined_call_operand.vmem [shape: f32[1,16], index: 3, kind: input, shape index: {}]
  %s4 = inlined_call_operand.vmem [shape: bf16[64,128], index: 4, kind: input, shape index: {}]
  %s5 = inlined_call_operand.vmem [shape: f32[1,128], index: 5, kind: input, shape index: {}]
  %s6 = inlined_call_operand.vmem [shape: f32[1,128], index: 6, kind: input, shape index: {}]
  %s7 = inlined_call_operand.hbm [shape: f32[2,16,16,128], index: 7, kind: output, shape index: {}]
  %s8 = sld [smem:[#allocation0]]
  $region65: #{sppf_forward.1} parent=0
    _
  %s10 = ssub.s32 1, %s8
  %s11 = scalar_select 0, %s10, %s8
  $region1: #{sppf_forward.1} parent=0
    #allocation5 [shape = 'u8[262144]{0}', space=vmem, size = 0x40000, scoped, tag = 'input window, operand 0']
    #allocation6 [shape = 's32[2]{0}', space=sflag, size = 0x8, scoped, tag = 'scoped memory for sppf_forward.1']
    #allocation7 [shape = 's32[2]{0}', space=sflag, size = 0x8, scoped, tag = 'scoped memory for sppf_forward.1']
    #allocation8 [shape = 'u8[262144]{0}', space=vmem, size = 0x40000, scoped, tag = 'output window, operand 0']
    %12 = vsyncpa [#allocation6], 0
    %s13 = scalar_lea.sflag [#allocation6], 1
    %14 = vsyncpa %s13, 0
    %15 = vsyncpa [#allocation7], 0
    %s16 = scalar_lea.sflag [#allocation7], 1
    %17 = vsyncpa %s16, 0
    loop: start=0, step=1, limit=4
    $region2: #{sppf_forward.1} parent=1 // loop_pre_header
      _
    $region3: #{sppf_forward.1} parent=1 // loop_header
      %s19 = sphi 0, %s23
      %p20 = scmp.ge.s32.totalorder %s19, 4
      %s29 = sphi 0, %s31
      %s32 = sphi 0, %s29
      %s33 = sphi 0, %s32
      %s49 = sphi 0, %s33
      %s53 = sphi 0, %s53
      %s55 = sphi 0, %s53
      %s56 = sphi 0, %s55
      %s70 = sphi 0, %s56
      %s74 = sphi 0, %s74
      %s76 = sphi 0, %s74
      %s77 = sphi 0, %s76
      %s91 = sphi 0, %s77
      %s95 = sphi 0, %s95
      %s97 = sphi 0, %s95
      %s98 = sphi 0, %s97
      %s112 = sphi 0, %s98
      %s116 = sphi 0, %s116
      %s118 = sphi 0, %s116
      %s119 = sphi 0, %s118
      %s133 = sphi 0, %s119
      %s137 = sphi 0, %s137
      %s139 = sphi 0, %s137
      %s140 = sphi 0, %s139
      %s154 = sphi 0, %s140
      %s158 = sphi 0, %s158
      %s160 = sphi 0, %s158
      %s161 = sphi 0, %s160
      %s175 = sphi 0, %s161
      %s181 = sphi 0, %s183
      %s184 = sphi 0, %s181
      %s185 = sphi 0, %s184
      %s201 = sphi 0, %s185
    $region4: #{sppf_forward.1} parent=1 // loop_header_branch
      %22 = sbr.rel (%p20) target = $region8
    $region5: #{sppf_forward.1} parent=1 // loop_body
      %s24 = ssub.s32 %s19, 1
      %s25 = ssub.s32 %s19, 2
      %s26 = sadd.s32 %s19, 1
      %s27 = ssub.s32 %s19, %s26
      %p28 = scmp.eq.s32.totalorder %s27, 0
      %s30 = sadd.s32 %s29, 1
      %s31 = scalar_select %p28, %s29, %s30
      %p34 = pneg %p28
      %p35 = scmp.eq.s32.totalorder %s19, 1
      %p36 = por %p34, %p35
      %p37 = scmp.ne.s32.totalorder %s29, %s32
      %p38 = scmp.eq.s32.totalorder %s19, 0
      %p39 = por %p37, %p38
      %p40 = scmp.ne.s32.totalorder %s29, %s32
      %p41 = scmp.eq.s32.totalorder %s24, 1
      %p42 = por %p40, %p41
      %p43 = scmp.ne.s32.totalorder %s32, %s33
      %p44 = scmp.eq.s32.totalorder %s24, 0
      %p45 = por %p43, %p44
      %p46 = scmp.ne.s32.totalorder %s32, %s33
      %p47 = scmp.eq.s32.totalorder %s25, 1
      %p48 = por %p46, %p47
      %p50 = scmp.ne.s32.totalorder %s33, %s49
      %p51 = scmp.eq.s32.totalorder %s25, 0
      %p52 = por %p50, %p51
      %s54 = sadd.s32 %s53, 1
      %p57 = scmp.eq.s32.totalorder %s19, 1
      %p58 = scmp.ne.s32.totalorder %s53, %s55
      %p59 = scmp.eq.s32.totalorder %s19, 0
      %p60 = por %p58, %p59
      %p61 = scmp.ne.s32.totalorder %s53, %s55
      %p62 = scmp.eq.s32.totalorder %s24, 1
      %p63 = por %p61, %p62
      %p64 = scmp.ne.s32.totalorder %s55, %s56
      %p65 = scmp.eq.s32.totalorder %s24, 0
      %p66 = por %p64, %p65
      %p67 = scmp.ne.s32.totalorder %s55, %s56
      %p68 = scmp.eq.s32.totalorder %s25, 1
      %p69 = por %p67, %p68
      %p71 = scmp.ne.s32.totalorder %s56, %s70
      %p72 = scmp.eq.s32.totalorder %s25, 0
      %p73 = por %p71, %p72
      %s75 = sadd.s32 %s74, 1
      %p78 = scmp.eq.s32.totalorder %s19, 1
      %p79 = scmp.ne.s32.totalorder %s74, %s76
      %p80 = scmp.eq.s32.totalorder %s19, 0
      %p81 = por %p79, %p80
      %p82 = scmp.ne.s32.totalorder %s74, %s76
      %p83 = scmp.eq.s32.totalorder %s24, 1
      %p84 = por %p82, %p83
      %p85 = scmp.ne.s32.totalorder %s76, %s77
      %p86 = scmp.eq.s32.totalorder %s24, 0
      %p87 = por %p85, %p86
      %p88 = scmp.ne.s32.totalorder %s76, %s77
      %p89 = scmp.eq.s32.totalorder %s25, 1
      %p90 = por %p88, %p89
      %p92 = scmp.ne.s32.totalorder %s77, %s91
      %p93 = scmp.eq.s32.totalorder %s25, 0
      %p94 = por %p92, %p93
      %s96 = sadd.s32 %s95, 1
      %p99 = scmp.eq.s32.totalorder %s19, 1
      %p100 = scmp.ne.s32.totalorder %s95, %s97
      %p101 = scmp.eq.s32.totalorder %s19, 0
      %p102 = por %p100, %p101
      %p103 = scmp.ne.s32.totalorder %s95, %s97
      %p104 = scmp.eq.s32.totalorder %s24, 1
      %p105 = por %p103, %p104
      %p106 = scmp.ne.s32.totalorder %s97, %s98
      %p107 = scmp.eq.s32.totalorder %s24, 0
      %p108 = por %p106, %p107
      %p109 = scmp.ne.s32.totalorder %s97, %s98
      %p110 = scmp.eq.s32.totalorder %s25, 1
      %p111 = por %p109, %p110
      %p113 = scmp.ne.s32.totalorder %s98, %s112
      %p114 = scmp.eq.s32.totalorder %s25, 0
      %p115 = por %p113, %p114
      %s117 = sadd.s32 %s116, 1
      %p120 = scmp.eq.s32.totalorder %s19, 1
      %p121 = scmp.ne.s32.totalorder %s116, %s118
      %p122 = scmp.eq.s32.totalorder %s19, 0
      %p123 = por %p121, %p122
      %p124 = scmp.ne.s32.totalorder %s116, %s118
      %p125 = scmp.eq.s32.totalorder %s24, 1
      %p126 = por %p124, %p125
      %p127 = scmp.ne.s32.totalorder %s118, %s119
      %p128 = scmp.eq.s32.totalorder %s24, 0
      %p129 = por %p127, %p128
      %p130 = scmp.ne.s32.totalorder %s118, %s119
      %p131 = scmp.eq.s32.totalorder %s25, 1
      %p132 = por %p130, %p131
      %p134 = scmp.ne.s32.totalorder %s119, %s133
      %p135 = scmp.eq.s32.totalorder %s25, 0
      %p136 = por %p134, %p135
      %s138 = sadd.s32 %s137, 1
      %p141 = scmp.eq.s32.totalorder %s19, 1
      %p142 = scmp.ne.s32.totalorder %s137, %s139
      %p143 = scmp.eq.s32.totalorder %s19, 0
      %p144 = por %p142, %p143
      %p145 = scmp.ne.s32.totalorder %s137, %s139
      %p146 = scmp.eq.s32.totalorder %s24, 1
      %p147 = por %p145, %p146
      %p148 = scmp.ne.s32.totalorder %s139, %s140
      %p149 = scmp.eq.s32.totalorder %s24, 0
      %p150 = por %p148, %p149
      %p151 = scmp.ne.s32.totalorder %s139, %s140
      %p152 = scmp.eq.s32.totalorder %s25, 1
      %p153 = por %p151, %p152
      %p155 = scmp.ne.s32.totalorder %s140, %s154
      %p156 = scmp.eq.s32.totalorder %s25, 0
      %p157 = por %p155, %p156
      %s159 = sadd.s32 %s158, 1
      %p162 = scmp.eq.s32.totalorder %s19, 1
      %p163 = scmp.ne.s32.totalorder %s158, %s160
      %p164 = scmp.eq.s32.totalorder %s19, 0
      %p165 = por %p163, %p164
      %p166 = scmp.ne.s32.totalorder %s158, %s160
      %p167 = scmp.eq.s32.totalorder %s24, 1
      %p168 = por %p166, %p167
      %p169 = scmp.ne.s32.totalorder %s160, %s161
      %p170 = scmp.eq.s32.totalorder %s24, 0
      %p171 = por %p169, %p170
      %p172 = scmp.ne.s32.totalorder %s160, %s161
      %p173 = scmp.eq.s32.totalorder %s25, 1
      %p174 = por %p172, %p173
      %p176 = scmp.ne.s32.totalorder %s161, %s175
      %p177 = scmp.eq.s32.totalorder %s25, 0
      %p178 = por %p176, %p177
      %s179 = ssub.s32 %s19, %s26
      %p180 = scmp.eq.s32.totalorder %s179, 0
      %s182 = sadd.s32 %s181, 1
      %s183 = scalar_select %p180, %s181, %s182
      %p186 = pneg %p180
      %p187 = scmp.eq.s32.totalorder %s19, 1
      %p188 = por %p186, %p187
      %p189 = scmp.ne.s32.totalorder %s181, %s184
      %p190 = scmp.eq.s32.totalorder %s19, 0
      %p191 = por %p189, %p190
      %p192 = scmp.ne.s32.totalorder %s181, %s184
      %p193 = scmp.eq.s32.totalorder %s24, 1
      %p194 = por %p192, %p193
      %p195 = scmp.ne.s32.totalorder %s184, %s185
      %p196 = scmp.eq.s32.totalorder %s24, 0
      %p197 = por %p195, %p196
      %p198 = scmp.ne.s32.totalorder %s184, %s185
      %p199 = scmp.eq.s32.totalorder %s25, 1
      %p200 = por %p198, %p199
      %p202 = scmp.ne.s32.totalorder %s185, %s201
      %p203 = scmp.eq.s32.totalorder %s25, 0
      %p204 = por %p202, %p203
      %p205 = scmp.le.s32.totalorder 1, %s19
      %p206 = scmp.lt.s32.totalorder %s19, 3
      %p207 = pnand %p205, %p206
      %p208 = pneg %p207
      // Predicated region
      $region9: #{sppf_forward.1} parent=5 // pred_check
        _
      $region10: #{sppf_forward.1} parent=5 // pred_check_branch
        %210 = sbr.rel (%p207) target = $region12
      $region11: #{sppf_forward.1} parent=5 // pred_region
        %s211 = ssub.s32 %s19, 1
        // Predicated region
        $region13: #{sppf_forward.1} parent=11 // pred_check
          %p212 = pneg %p66
        $region14: #{sppf_forward.1} parent=11 // pred_check_branch
          %214 = sbr.rel (%p212) target = $region16
        $region15: #{sppf_forward.1} parent=11 // pred_region
          _
        $region16: #{sppf_forward.1} parent=11 // pred_fallthru
          _
        // Predicated region
        $region17: #{sppf_forward.1} parent=11 // pred_check
          %p215 = pneg %p87
        $region18: #{sppf_forward.1} parent=11 // pred_check_branch
          %217 = sbr.rel (%p215) target = $region20
        $region19: #{sppf_forward.1} parent=11 // pred_region
          _
        $region20: #{sppf_forward.1} parent=11 // pred_fallthru
          _
        // Predicated region
        $region21: #{sppf_forward.1} parent=11 // pred_check
          %p218 = pneg %p108
        $region22: #{sppf_forward.1} parent=11 // pred_check_branch
          %220 = sbr.rel (%p218) target = $region24
        $region23: #{sppf_forward.1} parent=11 // pred_region
          _
        $region24: #{sppf_forward.1} parent=11 // pred_fallthru
          _
        // Predicated region
        $region25: #{sppf_forward.1} parent=11 // pred_check
          %p221 = pneg %p129
        $region26: #{sppf_forward.1} parent=11 // pred_check_branch
          %223 = sbr.rel (%p221) target = $region28
        $region27: #{sppf_forward.1} parent=11 // pred_region
          _
        $region28: #{sppf_forward.1} parent=11 // pred_fallthru
          _
        // Predicated region
        $region29: #{sppf_forward.1} parent=11 // pred_check
          %p224 = pneg %p150
        $region30: #{sppf_forward.1} parent=11 // pred_check_branch
          %226 = sbr.rel (%p224) target = $region32
        $region31: #{sppf_forward.1} parent=11 // pred_region
          _
        $region32: #{sppf_forward.1} parent=11 // pred_fallthru
          _
        // Predicated region
        $region33: #{sppf_forward.1} parent=11 // pred_check
          %p227 = pneg %p171
        $region34: #{sppf_forward.1} parent=11 // pred_check_branch
          %229 = sbr.rel (%p227) target = $region36
        $region35: #{sppf_forward.1} parent=11 // pred_region
          _
        $region36: #{sppf_forward.1} parent=11 // pred_fallthru
          _
      $region12: #{sppf_forward.1} parent=5 // pred_fallthru
        _
      %p230 = scmp.lt.s32.totalorder %s19, 2
      // Predicated region
      $region37: #{sppf_forward.1} parent=5 // pred_check
        %p231 = pneg %p230
      $region38: #{sppf_forward.1} parent=5 // pred_check_branch
        %233 = sbr.rel (%p231) target = $region40
      $region39: #{sppf_forward.1} parent=5 // pred_region
        // Predicated region
        $region41: #{sppf_forward.1} parent=39 // pred_check
          %p234 = pneg %p39
        $region42: #{sppf_forward.1} parent=39 // pred_check_branch
          %236 = sbr.rel (%p234) target = $region44
        $region43: #{sppf_forward.1} parent=39 // pred_region
          %s237 = sand.u32 %s29, 1
          %s238 = scalar_lea.sflag [#allocation6], %s237
          %s239 = sand.u32 %s29, 1
          %s240 = smul.addr %s239, 256
          %s241 = scalar_lea.vmem [#allocation5], %s240
          %s243 = ssub.s32 4096, 4096
          %244 = vsyncadd %s238, %s243
          %s245 = smul.addr %s19, 32
          %s246 = smul.addr %s245, 128
          %s247 = scalar_lea.hbm %s0, %s246
          %s248 = sshll.u32 %s241, 4
          %s249 = int_to_ptr.vmem [resolvable:$true] %s248
          %254 = dma.hbm_to_vmem [thread:$0]  %s247, 4096, %s249, %s238, 128, 128, 8
        $region44: #{sppf_forward.1} parent=39 // pred_fallthru
          _
      $region40: #{sppf_forward.1} parent=5 // pred_fallthru
        _
      %p255 = scmp.le.s32.totalorder 1, %s19
      %p256 = scmp.lt.s32.totalorder %s19, 3
      %p257 = pnand %p255, %p256
      %p258 = pneg %p257
      // Predicated region
      $region45: #{sppf_forward.1} parent=5 // pred_check
        _
      $region46: #{sppf_forward.1} parent=5 // pred_check_branch
        %260 = sbr.rel (%p257) target = $region48
      $region47: #{sppf_forward.1} parent=5 // pred_region
        %s261 = ssub.s32 %s19, 1
        %s262 = sand.u32 %s32, 1
        %s263 = scalar_lea.sflag [#allocation6], %s262
        %s264 = sand.u32 %s32, 1
        %s265 = smul.addr %s264, 256
        %s266 = scalar_lea.vmem [#allocation5], %s265
        // Predicated region
        $region49: #{sppf_forward.1} parent=47 // pred_check
          %p267 = pneg %p45
        $region50: #{sppf_forward.1} parent=47 // pred_check_branch
          %269 = sbr.rel (%p267) target = $region52
        $region51: #{sppf_forward.1} parent=47 // pred_region
          %270 = dma.done %s263, 4096
        $region52: #{sppf_forward.1} parent=47 // pred_fallthru
          _
        %s271 = sand.u32 %s32, 1
        %s272 = scalar_lea.sflag [#allocation6], %s271
        %s273 = sand.u32 %s32, 1
        %s274 = smul.addr %s273, 256
        %s275 = scalar_lea.vmem [#allocation5], %s274
        %p276 = pneg %p45
        %p277 = pneg %p42
        %p278 = pneg %p66
        %p279 = pneg %p63
        %p280 = pneg %p87
        %p281 = pneg %p84
        %p282 = pneg %p108
        %p283 = pneg %p105
        %p284 = pneg %p129
        %p285 = pneg %p126
        %p286 = pneg %p150
        %p287 = pneg %p147
        %p288 = pneg %p171
        %p289 = pneg %p168
        %p290 = pneg %p197
        %p291 = pneg %p194
        %s292 = sand.u32 %s184, 1
        %s293 = scalar_lea.sflag [#allocation7], %s292
        %s294 = sand.u32 %s184, 1
        %s295 = smul.addr %s294, 256
        %s296 = scalar_lea.vmem [#allocation8], %s295
        %v299 = vld [vmem:[%s266] sm:$0xff]
        %v300 = vld [vmem:[%s266 + $0x8] sm:$0xff]
        %v301 = vld [vmem:[%s266 + $0x10] sm:$0xff]
        %v302 = vld [vmem:[%s266 + $0x18] sm:$0xff]
        %v303 = vld [vmem:[%s266 + $0x20] sm:$0xff]
        %v304 = vld [vmem:[%s266 + $0x28] sm:$0xff]
        %v305 = vld [vmem:[%s266 + $0x30] sm:$0xff]
        %v306 = vld [vmem:[%s266 + $0x38] sm:$0xff]
        %v307 = vld [vmem:[%s266 + $0x40] sm:$0xff]
        %v308 = vld [vmem:[%s266 + $0x48] sm:$0xff]
        %v309 = vld [vmem:[%s266 + $0x50] sm:$0xff]
        %v310 = vld [vmem:[%s266 + $0x58] sm:$0xff]
        %v311 = vld [vmem:[%s266 + $0x60] sm:$0xff]
        %v312 = vld [vmem:[%s266 + $0x68] sm:$0xff]
        %v313 = vld [vmem:[%s266 + $0x70] sm:$0xff]
        %v314 = vld [vmem:[%s266 + $0x78] sm:$0xff]
        %v315 = vld [vmem:[%s266 + $0x80] sm:$0xff]
        %v316 = vld [vmem:[%s266 + $0x88] sm:$0xff]
        %v317 = vld [vmem:[%s266 + $0x90] sm:$0xff]
        %v318 = vld [vmem:[%s266 + $0x98] sm:$0xff]
        %v319 = vld [vmem:[%s266 + $0xa0] sm:$0xff]
        %v320 = vld [vmem:[%s266 + $0xa8] sm:$0xff]
        %v321 = vld [vmem:[%s266 + $0xb0] sm:$0xff]
        %v322 = vld [vmem:[%s266 + $0xb8] sm:$0xff]
        %v323 = vld [vmem:[%s266 + $0xc0] sm:$0xff]
        %v324 = vld [vmem:[%s266 + $0xc8] sm:$0xff]
        %v325 = vld [vmem:[%s266 + $0xd0] sm:$0xff]
        %v326 = vld [vmem:[%s266 + $0xd8] sm:$0xff]
        %v327 = vld [vmem:[%s266 + $0xe0] sm:$0xff]
        %v328 = vld [vmem:[%s266 + $0xe8] sm:$0xff]
        %v329 = vld [vmem:[%s266 + $0xf0] sm:$0xff]
        %v330 = vld [vmem:[%s266 + $0xf8] sm:$0xff]
        %v331 = vpack.c.bf16 %v300, %v299
        %v332 = vpack.c.bf16 %v302, %v301
        %v333 = vpack.c.bf16 %v304, %v303
        %v334 = vpack.c.bf16 %v306, %v305
        %v335 = vpack.c.bf16 %v308, %v307
        %v336 = vpack.c.bf16 %v310, %v309
        %v337 = vpack.c.bf16 %v312, %v311
        %v338 = vpack.c.bf16 %v314, %v313
        %v339 = vpack.c.bf16 %v316, %v315
        %v340 = vpack.c.bf16 %v318, %v317
        %v341 = vpack.c.bf16 %v320, %v319
        %v342 = vpack.c.bf16 %v322, %v321
        %v343 = vpack.c.bf16 %v324, %v323
        %v344 = vpack.c.bf16 %v326, %v325
        %v345 = vpack.c.bf16 %v328, %v327
        %v346 = vpack.c.bf16 %v330, %v329
        %v347 = vld [vmem:[%s1] sm:$0xf]
        %v348 = vld [vmem:[%s1 + $0x4] sm:$0xf]
        %v349 = vld [vmem:[%s1 + $0x8] sm:$0xf]
        %v350 = vld [vmem:[%s1 + $0xc] sm:$0xf]
        %v355 = vunpack.c.l.b16 %v347
        %v356 = vunpack.c.l.b16 %v348
        %v357 = vunpack.c.l.b16 %v349
        %v358 = vunpack.c.l.b16 %v350
        %v359 = vpack.c.b16 %v356, %v355
        %v360 = vpack.c.b16 %v358, %v357
        %vm363 = vcmask 261120
        %v365 = vsel %vm363, %v331, 0
        %v368 = vsel %vm363, %v332, 0
        %v371 = vsel %vm363, %v333, 0
        %v374 = vsel %vm363, %v334, 0
        %v377 = vsel %vm363, %v335, 0
        %v380 = vsel %vm363, %v336, 0
        %v383 = vsel %vm363, %v337, 0
        %v386 = vsel %vm363, %v338, 0
        %v389 = vsel %vm363, %v339, 0
        %v392 = vsel %vm363, %v340, 0
        %v395 = vsel %vm363, %v341, 0
        %v398 = vsel %vm363, %v342, 0
        %v401 = vsel %vm363, %v343, 0
        %v404 = vsel %vm363, %v344, 0
        %v407 = vsel %vm363, %v345, 0
        %v410 = vsel %vm363, %v346, 0
        %412 = vmatprep.subr.bf16.mxu0 0
        %413 = vmatpush1.bf16.msra.mxu0 %v359
        %414 = vmatprep.subr.bf16.mxu0 0
        %415 = vmatpush1.bf16.msra.mxu0 %v360
        %416 = vmatprep.subr.bf16.mxu0 0
        %417 = vmatpush1.bf16.msra.mxu0 0
        %418 = vmatprep.subr.bf16.mxu0 0
        %419 = vmatpush1.bf16.msra.mxu0 0
        %420 = vmatprep.subr.bf16.mxu0 0
        %421 = vmatpush1.bf16.msra.mxu0 0
        %422 = vmatprep.subr.bf16.mxu0 0
        %423 = vmatpush1.bf16.msra.mxu0 0
        %424 = vmatprep.subr.bf16.mxu0 0
        %425 = vmatpush1.bf16.msra.mxu0 0
        %426 = vmatprep.subr.bf16.mxu0 0
        %427 = vmatpush1.bf16.msra.mxu0 0
        %428 = vmatprep.subr.bf16.mxu0 0
        %429 = vmatpush1.bf16.msra.mxu0 0
        %430 = vmatprep.subr.bf16.mxu0 0
        %431 = vmatpush1.bf16.msra.mxu0 0
        %432 = vmatprep.subr.bf16.mxu0 0
        %433 = vmatpush1.bf16.msra.mxu0 0
        %434 = vmatprep.subr.bf16.mxu0 0
        %435 = vmatpush1.bf16.msra.mxu0 0
        %436 = vmatprep.subr.bf16.mxu0 0
        %437 = vmatpush1.bf16.msra.mxu0 0
        %438 = vmatprep.subr.bf16.mxu0 0
        %439 = vmatpush1.bf16.msra.mxu0 0
        %440 = vmatprep.subr.bf16.mxu0 0
        %441 = vmatpush1.bf16.msra.mxu0 0
        %442 = vmatprep.subr.bf16.mxu0 0
        %443 = vmatpush1.bf16.msra.mxu0 0
        %444 = vmatprep.mubr.bf16.mxu0 0
        %445 = vmatmul.mubr.bf16.gmra.mrb[0].mxu0 %v365
        %v446 = vpop.f32.mrb[0].mxu0
        %v447 = vadd.f32 0.0, %v446
        %v448 = vpop.f32.mrb[0].mxu0
        %v449 = vpop.f32.mrb[0].mxu0
        %v450 = vadd.f32 0.0, %v449
        %v451 = vpop.f32.mrb[0].mxu0
        %452 = vmatprep.mubr.bf16.mxu0 0
        %453 = vmatmul.mubr.bf16.gmra.mrb[0].mxu0 %v368
        %v454 = vpop.f32.mrb[0].mxu0
        %v455 = vadd.f32 0.0, %v454
        %v456 = vpop.f32.mrb[0].mxu0
        %v457 = vpop.f32.mrb[0].mxu0
        %v458 = vadd.f32 0.0, %v457
        %v459 = vpop.f32.mrb[0].mxu0
        %460 = vmatprep.mubr.bf16.mxu0 0
        %461 = vmatmul.mubr.bf16.gmra.mrb[0].mxu0 %v371
        %v462 = vpop.f32.mrb[0].mxu0
        %v463 = vadd.f32 0.0, %v462
        %v464 = vpop.f32.mrb[0].mxu0
        %v465 = vpop.f32.mrb[0].mxu0
        %v466 = vadd.f32 0.0, %v465
        %v467 = vpop.f32.mrb[0].mxu0
        %468 = vmatprep.mubr.bf16.mxu0 0
        %469 = vmatmul.mubr.bf16.gmra.mrb[0].mxu0 %v374
        %v470 = vpop.f32.mrb[0].mxu0
        %v471 = vadd.f32 0.0, %v470
        %v472 = vpop.f32.mrb[0].mxu0
        %v473 = vpop.f32.mrb[0].mxu0
        %v474 = vadd.f32 0.0, %v473
        %v475 = vpop.f32.mrb[0].mxu0
        %476 = vmatprep.mubr.bf16.mxu0 0
        %477 = vmatmul.mubr.bf16.gmra.mrb[0].mxu0 %v377
        %v478 = vpop.f32.mrb[0].mxu0
        %v479 = vadd.f32 0.0, %v478
        %v480 = vpop.f32.mrb[0].mxu0
        %v481 = vpop.f32.mrb[0].mxu0
        %v482 = vadd.f32 0.0, %v481
        %v483 = vpop.f32.mrb[0].mxu0
        %484 = vmatprep.mubr.bf16.mxu0 0
        %485 = vmatmul.mubr.bf16.gmra.mrb[0].mxu0 %v380
        %v486 = vpop.f32.mrb[0].mxu0
        %v487 = vadd.f32 0.0, %v486
        %v488 = vpop.f32.mrb[0].mxu0
        %v489 = vpop.f32.mrb[0].mxu0
        %v490 = vadd.f32 0.0, %v489
        %v491 = vpop.f32.mrb[0].mxu0
        %492 = vmatprep.mubr.bf16.mxu0 0
        %493 = vmatmul.mubr.bf16.gmra.mrb[0].mxu0 %v383
        %v494 = vpop.f32.mrb[0].mxu0
        %v495 = vadd.f32 0.0, %v494
        %v496 = vpop.f32.mrb[0].mxu0
        %v497 = vpop.f32.mrb[0].mxu0
        %v498 = vadd.f32 0.0, %v497
        %v499 = vpop.f32.mrb[0].mxu0
        %500 = vmatprep.mubr.bf16.mxu0 0
        %501 = vmatmul.mubr.bf16.gmra.mrb[0].mxu0 %v386
        %v502 = vpop.f32.mrb[0].mxu0
        %v503 = vadd.f32 0.0, %v502
        %v504 = vpop.f32.mrb[0].mxu0
        %v505 = vpop.f32.mrb[0].mxu0
        %v506 = vadd.f32 0.0, %v505
        %v507 = vpop.f32.mrb[0].mxu0
        %508 = vmatprep.mubr.bf16.mxu0 0
        %509 = vmatmul.mubr.bf16.gmra.mrb[0].mxu0 %v389
        %v510 = vpop.f32.mrb[0].mxu0
        %v511 = vadd.f32 0.0, %v510
        %v512 = vpop.f32.mrb[0].mxu0
        %v513 = vpop.f32.mrb[0].mxu0
        %v514 = vadd.f32 0.0, %v513
        %v515 = vpop.f32.mrb[0].mxu0
        %516 = vmatprep.mubr.bf16.mxu0 0
        %517 = vmatmul.mubr.bf16.gmra.mrb[0].mxu0 %v392
        %v518 = vpop.f32.mrb[0].mxu0
        %v519 = vadd.f32 0.0, %v518
        %v520 = vpop.f32.mrb[0].mxu0
        %v521 = vpop.f32.mrb[0].mxu0
        %v522 = vadd.f32 0.0, %v521
        %v523 = vpop.f32.mrb[0].mxu0
        %524 = vmatprep.mubr.bf16.mxu0 0
        %525 = vmatmul.mubr.bf16.gmra.mrb[0].mxu0 %v395
        %v526 = vpop.f32.mrb[0].mxu0
        %v527 = vadd.f32 0.0, %v526
        %v528 = vpop.f32.mrb[0].mxu0
        %v529 = vpop.f32.mrb[0].mxu0
        %v530 = vadd.f32 0.0, %v529
        %v531 = vpop.f32.mrb[0].mxu0
        %532 = vmatprep.mubr.bf16.mxu0 0
        %533 = vmatmul.mubr.bf16.gmra.mrb[0].mxu0 %v398
        %v534 = vpop.f32.mrb[0].mxu0
        %v535 = vadd.f32 0.0, %v534
        %v536 = vpop.f32.mrb[0].mxu0
        %v537 = vpop.f32.mrb[0].mxu0
        %v538 = vadd.f32 0.0, %v537
        %v539 = vpop.f32.mrb[0].mxu0
        %540 = vmatprep.mubr.bf16.mxu0 0
        %541 = vmatmul.mubr.bf16.gmra.mrb[0].mxu0 %v401
        %v542 = vpop.f32.mrb[0].mxu0
        %v543 = vadd.f32 0.0, %v542
        %v544 = vpop.f32.mrb[0].mxu0
        %v545 = vpop.f32.mrb[0].mxu0
        %v546 = vadd.f32 0.0, %v545
        %v547 = vpop.f32.mrb[0].mxu0
        %548 = vmatprep.mubr.bf16.mxu0 0
        %549 = vmatmul.mubr.bf16.gmra.mrb[0].mxu0 %v404
        %v550 = vpop.f32.mrb[0].mxu0
        %v551 = vadd.f32 0.0, %v550
        %v552 = vpop.f32.mrb[0].mxu0
        %v553 = vpop.f32.mrb[0].mxu0
        %v554 = vadd.f32 0.0, %v553
        %v555 = vpop.f32.mrb[0].mxu0
        %556 = vmatprep.mubr.bf16.mxu0 0
        %557 = vmatmul.mubr.bf16.gmra.mrb[0].mxu0 %v407
        %v558 = vpop.f32.mrb[0].mxu0
        %v559 = vadd.f32 0.0, %v558
        %v560 = vpop.f32.mrb[0].mxu0
        %v561 = vpop.f32.mrb[0].mxu0
        %v562 = vadd.f32 0.0, %v561
        %v563 = vpop.f32.mrb[0].mxu0
        %564 = vmatprep.mubr.bf16.mxu0 0
        %565 = vmatmul.mubr.bf16.gmra.mrb[0].mxu0 %v410
        %v566 = vpop.f32.mrb[0].mxu0
        %v567 = vadd.f32 0.0, %v566
        %v568 = vpop.f32.mrb[0].mxu0
        %v569 = vpop.f32.mrb[0].mxu0
        %v570 = vadd.f32 0.0, %v569
        %v571 = vpop.f32.mrb[0].mxu0
        %572 = vdwg.mxu0
        %v573 = vld [vmem:[%s2] sm:$0x1]
        %v575 = vlaneseq
        %v576 = vshrl.u32 %v575, 7
        %v577 = vsub.s32 0, %v576
        %v578 = vrot.slane %v573, %v577
        %v580 = vmul.f32 %v447, %v578
        %v581 = vmul.f32 %v450, %v578
        %v582 = vmul.f32 %v455, %v578
        %v583 = vmul.f32 %v458, %v578
        %v584 = vmul.f32 %v463, %v578
        %v585 = vmul.f32 %v466, %v578
        %v586 = vmul.f32 %v471, %v578
        %v587 = vmul.f32 %v474, %v578
        %v588 = vmul.f32 %v479, %v578
        %v589 = vmul.f32 %v482, %v578
        %v590 = vmul.f32 %v487, %v578
        %v591 = vmul.f32 %v490, %v578
        %v592 = vmul.f32 %v495, %v578
        %v593 = vmul.f32 %v498, %v578
        %v594 = vmul.f32 %v503, %v578
        %v595 = vmul.f32 %v506, %v578
        %v596 = vmul.f32 %v511, %v578
        %v597 = vmul.f32 %v514, %v578
        %v598 = vmul.f32 %v519, %v578
        %v599 = vmul.f32 %v522, %v578
        %v600 = vmul.f32 %v527, %v578
        %v601 = vmul.f32 %v530, %v578
        %v602 = vmul.f32 %v535, %v578
        %v603 = vmul.f32 %v538, %v578
        %v604 = vmul.f32 %v543, %v578
        %v605 = vmul.f32 %v546, %v578
        %v606 = vmul.f32 %v551, %v578
        %v607 = vmul.f32 %v554, %v578
        %v608 = vmul.f32 %v559, %v578
        %v609 = vmul.f32 %v562, %v578
        %v610 = vmul.f32 %v567, %v578
        %v611 = vmul.f32 %v570, %v578
        %v612 = vld [vmem:[%s3] sm:$0x1]
        %v614 = vlaneseq
        %v615 = vshrl.u32 %v614, 7
        %v616 = vsub.s32 0, %v615
        %v617 = vrot.slane %v612, %v616
        %v619 = vadd.f32 %v580, %v617
        %v620 = vadd.f32 %v581, %v617
        %v621 = vadd.f32 %v582, %v617
        %v622 = vadd.f32 %v583, %v617
        %v623 = vadd.f32 %v584, %v617
        %v624 = vadd.f32 %v585, %v617
        %v625 = vadd.f32 %v586, %v617
        %v626 = vadd.f32 %v587, %v617
        %v627 = vadd.f32 %v588, %v617
        %v628 = vadd.f32 %v589, %v617
        %v629 = vadd.f32 %v590, %v617
        %v630 = vadd.f32 %v591, %v617
        %v631 = vadd.f32 %v592, %v617
        %v632 = vadd.f32 %v593, %v617
        %v633 = vadd.f32 %v594, %v617
        %v634 = vadd.f32 %v595, %v617
        %v635 = vadd.f32 %v596, %v617
        %v636 = vadd.f32 %v597, %v617
        %v637 = vadd.f32 %v598, %v617
        %v638 = vadd.f32 %v599, %v617
        %v639 = vadd.f32 %v600, %v617
        %v640 = vadd.f32 %v601, %v617
        %v641 = vadd.f32 %v602, %v617
        %v642 = vadd.f32 %v603, %v617
        %v643 = vadd.f32 %v604, %v617
        %v644 = vadd.f32 %v605, %v617
        %v645 = vadd.f32 %v606, %v617
        %v646 = vadd.f32 %v607, %v617
        %v647 = vadd.f32 %v608, %v617
        %v648 = vadd.f32 %v609, %v617
        %v649 = vadd.f32 %v610, %v617
        %v650 = vadd.f32 %v611, %v617
        %v651 = vxor.u32 %v619, 2147483648
        %v652 = vxor.u32 %v620, 2147483648
        %v653 = vxor.u32 %v621, 2147483648
        %v654 = vxor.u32 %v622, 2147483648
        %v655 = vxor.u32 %v623, 2147483648
        %v656 = vxor.u32 %v624, 2147483648
        %v657 = vxor.u32 %v625, 2147483648
        %v658 = vxor.u32 %v626, 2147483648
        %v659 = vxor.u32 %v627, 2147483648
        %v660 = vxor.u32 %v628, 2147483648
        %v661 = vxor.u32 %v629, 2147483648
        %v662 = vxor.u32 %v630, 2147483648
        %v663 = vxor.u32 %v631, 2147483648
        %v664 = vxor.u32 %v632, 2147483648
        %v665 = vxor.u32 %v633, 2147483648
        %v666 = vxor.u32 %v634, 2147483648
        %v667 = vxor.u32 %v635, 2147483648
        %v668 = vxor.u32 %v636, 2147483648
        %v669 = vxor.u32 %v637, 2147483648
        %v670 = vxor.u32 %v638, 2147483648
        %v671 = vxor.u32 %v639, 2147483648
        %v672 = vxor.u32 %v640, 2147483648
        %v673 = vxor.u32 %v641, 2147483648
        %v674 = vxor.u32 %v642, 2147483648
        %v675 = vxor.u32 %v643, 2147483648
        %v676 = vxor.u32 %v644, 2147483648
        %v677 = vxor.u32 %v645, 2147483648
        %v678 = vxor.u32 %v646, 2147483648
        %v679 = vxor.u32 %v647, 2147483648
        %v680 = vxor.u32 %v648, 2147483648
        %v681 = vxor.u32 %v649, 2147483648
        %v682 = vxor.u32 %v650, 2147483648
        %v683 = vmul.f32 %v651, 1.442695
        %v684 = vpow.pop %v683
        %v685 = vmul.f32 %v652, 1.442695
        %v686 = vpow.pop %v685
        %v687 = vmul.f32 %v653, 1.442695
        %v688 = vpow.pop %v687
        %v689 = vmul.f32 %v654, 1.442695
        %v690 = vpow.pop %v689
        %v691 = vmul.f32 %v655, 1.442695
        %v692 = vpow.pop %v691
        %v693 = vmul.f32 %v656, 1.442695
        %v694 = vpow.pop %v693
        %v695 = vmul.f32 %v657, 1.442695
        %v696 = vpow.pop %v695
        %v697 = vmul.f32 %v658, 1.442695
        %v698 = vpow.pop %v697
        %v699 = vmul.f32 %v659, 1.442695
        %v700 = vpow.pop %v699
        %v701 = vmul.f32 %v660, 1.442695
        %v702 = vpow.pop %v701
        %v703 = vmul.f32 %v661, 1.442695
        %v704 = vpow.pop %v703
        %v705 = vmul.f32 %v662, 1.442695
        %v706 = vpow.pop %v705
        %v707 = vmul.f32 %v663, 1.442695
        %v708 = vpow.pop %v707
        %v709 = vmul.f32 %v664, 1.442695
        %v710 = vpow.pop %v709
        %v711 = vmul.f32 %v665, 1.442695
        %v712 = vpow.pop %v711
        %v713 = vmul.f32 %v666, 1.442695
        %v714 = vpow.pop %v713
        %v715 = vmul.f32 %v667, 1.442695
        %v716 = vpow.pop %v715
        %v717 = vmul.f32 %v668, 1.442695
        %v718 = vpow.pop %v717
        %v719 = vmul.f32 %v669, 1.442695
        %v720 = vpow.pop %v719
        %v721 = vmul.f32 %v670, 1.442695
        %v722 = vpow.pop %v721
        %v723 = vmul.f32 %v671, 1.442695
        %v724 = vpow.pop %v723
        %v725 = vmul.f32 %v672, 1.442695
        %v726 = vpow.pop %v725
        %v727 = vmul.f32 %v673, 1.442695
        %v728 = vpow.pop %v727
        %v729 = vmul.f32 %v674, 1.442695
        %v730 = vpow.pop %v729
        %v731 = vmul.f32 %v675, 1.442695
        %v732 = vpow.pop %v731
        %v733 = vmul.f32 %v676, 1.442695
        %v734 = vpow.pop %v733
        %v735 = vmul.f32 %v677, 1.442695
        %v736 = vpow.pop %v735
        %v737 = vmul.f32 %v678, 1.442695
        %v738 = vpow.pop %v737
        %v739 = vmul.f32 %v679, 1.442695
        %v740 = vpow.pop %v739
        %v741 = vmul.f32 %v680, 1.442695
        %v742 = vpow.pop %v741
        %v743 = vmul.f32 %v681, 1.442695
        %v744 = vpow.pop %v743
        %v745 = vmul.f32 %v682, 1.442695
        %v746 = vpow.pop %v745
        %v747 = vadd.f32 %v684, 1.0
        %v748 = vadd.f32 %v686, 1.0
        %v749 = vadd.f32 %v688, 1.0
        %v750 = vadd.f32 %v690, 1.0
        %v751 = vadd.f32 %v692, 1.0
        %v752 = vadd.f32 %v694, 1.0
        %v753 = vadd.f32 %v696, 1.0
        %v754 = vadd.f32 %v698, 1.0
        %v755 = vadd.f32 %v700, 1.0
        %v756 = vadd.f32 %v702, 1.0
        %v757 = vadd.f32 %v704, 1.0
        %v758 = vadd.f32 %v706, 1.0
        %v759 = vadd.f32 %v708, 1.0
        %v760 = vadd.f32 %v710, 1.0
        %v761 = vadd.f32 %v712, 1.0
        %v762 = vadd.f32 %v714, 1.0
        %v763 = vadd.f32 %v716, 1.0
        %v764 = vadd.f32 %v718, 1.0
        %v765 = vadd.f32 %v720, 1.0
        %v766 = vadd.f32 %v722, 1.0
        %v767 = vadd.f32 %v724, 1.0
        %v768 = vadd.f32 %v726, 1.0
        %v769 = vadd.f32 %v728, 1.0
        %v770 = vadd.f32 %v730, 1.0
        %v771 = vadd.f32 %v732, 1.0
        %v772 = vadd.f32 %v734, 1.0
        %v773 = vadd.f32 %v736, 1.0
        %v774 = vadd.f32 %v738, 1.0
        %v775 = vadd.f32 %v740, 1.0
        %v776 = vadd.f32 %v742, 1.0
        %v777 = vadd.f32 %v744, 1.0
        %v778 = vadd.f32 %v746, 1.0
        %v779 = vrcp.pop %v747
        %v780 = vmul.f32 1.0, %v779
        %v781 = vrcp.pop %v748
        %v782 = vmul.f32 1.0, %v781
        %v783 = vrcp.pop %v749
        %v784 = vmul.f32 1.0, %v783
        %v785 = vrcp.pop %v750
        %v786 = vmul.f32 1.0, %v785
        %v787 = vrcp.pop %v751
        %v788 = vmul.f32 1.0, %v787
        %v789 = vrcp.pop %v752
        %v790 = vmul.f32 1.0, %v789
        %v791 = vrcp.pop %v753
        %v792 = vmul.f32 1.0, %v791
        %v793 = vrcp.pop %v754
        %v794 = vmul.f32 1.0, %v793
        %v795 = vrcp.pop %v755
        %v796 = vmul.f32 1.0, %v795
        %v797 = vrcp.pop %v756
        %v798 = vmul.f32 1.0, %v797
        %v799 = vrcp.pop %v757
        %v800 = vmul.f32 1.0, %v799
        %v801 = vrcp.pop %v758
        %v802 = vmul.f32 1.0, %v801
        %v803 = vrcp.pop %v759
        %v804 = vmul.f32 1.0, %v803
        %v805 = vrcp.pop %v760
        %v806 = vmul.f32 1.0, %v805
        %v807 = vrcp.pop %v761
        %v808 = vmul.f32 1.0, %v807
        %v809 = vrcp.pop %v762
        %v810 = vmul.f32 1.0, %v809
        %v811 = vrcp.pop %v763
        %v812 = vmul.f32 1.0, %v811
        %v813 = vrcp.pop %v764
        %v814 = vmul.f32 1.0, %v813
        %v815 = vrcp.pop %v765
        %v816 = vmul.f32 1.0, %v815
        %v817 = vrcp.pop %v766
        %v818 = vmul.f32 1.0, %v817
        %v819 = vrcp.pop %v767
        %v820 = vmul.f32 1.0, %v819
        %v821 = vrcp.pop %v768
        %v822 = vmul.f32 1.0, %v821
        %v823 = vrcp.pop %v769
        %v824 = vmul.f32 1.0, %v823
        %v825 = vrcp.pop %v770
        %v826 = vmul.f32 1.0, %v825
        %v827 = vrcp.pop %v771
        %v828 = vmul.f32 1.0, %v827
        %v829 = vrcp.pop %v772
        %v830 = vmul.f32 1.0, %v829
        %v831 = vrcp.pop %v773
        %v832 = vmul.f32 1.0, %v831
        %v833 = vrcp.pop %v774
        %v834 = vmul.f32 1.0, %v833
        %v835 = vrcp.pop %v775
        %v836 = vmul.f32 1.0, %v835
        %v837 = vrcp.pop %v776
        %v838 = vmul.f32 1.0, %v837
        %v839 = vrcp.pop %v777
        %v840 = vmul.f32 1.0, %v839
        %v841 = vrcp.pop %v778
        %v842 = vmul.f32 1.0, %v841
        %v843 = vmul.f32 %v619, %v780
        %v844 = vmul.f32 %v620, %v782
        %v845 = vmul.f32 %v621, %v784
        %v846 = vmul.f32 %v622, %v786
        %v847 = vmul.f32 %v623, %v788
        %v848 = vmul.f32 %v624, %v790
        %v849 = vmul.f32 %v625, %v792
        %v850 = vmul.f32 %v626, %v794
        %v851 = vmul.f32 %v627, %v796
        %v852 = vmul.f32 %v628, %v798
        %v853 = vmul.f32 %v629, %v800
        %v854 = vmul.f32 %v630, %v802
        %v855 = vmul.f32 %v631, %v804
        %v856 = vmul.f32 %v632, %v806
        %v857 = vmul.f32 %v633, %v808
        %v858 = vmul.f32 %v634, %v810
        %v859 = vmul.f32 %v635, %v812
        %v860 = vmul.f32 %v636, %v814
        %v861 = vmul.f32 %v637, %v816
        %v862 = vmul.f32 %v638, %v818
        %v863 = vmul.f32 %v639, %v820
        %v864 = vmul.f32 %v640, %v822
        %v865 = vmul.f32 %v641, %v824
        %v866 = vmul.f32 %v642, %v826
        %v867 = vmul.f32 %v643, %v828
        %v868 = vmul.f32 %v644, %v830
        %v869 = vmul.f32 %v645, %v832
        %v870 = vmul.f32 %v646, %v834
        %v871 = vmul.f32 %v647, %v836
        %v872 = vmul.f32 %v648, %v838
        %v873 = vmul.f32 %v649, %v840
        %v874 = vmul.f32 %v650, %v842
        %v875 = vpack.c.bf16 %v844, %v843
        %v876 = vpack.c.bf16 %v846, %v845
        %v877 = vpack.c.bf16 %v848, %v847
        %v878 = vpack.c.bf16 %v850, %v849
        %v879 = vpack.c.bf16 %v852, %v851
        %v880 = vpack.c.bf16 %v854, %v853
        %v881 = vpack.c.bf16 %v856, %v855
        %v882 = vpack.c.bf16 %v858, %v857
        %v883 = vpack.c.bf16 %v860, %v859
        %v884 = vpack.c.bf16 %v862, %v861
        %v885 = vpack.c.bf16 %v864, %v863
        %v886 = vpack.c.bf16 %v866, %v865
        %v887 = vpack.c.bf16 %v868, %v867
        %v888 = vpack.c.bf16 %v870, %v869
        %v889 = vpack.c.bf16 %v872, %v871
        %v890 = vpack.c.bf16 %v874, %v873
        %vm891 = vcmask 130048
        %892 = vst.msk [vmem:[#allocation4] sm:$0xff] %vm891, %v875
        %893 = vst.msk [vmem:[#allocation4 + $0x8] sm:$0xff] %vm891, %v876
        %894 = vst.msk [vmem:[#allocation4 + $0x10] sm:$0xff] %vm891, %v877
        %895 = vst.msk [vmem:[#allocation4 + $0x18] sm:$0xff] %vm891, %v878
        %896 = vst.msk [vmem:[#allocation4 + $0x20] sm:$0xff] %vm891, %v879
        %897 = vst.msk [vmem:[#allocation4 + $0x28] sm:$0xff] %vm891, %v880
        %898 = vst.msk [vmem:[#allocation4 + $0x30] sm:$0xff] %vm891, %v881
        %899 = vst.msk [vmem:[#allocation4 + $0x38] sm:$0xff] %vm891, %v882
        %900 = vst.msk [vmem:[#allocation4 + $0x40] sm:$0xff] %vm891, %v883
        %901 = vst.msk [vmem:[#allocation4 + $0x48] sm:$0xff] %vm891, %v884
        %902 = vst.msk [vmem:[#allocation4 + $0x50] sm:$0xff] %vm891, %v885
        %903 = vst.msk [vmem:[#allocation4 + $0x58] sm:$0xff] %vm891, %v886
        %904 = vst.msk [vmem:[#allocation4 + $0x60] sm:$0xff] %vm891, %v887
        %905 = vst.msk [vmem:[#allocation4 + $0x68] sm:$0xff] %vm891, %v888
        %906 = vst.msk [vmem:[#allocation4 + $0x70] sm:$0xff] %vm891, %v889
        %907 = vst.msk [vmem:[#allocation4 + $0x78] sm:$0xff] %vm891, %v890
        %vm908 = vcmask 123904
        %909 = vst.msk [vmem:[#allocation2] sm:$0x3] %vm908, -inf
        %910 = vst.msk [vmem:[#allocation2 + $0x18] sm:$0x3] %vm908, -inf
        %911 = vst.msk [vmem:[#allocation2 + $0x30] sm:$0x3] %vm908, -inf
        %912 = vst.msk [vmem:[#allocation2 + $0x48] sm:$0x3] %vm908, -inf
        %913 = vst.msk [vmem:[#allocation2 + $0x60] sm:$0x3] %vm908, -inf
        %914 = vst.msk [vmem:[#allocation2 + $0x78] sm:$0x3] %vm908, -inf
        %915 = vst.msk [vmem:[#allocation2 + $0x90] sm:$0x3] %vm908, -inf
        %916 = vst.msk [vmem:[#allocation2 + $0xa8] sm:$0x3] %vm908, -inf
        %917 = vst.msk [vmem:[#allocation2 + $0xc0] sm:$0x3] %vm908, -inf
        %918 = vst.msk [vmem:[#allocation2 + $0xd8] sm:$0x3] %vm908, -inf
        %919 = vst.msk [vmem:[#allocation2 + $0xf0] sm:$0x3] %vm908, -inf
        %920 = vst.msk [vmem:[#allocation2 + $0x108] sm:$0x3] %vm908, -inf
        %921 = vst.msk [vmem:[#allocation2 + $0x120] sm:$0x3] %vm908, -inf
        %922 = vst.msk [vmem:[#allocation2 + $0x138] sm:$0x3] %vm908, -inf
        %923 = vst.msk [vmem:[#allocation2 + $0x150] sm:$0x3] %vm908, -inf
        %924 = vst.msk [vmem:[#allocation2 + $0x168] sm:$0x3] %vm908, -inf
        %925 = vst.msk [vmem:[#allocation2 + $0x12] sm:$0x3] %vm908, -inf
        %926 = vst.msk [vmem:[#allocation2 + $0x2a] sm:$0x3] %vm908, -inf
        %927 = vst.msk [vmem:[#allocation2 + $0x42] sm:$0x3] %vm908, -inf
        %928 = vst.msk [vmem:[#allocation2 + $0x5a] sm:$0x3] %vm908, -inf
        %929 = vst.msk [vmem:[#allocation2 + $0x72] sm:$0x3] %vm908, -inf
        %930 = vst.msk [vmem:[#allocation2 + $0x8a] sm:$0x3] %vm908, -inf
        %931 = vst.msk [vmem:[#allocation2 + $0xa2] sm:$0x3] %vm908, -inf
        %932 = vst.msk [vmem:[#allocation2 + $0xba] sm:$0x3] %vm908, -inf
        %933 = vst.msk [vmem:[#allocation2 + $0xd2] sm:$0x3] %vm908, -inf
        %934 = vst.msk [vmem:[#allocation2 + $0xea] sm:$0x3] %vm908, -inf
        %935 = vst.msk [vmem:[#allocation2 + $0x102] sm:$0x3] %vm908, -inf
        %936 = vst.msk [vmem:[#allocation2 + $0x11a] sm:$0x3] %vm908, -inf
        %937 = vst.msk [vmem:[#allocation2 + $0x132] sm:$0x3] %vm908, -inf
        %938 = vst.msk [vmem:[#allocation2 + $0x14a] sm:$0x3] %vm908, -inf
        %939 = vst.msk [vmem:[#allocation2 + $0x162] sm:$0x3] %vm908, -inf
        %940 = vst.msk [vmem:[#allocation2 + $0x17a] sm:$0x3] %vm908, -inf
        %941 = vst.msk [vmem:[#allocation3] sm:$0xff] %vm891, 4286644096
        %942 = vst.msk [vmem:[#allocation3 + $0x8] sm:$0xff] %vm891, 4286644096
        %s943 = scalar_lea.vmem [#allocation3], 144
        %944 = vst.msk [vmem:[%s943] sm:$0xff] %vm891, 4286644096
        %945 = vst.msk [vmem:[%s943 + $0x8] sm:$0xff] %vm891, 4286644096
        %v946 = vunpack.c.l.bf16 %v875
        %v947 = vunpack.c.h.bf16 %v875
        %v948 = vunpack.c.l.bf16 %v876
        %v949 = vunpack.c.h.bf16 %v876
        %v950 = vunpack.c.l.bf16 %v877
        %v951 = vunpack.c.h.bf16 %v877
        %v952 = vunpack.c.l.bf16 %v878
        %v953 = vunpack.c.h.bf16 %v878
        %v954 = vunpack.c.l.bf16 %v879
        %v955 = vunpack.c.h.bf16 %v879
        %v956 = vunpack.c.l.bf16 %v880
        %v957 = vunpack.c.h.bf16 %v880
        %v958 = vunpack.c.l.bf16 %v881
        %v959 = vunpack.c.h.bf16 %v881
        %v960 = vunpack.c.l.bf16 %v882
        %v961 = vunpack.c.h.bf16 %v882
        %v962 = vunpack.c.l.bf16 %v883
        %v963 = vunpack.c.h.bf16 %v883
        %v964 = vunpack.c.l.bf16 %v884
        %v965 = vunpack.c.h.bf16 %v884
        %v966 = vunpack.c.l.bf16 %v885
        %v967 = vunpack.c.h.bf16 %v885
        %v968 = vunpack.c.l.bf16 %v886
        %v969 = vunpack.c.h.bf16 %v886
        %v970 = vunpack.c.l.bf16 %v887
        %v971 = vunpack.c.h.bf16 %v887
        %v972 = vunpack.c.l.bf16 %v888
        %v973 = vunpack.c.h.bf16 %v888
        %v974 = vunpack.c.l.bf16 %v889
        %v975 = vunpack.c.h.bf16 %v889
        %v976 = vunpack.c.l.bf16 %v890
        %v977 = vunpack.c.h.bf16 %v890
        %978 = vst.msk [vmem:[#allocation2 + $0x2] sm:$0xff] %vm891, %v946
        %979 = vst.msk [vmem:[#allocation2 + $0xa] sm:$0xff] %vm891, %v947
        %980 = vst.msk [vmem:[#allocation2 + $0x1a] sm:$0xff] %vm891, %v948
        %981 = vst.msk [vmem:[#allocation2 + $0x22] sm:$0xff] %vm891, %v949
        %982 = vst.msk [vmem:[#allocation2 + $0x32] sm:$0xff] %vm891, %v950
        %983 = vst.msk [vmem:[#allocation2 + $0x3a] sm:$0xff] %vm891, %v951
        %984 = vst.msk [vmem:[#allocation2 + $0x4a] sm:$0xff] %vm891, %v952
        %985 = vst.msk [vmem:[#allocation2 + $0x52] sm:$0xff] %vm891, %v953
        %986 = vst.msk [vmem:[#allocation2 + $0x62] sm:$0xff] %vm891, %v954
        %987 = vst.msk [vmem:[#allocation2 + $0x6a] sm:$0xff] %vm891, %v955
        %988 = vst.msk [vmem:[#allocation2 + $0x7a] sm:$0xff] %vm891, %v956
        %989 = vst.msk [vmem:[#allocation2 + $0x82] sm:$0xff] %vm891, %v957
        %990 = vst.msk [vmem:[#allocation2 + $0x92] sm:$0xff] %vm891, %v958
        %991 = vst.msk [vmem:[#allocation2 + $0x9a] sm:$0xff] %vm891, %v959
        %992 = vst.msk [vmem:[#allocation2 + $0xaa] sm:$0xff] %vm891, %v960
        %993 = vst.msk [vmem:[#allocation2 + $0xb2] sm:$0xff] %vm891, %v961
        %994 = vst.msk [vmem:[#allocation2 + $0xc2] sm:$0xff] %vm891, %v962
        %995 = vst.msk [vmem:[#allocation2 + $0xca] sm:$0xff] %vm891, %v963
        %996 = vst.msk [vmem:[#allocation2 + $0xda] sm:$0xff] %vm891, %v964
        %997 = vst.msk [vmem:[#allocation2 + $0xe2] sm:$0xff] %vm891, %v965
        %998 = vst.msk [vmem:[#allocation2 + $0xf2] sm:$0xff] %vm891, %v966
        %999 = vst.msk [vmem:[#allocation2 + $0xfa] sm:$0xff] %vm891, %v967
        %1000 = vst.msk [vmem:[#allocation2 + $0x10a] sm:$0xff] %vm891, %v968
        %1001 = vst.msk [vmem:[#allocation2 + $0x112] sm:$0xff] %vm891, %v969
        %1002 = vst.msk [vmem:[#allocation2 + $0x122] sm:$0xff] %vm891, %v970
        %1003 = vst.msk [vmem:[#allocation2 + $0x12a] sm:$0xff] %vm891, %v971
        %1004 = vst.msk [vmem:[#allocation2 + $0x13a] sm:$0xff] %vm891, %v972
        %1005 = vst.msk [vmem:[#allocation2 + $0x142] sm:$0xff] %vm891, %v973
        %1006 = vst.msk [vmem:[#allocation2 + $0x152] sm:$0xff] %vm891, %v974
        %1007 = vst.msk [vmem:[#allocation2 + $0x15a] sm:$0xff] %vm891, %v975
        %1008 = vst.msk [vmem:[#allocation2 + $0x16a] sm:$0xff] %vm891, %v976
        %1009 = vst.msk [vmem:[#allocation2 + $0x172] sm:$0xff] %vm891, %v977
        %v1010 = vld [vmem:[#allocation2] sm:$0xff]
        %v1011 = vld [vmem:[#allocation2 + $0x8] sm:$0xff]
        %v1012 = vld [vmem:[#allocation2 + $0x18] sm:$0xff]
        %v1013 = vld [vmem:[#allocation2 + $0x20] sm:$0xff]
        %v1014 = vld [vmem:[#allocation2 + $0x30] sm:$0xff]
        %v1015 = vld [vmem:[#allocation2 + $0x38] sm:$0xff]
        %v1016 = vld [vmem:[#allocation2 + $0x48] sm:$0xff]
        %v1017 = vld [vmem:[#allocation2 + $0x50] sm:$0xff]
        %v1018 = vld [vmem:[#allocation2 + $0x60] sm:$0xff]
        %v1019 = vld [vmem:[#allocation2 + $0x68] sm:$0xff]
        %v1020 = vld [vmem:[#allocation2 + $0x78] sm:$0xff]
        %v1021 = vld [vmem:[#allocation2 + $0x80] sm:$0xff]
        %v1022 = vld [vmem:[#allocation2 + $0x90] sm:$0xff]
        %v1023 = vld [vmem:[#allocation2 + $0x98] sm:$0xff]
        %v1024 = vld [vmem:[#allocation2 + $0xa8] sm:$0xff]
        %v1025 = vld [vmem:[#allocation2 + $0xb0] sm:$0xff]
        %v1026 = vld [vmem:[#allocation2 + $0xc0] sm:$0xff]
        %v1027 = vld [vmem:[#allocation2 + $0xc8] sm:$0xff]
        %v1028 = vld [vmem:[#allocation2 + $0xd8] sm:$0xff]
        %v1029 = vld [vmem:[#allocation2 + $0xe0] sm:$0xff]
        %v1030 = vld [vmem:[#allocation2 + $0xf0] sm:$0xff]
        %v1031 = vld [vmem:[#allocation2 + $0xf8] sm:$0xff]
        %v1032 = vld [vmem:[#allocation2 + $0x108] sm:$0xff]
        %v1033 = vld [vmem:[#allocation2 + $0x110] sm:$0xff]
        %v1034 = vld [vmem:[#allocation2 + $0x120] sm:$0xff]
        %v1035 = vld [vmem:[#allocation2 + $0x128] sm:$0xff]
        %v1036 = vld [vmem:[#allocation2 + $0x138] sm:$0xff]
        %v1037 = vld [vmem:[#allocation2 + $0x140] sm:$0xff]
        %v1038 = vld [vmem:[#allocation2 + $0x150] sm:$0xff]
        %v1039 = vld [vmem:[#allocation2 + $0x158] sm:$0xff]
        %v1040 = vld [vmem:[#allocation2 + $0x168] sm:$0xff]
        %v1041 = vld [vmem:[#allocation2 + $0x170] sm:$0xff]
        %v1042 = vld [vmem:[#allocation2 + $0x1] sm:$0xff]
        %v1043 = vld [vmem:[#allocation2 + $0x9] sm:$0xff]
        %v1044 = vld [vmem:[#allocation2 + $0x19] sm:$0xff]
        %v1045 = vld [vmem:[#allocation2 + $0x21] sm:$0xff]
        %v1046 = vld [vmem:[#allocation2 + $0x31] sm:$0xff]
        %v1047 = vld [vmem:[#allocation2 + $0x39] sm:$0xff]
        %v1048 = vld [vmem:[#allocation2 + $0x49] sm:$0xff]
        %v1049 = vld [vmem:[#allocation2 + $0x51] sm:$0xff]
        %v1050 = vld [vmem:[#allocation2 + $0x61] sm:$0xff]
        %v1051 = vld [vmem:[#allocation2 + $0x69] sm:$0xff]
        %v1052 = vld [vmem:[#allocation2 + $0x79] sm:$0xff]
        %v1053 = vld [vmem:[#allocation2 + $0x81] sm:$0xff]
        %v1054 = vld [vmem:[#allocation2 + $0x91] sm:$0xff]
        %v1055 = vld [vmem:[#allocation2 + $0x99] sm:$0xff]
        %v1056 = vld [vmem:[#allocation2 + $0xa9] sm:$0xff]
        %v1057 = vld [vmem:[#allocation2 + $0xb1] sm:$0xff]
        %v1058 = vld [vmem:[#allocation2 + $0xc1] sm:$0xff]
        %v1059 = vld [vmem:[#allocation2 + $0xc9] sm:$0xff]
        %v1060 = vld [vmem:[#allocation2 + $0xd9] sm:$0xff]
        %v1061 = vld [vmem:[#allocation2 + $0xe1] sm:$0xff]
        %v1062 = vld [vmem:[#allocation2 + $0xf1] sm:$0xff]
        %v1063 = vld [vmem:[#allocation2 + $0xf9] sm:$0xff]
        %v1064 = vld [vmem:[#allocation2 + $0x109] sm:$0xff]
        %v1065 = vld [vmem:[#allocation2 + $0x111] sm:$0xff]
        %v1066 = vld [vmem:[#allocation2 + $0x121] sm:$0xff]
        %v1067 = vld [vmem:[#allocation2 + $0x129] sm:$0xff]
        %v1068 = vld [vmem:[#allocation2 + $0x139] sm:$0xff]
        %v1069 = vld [vmem:[#allocation2 + $0x141] sm:$0xff]
        %v1070 = vld [vmem:[#allocation2 + $0x151] sm:$0xff]
        %v1071 = vld [vmem:[#allocation2 + $0x159] sm:$0xff]
        %v1072 = vld [vmem:[#allocation2 + $0x169] sm:$0xff]
        %v1073 = vld [vmem:[#allocation2 + $0x171] sm:$0xff]
        %v1074 = vmax.f32 %v1010, %v1042
        %v1075 = vmax.f32 %v1011, %v1043
        %v1076 = vmax.f32 %v1012, %v1044
        %v1077 = vmax.f32 %v1013, %v1045
        %v1078 = vmax.f32 %v1014, %v1046
        %v1079 = vmax.f32 %v1015, %v1047
        %v1080 = vmax.f32 %v1016, %v1048
        %v1081 = vmax.f32 %v1017, %v1049
        %v1082 = vmax.f32 %v1018, %v1050
        %v1083 = vmax.f32 %v1019, %v1051
        %v1084 = vmax.f32 %v1020, %v1052
        %v1085 = vmax.f32 %v1021, %v1053
        %v1086 = vmax.f32 %v1022, %v1054
        %v1087 = vmax.f32 %v1023, %v1055
        %v1088 = vmax.f32 %v1024, %v1056
        %v1089 = vmax.f32 %v1025, %v1057
        %v1090 = vmax.f32 %v1026, %v1058
        %v1091 = vmax.f32 %v1027, %v1059
        %v1092 = vmax.f32 %v1028, %v1060
        %v1093 = vmax.f32 %v1029, %v1061
        %v1094 = vmax.f32 %v1030, %v1062
        %v1095 = vmax.f32 %v1031, %v1063
        %v1096 = vmax.f32 %v1032, %v1064
        %v1097 = vmax.f32 %v1033, %v1065
        %v1098 = vmax.f32 %v1034, %v1066
        %v1099 = vmax.f32 %v1035, %v1067
        %v1100 = vmax.f32 %v1036, %v1068
        %v1101 = vmax.f32 %v1037, %v1069
        %v1102 = vmax.f32 %v1038, %v1070
        %v1103 = vmax.f32 %v1039, %v1071
        %v1104 = vmax.f32 %v1040, %v1072
        %v1105 = vmax.f32 %v1041, %v1073
        %v1106 = vld [vmem:[#allocation2 + $0x2] sm:$0xff]
        %v1107 = vld [vmem:[#allocation2 + $0xa] sm:$0xff]
        %v1108 = vld [vmem:[#allocation2 + $0x1a] sm:$0xff]
        %v1109 = vld [vmem:[#allocation2 + $0x22] sm:$0xff]
        %v1110 = vld [vmem:[#allocation2 + $0x32] sm:$0xff]
        %v1111 = vld [vmem:[#allocation2 + $0x3a] sm:$0xff]
        %v1112 = vld [vmem:[#allocation2 + $0x4a] sm:$0xff]
        %v1113 = vld [vmem:[#allocation2 + $0x52] sm:$0xff]
        %v1114 = vld [vmem:[#allocation2 + $0x62] sm:$0xff]
        %v1115 = vld [vmem:[#allocation2 + $0x6a] sm:$0xff]
        %v1116 = vld [vmem:[#allocation2 + $0x7a] sm:$0xff]
        %v1117 = vld [vmem:[#allocation2 + $0x82] sm:$0xff]
        %v1118 = vld [vmem:[#allocation2 + $0x92] sm:$0xff]
        %v1119 = vld [vmem:[#allocation2 + $0x9a] sm:$0xff]
        %v1120 = vld [vmem:[#allocation2 + $0xaa] sm:$0xff]
        %v1121 = vld [vmem:[#allocation2 + $0xb2] sm:$0xff]
        %v1122 = vld [vmem:[#allocation2 + $0xc2] sm:$0xff]
        %v1123 = vld [vmem:[#allocation2 + $0xca] sm:$0xff]
        %v1124 = vld [vmem:[#allocation2 + $0xda] sm:$0xff]
        %v1125 = vld [vmem:[#allocation2 + $0xe2] sm:$0xff]
        %v1126 = vld [vmem:[#allocation2 + $0xf2] sm:$0xff]
        %v1127 = vld [vmem:[#allocation2 + $0xfa] sm:$0xff]
        %v1128 = vld [vmem:[#allocation2 + $0x10a] sm:$0xff]
        %v1129 = vld [vmem:[#allocation2 + $0x112] sm:$0xff]
        %v1130 = vld [vmem:[#allocation2 + $0x122] sm:$0xff]
        %v1131 = vld [vmem:[#allocation2 + $0x12a] sm:$0xff]
        %v1132 = vld [vmem:[#allocation2 + $0x13a] sm:$0xff]
        %v1133 = vld [vmem:[#allocation2 + $0x142] sm:$0xff]
        %v1134 = vld [vmem:[#allocation2 + $0x152] sm:$0xff]
        %v1135 = vld [vmem:[#allocation2 + $0x15a] sm:$0xff]
        %v1136 = vld [vmem:[#allocation2 + $0x16a] sm:$0xff]
        %v1137 = vld [vmem:[#allocation2 + $0x172] sm:$0xff]
        %v1138 = vmax.f32 %v1074, %v1106
        %v1139 = vmax.f32 %v1075, %v1107
        %v1140 = vmax.f32 %v1076, %v1108
        %v1141 = vmax.f32 %v1077, %v1109
        %v1142 = vmax.f32 %v1078, %v1110
        %v1143 = vmax.f32 %v1079, %v1111
        %v1144 = vmax.f32 %v1080, %v1112
        %v1145 = vmax.f32 %v1081, %v1113
        %v1146 = vmax.f32 %v1082, %v1114
        %v1147 = vmax.f32 %v1083, %v1115
        %v1148 = vmax.f32 %v1084, %v1116
        %v1149 = vmax.f32 %v1085, %v1117
        %v1150 = vmax.f32 %v1086, %v1118
        %v1151 = vmax.f32 %v1087, %v1119
        %v1152 = vmax.f32 %v1088, %v1120
        %v1153 = vmax.f32 %v1089, %v1121
        %v1154 = vmax.f32 %v1090, %v1122
        %v1155 = vmax.f32 %v1091, %v1123
        %v1156 = vmax.f32 %v1092, %v1124
        %v1157 = vmax.f32 %v1093, %v1125
        %v1158 = vmax.f32 %v1094, %v1126
        %v1159 = vmax.f32 %v1095, %v1127
        %v1160 = vmax.f32 %v1096, %v1128
        %v1161 = vmax.f32 %v1097, %v1129
        %v1162 = vmax.f32 %v1098, %v1130
        %v1163 = vmax.f32 %v1099, %v1131
        %v1164 = vmax.f32 %v1100, %v1132
        %v1165 = vmax.f32 %v1101, %v1133
        %v1166 = vmax.f32 %v1102, %v1134
        %v1167 = vmax.f32 %v1103, %v1135
        %v1168 = vmax.f32 %v1104, %v1136
        %v1169 = vmax.f32 %v1105, %v1137
        %v1170 = vld [vmem:[#allocation2 + $0x3] sm:$0xff]
        %v1171 = vld [vmem:[#allocation2 + $0xb] sm:$0xff]
        %v1172 = vld [vmem:[#allocation2 + $0x1b] sm:$0xff]
        %v1173 = vld [vmem:[#allocation2 + $0x23] sm:$0xff]
        %v1174 = vld [vmem:[#allocation2 + $0x33] sm:$0xff]
        %v1175 = vld [vmem:[#allocation2 + $0x3b] sm:$0xff]
        %v1176 = vld [vmem:[#allocation2 + $0x4b] sm:$0xff]
        %v1177 = vld [vmem:[#allocation2 + $0x53] sm:$0xff]
        %v1178 = vld [vmem:[#allocation2 + $0x63] sm:$0xff]
        %v1179 = vld [vmem:[#allocation2 + $0x6b] sm:$0xff]
        %v1180 = vld [vmem:[#allocation2 + $0x7b] sm:$0xff]
        %v1181 = vld [vmem:[#allocation2 + $0x83] sm:$0xff]
        %v1182 = vld [vmem:[#allocation2 + $0x93] sm:$0xff]
        %v1183 = vld [vmem:[#allocation2 + $0x9b] sm:$0xff]
        %v1184 = vld [vmem:[#allocation2 + $0xab] sm:$0xff]
        %v1185 = vld [vmem:[#allocation2 + $0xb3] sm:$0xff]
        %v1186 = vld [vmem:[#allocation2 + $0xc3] sm:$0xff]
        %v1187 = vld [vmem:[#allocation2 + $0xcb] sm:$0xff]
        %v1188 = vld [vmem:[#allocation2 + $0xdb] sm:$0xff]
        %v1189 = vld [vmem:[#allocation2 + $0xe3] sm:$0xff]
        %v1190 = vld [vmem:[#allocation2 + $0xf3] sm:$0xff]
        %v1191 = vld [vmem:[#allocation2 + $0xfb] sm:$0xff]
        %v1192 = vld [vmem:[#allocation2 + $0x10b] sm:$0xff]
        %v1193 = vld [vmem:[#allocation2 + $0x113] sm:$0xff]
        %v1194 = vld [vmem:[#allocation2 + $0x123] sm:$0xff]
        %v1195 = vld [vmem:[#allocation2 + $0x12b] sm:$0xff]
        %v1196 = vld [vmem:[#allocation2 + $0x13b] sm:$0xff]
        %v1197 = vld [vmem:[#allocation2 + $0x143] sm:$0xff]
        %v1198 = vld [vmem:[#allocation2 + $0x153] sm:$0xff]
        %v1199 = vld [vmem:[#allocation2 + $0x15b] sm:$0xff]
        %v1200 = vld [vmem:[#allocation2 + $0x16b] sm:$0xff]
        %v1201 = vld [vmem:[#allocation2 + $0x173] sm:$0xff]
        %v1202 = vmax.f32 %v1138, %v1170
        %v1203 = vmax.f32 %v1139, %v1171
        %v1204 = vmax.f32 %v1140, %v1172
        %v1205 = vmax.f32 %v1141, %v1173
        %v1206 = vmax.f32 %v1142, %v1174
        %v1207 = vmax.f32 %v1143, %v1175
        %v1208 = vmax.f32 %v1144, %v1176
        %v1209 = vmax.f32 %v1145, %v1177
        %v1210 = vmax.f32 %v1146, %v1178
        %v1211 = vmax.f32 %v1147, %v1179
        %v1212 = vmax.f32 %v1148, %v1180
        %v1213 = vmax.f32 %v1149, %v1181
        %v1214 = vmax.f32 %v1150, %v1182
        %v1215 = vmax.f32 %v1151, %v1183
        %v1216 = vmax.f32 %v1152, %v1184
        %v1217 = vmax.f32 %v1153, %v1185
        %v1218 = vmax.f32 %v1154, %v1186
        %v1219 = vmax.f32 %v1155, %v1187
        %v1220 = vmax.f32 %v1156, %v1188
        %v1221 = vmax.f32 %v1157, %v1189
        %v1222 = vmax.f32 %v1158, %v1190
        %v1223 = vmax.f32 %v1159, %v1191
        %v1224 = vmax.f32 %v1160, %v1192
        %v1225 = vmax.f32 %v1161, %v1193
        %v1226 = vmax.f32 %v1162, %v1194
        %v1227 = vmax.f32 %v1163, %v1195
        %v1228 = vmax.f32 %v1164, %v1196
        %v1229 = vmax.f32 %v1165, %v1197
        %v1230 = vmax.f32 %v1166, %v1198
        %v1231 = vmax.f32 %v1167, %v1199
        %v1232 = vmax.f32 %v1168, %v1200
        %v1233 = vmax.f32 %v1169, %v1201
        %v1234 = vld [vmem:[#allocation2 + $0x4] sm:$0xff]
        %v1235 = vld [vmem:[#allocation2 + $0xc] sm:$0xff]
        %v1236 = vld [vmem:[#allocation2 + $0x1c] sm:$0xff]
        %v1237 = vld [vmem:[#allocation2 + $0x24] sm:$0xff]
        %v1238 = vld [vmem:[#allocation2 + $0x34] sm:$0xff]
        %v1239 = vld [vmem:[#allocation2 + $0x3c] sm:$0xff]
        %v1240 = vld [vmem:[#allocation2 + $0x4c] sm:$0xff]
        %v1241 = vld [vmem:[#allocation2 + $0x54] sm:$0xff]
        %v1242 = vld [vmem:[#allocation2 + $0x64] sm:$0xff]
        %v1243 = vld [vmem:[#allocation2 + $0x6c] sm:$0xff]
        %v1244 = vld [vmem:[#allocation2 + $0x7c] sm:$0xff]
        %v1245 = vld [vmem:[#allocation2 + $0x84] sm:$0xff]
        %v1246 = vld [vmem:[#allocation2 + $0x94] sm:$0xff]
        %v1247 = vld [vmem:[#allocation2 + $0x9c] sm:$0xff]
        %v1248 = vld [vmem:[#allocation2 + $0xac] sm:$0xff]
        %v1249 = vld [vmem:[#allocation2 + $0xb4] sm:$0xff]
        %v1250 = vld [vmem:[#allocation2 + $0xc4] sm:$0xff]
        %v1251 = vld [vmem:[#allocation2 + $0xcc] sm:$0xff]
        %v1252 = vld [vmem:[#allocation2 + $0xdc] sm:$0xff]
        %v1253 = vld [vmem:[#allocation2 + $0xe4] sm:$0xff]
        %v1254 = vld [vmem:[#allocation2 + $0xf4] sm:$0xff]
        %v1255 = vld [vmem:[#allocation2 + $0xfc] sm:$0xff]
        %v1256 = vld [vmem:[#allocation2 + $0x10c] sm:$0xff]
        %v1257 = vld [vmem:[#allocation2 + $0x114] sm:$0xff]
        %v1258 = vld [vmem:[#allocation2 + $0x124] sm:$0xff]
        %v1259 = vld [vmem:[#allocation2 + $0x12c] sm:$0xff]
        %v1260 = vld [vmem:[#allocation2 + $0x13c] sm:$0xff]
        %v1261 = vld [vmem:[#allocation2 + $0x144] sm:$0xff]
        %v1262 = vld [vmem:[#allocation2 + $0x154] sm:$0xff]
        %v1263 = vld [vmem:[#allocation2 + $0x15c] sm:$0xff]
        %v1264 = vld [vmem:[#allocation2 + $0x16c] sm:$0xff]
        %v1265 = vld [vmem:[#allocation2 + $0x174] sm:$0xff]
        %v1266 = vmax.f32 %v1202, %v1234
        %v1267 = vmax.f32 %v1203, %v1235
        %v1268 = vmax.f32 %v1204, %v1236
        %v1269 = vmax.f32 %v1205, %v1237
        %v1270 = vmax.f32 %v1206, %v1238
        %v1271 = vmax.f32 %v1207, %v1239
        %v1272 = vmax.f32 %v1208, %v1240
        %v1273 = vmax.f32 %v1209, %v1241
        %v1274 = vmax.f32 %v1210, %v1242
        %v1275 = vmax.f32 %v1211, %v1243
        %v1276 = vmax.f32 %v1212, %v1244
        %v1277 = vmax.f32 %v1213, %v1245
        %v1278 = vmax.f32 %v1214, %v1246
        %v1279 = vmax.f32 %v1215, %v1247
        %v1280 = vmax.f32 %v1216, %v1248
        %v1281 = vmax.f32 %v1217, %v1249
        %v1282 = vmax.f32 %v1218, %v1250
        %v1283 = vmax.f32 %v1219, %v1251
        %v1284 = vmax.f32 %v1220, %v1252
        %v1285 = vmax.f32 %v1221, %v1253
        %v1286 = vmax.f32 %v1222, %v1254
        %v1287 = vmax.f32 %v1223, %v1255
        %v1288 = vmax.f32 %v1224, %v1256
        %v1289 = vmax.f32 %v1225, %v1257
        %v1290 = vmax.f32 %v1226, %v1258
        %v1291 = vmax.f32 %v1227, %v1259
        %v1292 = vmax.f32 %v1228, %v1260
        %v1293 = vmax.f32 %v1229, %v1261
        %v1294 = vmax.f32 %v1230, %v1262
        %v1295 = vmax.f32 %v1231, %v1263
        %v1296 = vmax.f32 %v1232, %v1264
        %v1297 = vmax.f32 %v1233, %v1265
        %v1298 = vpack.c.bf16 %v1267, %v1266
        %v1299 = vpack.c.bf16 %v1269, %v1268
        %v1300 = vpack.c.bf16 %v1271, %v1270
        %v1301 = vpack.c.bf16 %v1273, %v1272
        %v1302 = vpack.c.bf16 %v1275, %v1274
        %v1303 = vpack.c.bf16 %v1277, %v1276
        %v1304 = vpack.c.bf16 %v1279, %v1278
        %v1305 = vpack.c.bf16 %v1281, %v1280
        %v1306 = vpack.c.bf16 %v1283, %v1282
        %v1307 = vpack.c.bf16 %v1285, %v1284
        %v1308 = vpack.c.bf16 %v1287, %v1286
        %v1309 = vpack.c.bf16 %v1289, %v1288
        %v1310 = vpack.c.bf16 %v1291, %v1290
        %v1311 = vpack.c.bf16 %v1293, %v1292
        %v1312 = vpack.c.bf16 %v1295, %v1294
        %v1313 = vpack.c.bf16 %v1297, %v1296
        %s1314 = scalar_lea.vmem [#allocation3], 16
        %1315 = vst.msk [vmem:[%s1314] sm:$0xff] %vm891, %v1298
        %1316 = vst.msk [vmem:[%s1314 + $0x8] sm:$0xff] %vm891, %v1299
        %1317 = vst.msk [vmem:[%s1314 + $0x10] sm:$0xff] %vm891, %v1300
        %1318 = vst.msk [vmem:[%s1314 + $0x18] sm:$0xff] %vm891, %v1301
        %1319 = vst.msk [vmem:[%s1314 + $0x20] sm:$0xff] %vm891, %v1302
        %1320 = vst.msk [vmem:[%s1314 + $0x28] sm:$0xff] %vm891, %v1303
        %1321 = vst.msk [vmem:[%s1314 + $0x30] sm:$0xff] %vm891, %v1304
        %1322 = vst.msk [vmem:[%s1314 + $0x38] sm:$0xff] %vm891, %v1305
        %1323 = vst.msk [vmem:[%s1314 + $0x40] sm:$0xff] %vm891, %v1306
        %1324 = vst.msk [vmem:[%s1314 + $0x48] sm:$0xff] %vm891, %v1307
        %1325 = vst.msk [vmem:[%s1314 + $0x50] sm:$0xff] %vm891, %v1308
        %1326 = vst.msk [vmem:[%s1314 + $0x58] sm:$0xff] %vm891, %v1309
        %1327 = vst.msk [vmem:[%s1314 + $0x60] sm:$0xff] %vm891, %v1310
        %1328 = vst.msk [vmem:[%s1314 + $0x68] sm:$0xff] %vm891, %v1311
        %1329 = vst.msk [vmem:[%s1314 + $0x70] sm:$0xff] %vm891, %v1312
        %1330 = vst.msk [vmem:[%s1314 + $0x78] sm:$0xff] %vm891, %v1313
        %v1331 = vld [vmem:[#allocation3] sm:$0xff]
        %v1332 = vld [vmem:[#allocation3 + $0x8] sm:$0xff]
        %v1333 = vld [vmem:[#allocation3 + $0x10] sm:$0xff]
        %v1334 = vld [vmem:[#allocation3 + $0x18] sm:$0xff]
        %v1335 = vld [vmem:[#allocation3 + $0x20] sm:$0xff]
        %v1336 = vld [vmem:[#allocation3 + $0x28] sm:$0xff]
        %v1337 = vld [vmem:[#allocation3 + $0x30] sm:$0xff]
        %v1338 = vld [vmem:[#allocation3 + $0x38] sm:$0xff]
        %v1339 = vld [vmem:[#allocation3 + $0x40] sm:$0xff]
        %v1340 = vld [vmem:[#allocation3 + $0x48] sm:$0xff]
        %v1341 = vld [vmem:[#allocation3 + $0x50] sm:$0xff]
        %v1342 = vld [vmem:[#allocation3 + $0x58] sm:$0xff]
        %v1343 = vld [vmem:[#allocation3 + $0x60] sm:$0xff]
        %v1344 = vld [vmem:[#allocation3 + $0x68] sm:$0xff]
        %v1345 = vld [vmem:[#allocation3 + $0x70] sm:$0xff]
        %v1346 = vld [vmem:[#allocation3 + $0x78] sm:$0xff]
        %s1347 = scalar_lea.vmem [#allocation3], 8
        %v1348 = vld [vmem:[%s1347] sm:$0xff]
        %v1349 = vld [vmem:[%s1347 + $0x8] sm:$0xff]
        %v1350 = vld [vmem:[%s1347 + $0x10] sm:$0xff]
        %v1351 = vld [vmem:[%s1347 + $0x18] sm:$0xff]
        %v1352 = vld [vmem:[%s1347 + $0x20] sm:$0xff]
        %v1353 = vld [vmem:[%s1347 + $0x28] sm:$0xff]
        %v1354 = vld [vmem:[%s1347 + $0x30] sm:$0xff]
        %v1355 = vld [vmem:[%s1347 + $0x38] sm:$0xff]
        %v1356 = vld [vmem:[%s1347 + $0x40] sm:$0xff]
        %v1357 = vld [vmem:[%s1347 + $0x48] sm:$0xff]
        %v1358 = vld [vmem:[%s1347 + $0x50] sm:$0xff]
        %v1359 = vld [vmem:[%s1347 + $0x58] sm:$0xff]
        %v1360 = vld [vmem:[%s1347 + $0x60] sm:$0xff]
        %v1361 = vld [vmem:[%s1347 + $0x68] sm:$0xff]
        %v1362 = vld [vmem:[%s1347 + $0x70] sm:$0xff]
        %v1363 = vld [vmem:[%s1347 + $0x78] sm:$0xff]
        %v1364 = vmax.bf16 %v1331, %v1348
        %v1365 = vmax.bf16 %v1332, %v1349
        %v1366 = vmax.bf16 %v1333, %v1350
        %v1367 = vmax.bf16 %v1334, %v1351
        %v1368 = vmax.bf16 %v1335, %v1352
        %v1369 = vmax.bf16 %v1336, %v1353
        %v1370 = vmax.bf16 %v1337, %v1354
        %v1371 = vmax.bf16 %v1338, %v1355
        %v1372 = vmax.bf16 %v1339, %v1356
        %v1373 = vmax.bf16 %v1340, %v1357
        %v1374 = vmax.bf16 %v1341, %v1358
        %v1375 = vmax.bf16 %v1342, %v1359
        %v1376 = vmax.bf16 %v1343, %v1360
        %v1377 = vmax.bf16 %v1344, %v1361
        %v1378 = vmax.bf16 %v1345, %v1362
        %v1379 = vmax.bf16 %v1346, %v1363
        %v1380 = vld [vmem:[%s1314] sm:$0xff]
        %v1381 = vld [vmem:[%s1314 + $0x8] sm:$0xff]
        %v1382 = vld [vmem:[%s1314 + $0x10] sm:$0xff]
        %v1383 = vld [vmem:[%s1314 + $0x18] sm:$0xff]
        %v1384 = vld [vmem:[%s1314 + $0x20] sm:$0xff]
        %v1385 = vld [vmem:[%s1314 + $0x28] sm:$0xff]
        %v1386 = vld [vmem:[%s1314 + $0x30] sm:$0xff]
        %v1387 = vld [vmem:[%s1314 + $0x38] sm:$0xff]
        %v1388 = vld [vmem:[%s1314 + $0x40] sm:$0xff]
        %v1389 = vld [vmem:[%s1314 + $0x48] sm:$0xff]
        %v1390 = vld [vmem:[%s1314 + $0x50] sm:$0xff]
        %v1391 = vld [vmem:[%s1314 + $0x58] sm:$0xff]
        %v1392 = vld [vmem:[%s1314 + $0x60] sm:$0xff]
        %v1393 = vld [vmem:[%s1314 + $0x68] sm:$0xff]
        %v1394 = vld [vmem:[%s1314 + $0x70] sm:$0xff]
        %v1395 = vld [vmem:[%s1314 + $0x78] sm:$0xff]
        %v1396 = vmax.bf16 %v1364, %v1380
        %v1397 = vmax.bf16 %v1365, %v1381
        %v1398 = vmax.bf16 %v1366, %v1382
        %v1399 = vmax.bf16 %v1367, %v1383
        %v1400 = vmax.bf16 %v1368, %v1384
        %v1401 = vmax.bf16 %v1369, %v1385
        %v1402 = vmax.bf16 %v1370, %v1386
        %v1403 = vmax.bf16 %v1371, %v1387
        %v1404 = vmax.bf16 %v1372, %v1388
        %v1405 = vmax.bf16 %v1373, %v1389
        %v1406 = vmax.bf16 %v1374, %v1390
        %v1407 = vmax.bf16 %v1375, %v1391
        %v1408 = vmax.bf16 %v1376, %v1392
        %v1409 = vmax.bf16 %v1377, %v1393
        %v1410 = vmax.bf16 %v1378, %v1394
        %v1411 = vmax.bf16 %v1379, %v1395
        %s1412 = scalar_lea.vmem [#allocation3], 24
        %v1413 = vld [vmem:[%s1412] sm:$0xff]
        %v1414 = vld [vmem:[%s1412 + $0x8] sm:$0xff]
        %v1415 = vld [vmem:[%s1412 + $0x10] sm:$0xff]
        %v1416 = vld [vmem:[%s1412 + $0x18] sm:$0xff]
        %v1417 = vld [vmem:[%s1412 + $0x20] sm:$0xff]
        %v1418 = vld [vmem:[%s1412 + $0x28] sm:$0xff]
        %v1419 = vld [vmem:[%s1412 + $0x30] sm:$0xff]
        %v1420 = vld [vmem:[%s1412 + $0x38] sm:$0xff]
        %v1421 = vld [vmem:[%s1412 + $0x40] sm:$0xff]
        %v1422 = vld [vmem:[%s1412 + $0x48] sm:$0xff]
        %v1423 = vld [vmem:[%s1412 + $0x50] sm:$0xff]
        %v1424 = vld [vmem:[%s1412 + $0x58] sm:$0xff]
        %v1425 = vld [vmem:[%s1412 + $0x60] sm:$0xff]
        %v1426 = vld [vmem:[%s1412 + $0x68] sm:$0xff]
        %v1427 = vld [vmem:[%s1412 + $0x70] sm:$0xff]
        %v1428 = vld [vmem:[%s1412 + $0x78] sm:$0xff]
        %v1429 = vmax.bf16 %v1396, %v1413
        %v1430 = vmax.bf16 %v1397, %v1414
        %v1431 = vmax.bf16 %v1398, %v1415
        %v1432 = vmax.bf16 %v1399, %v1416
        %v1433 = vmax.bf16 %v1400, %v1417
        %v1434 = vmax.bf16 %v1401, %v1418
        %v1435 = vmax.bf16 %v1402, %v1419
        %v1436 = vmax.bf16 %v1403, %v1420
        %v1437 = vmax.bf16 %v1404, %v1421
        %v1438 = vmax.bf16 %v1405, %v1422
        %v1439 = vmax.bf16 %v1406, %v1423
        %v1440 = vmax.bf16 %v1407, %v1424
        %v1441 = vmax.bf16 %v1408, %v1425
        %v1442 = vmax.bf16 %v1409, %v1426
        %v1443 = vmax.bf16 %v1410, %v1427
        %v1444 = vmax.bf16 %v1411, %v1428
        %s1445 = scalar_lea.vmem [#allocation3], 32
        %v1446 = vld [vmem:[%s1445] sm:$0xff]
        %v1447 = vld [vmem:[%s1445 + $0x8] sm:$0xff]
        %v1448 = vld [vmem:[%s1445 + $0x10] sm:$0xff]
        %v1449 = vld [vmem:[%s1445 + $0x18] sm:$0xff]
        %v1450 = vld [vmem:[%s1445 + $0x20] sm:$0xff]
        %v1451 = vld [vmem:[%s1445 + $0x28] sm:$0xff]
        %v1452 = vld [vmem:[%s1445 + $0x30] sm:$0xff]
        %v1453 = vld [vmem:[%s1445 + $0x38] sm:$0xff]
        %v1454 = vld [vmem:[%s1445 + $0x40] sm:$0xff]
        %v1455 = vld [vmem:[%s1445 + $0x48] sm:$0xff]
        %v1456 = vld [vmem:[%s1445 + $0x50] sm:$0xff]
        %v1457 = vld [vmem:[%s1445 + $0x58] sm:$0xff]
        %v1458 = vld [vmem:[%s1445 + $0x60] sm:$0xff]
        %v1459 = vld [vmem:[%s1445 + $0x68] sm:$0xff]
        %v1460 = vld [vmem:[%s1445 + $0x70] sm:$0xff]
        %v1461 = vld [vmem:[%s1445 + $0x78] sm:$0xff]
        %v1462 = vmax.bf16 %v1429, %v1446
        %v1463 = vmax.bf16 %v1430, %v1447
        %v1464 = vmax.bf16 %v1431, %v1448
        %v1465 = vmax.bf16 %v1432, %v1449
        %v1466 = vmax.bf16 %v1433, %v1450
        %v1467 = vmax.bf16 %v1434, %v1451
        %v1468 = vmax.bf16 %v1435, %v1452
        %v1469 = vmax.bf16 %v1436, %v1453
        %v1470 = vmax.bf16 %v1437, %v1454
        %v1471 = vmax.bf16 %v1438, %v1455
        %v1472 = vmax.bf16 %v1439, %v1456
        %v1473 = vmax.bf16 %v1440, %v1457
        %v1474 = vmax.bf16 %v1441, %v1458
        %v1475 = vmax.bf16 %v1442, %v1459
        %v1476 = vmax.bf16 %v1443, %v1460
        %v1477 = vmax.bf16 %v1444, %v1461
        %1494 = vrot.lane.b32.xlu0 %v1462, 16
        %v1495 = vpop.permute.xlu0 %1494
        %1496 = vrot.lane.b32.xlu0 %v1463, 16
        %v1497 = vpop.permute.xlu0 %1496
        %1498 = vrot.lane.b32.xlu0 %v1464, 16
        %v1499 = vpop.permute.xlu0 %1498
        %1500 = vrot.lane.b32.xlu0 %v1465, 16
        %v1501 = vpop.permute.xlu0 %1500
        %1502 = vrot.lane.b32.xlu0 %v1466, 16
        %v1503 = vpop.permute.xlu0 %1502
        %1504 = vrot.lane.b32.xlu0 %v1467, 16
        %v1505 = vpop.permute.xlu0 %1504
        %1506 = vrot.lane.b32.xlu0 %v1468, 16
        %v1507 = vpop.permute.xlu0 %1506
        %1508 = vrot.lane.b32.xlu0 %v1469, 16
        %v1509 = vpop.permute.xlu0 %1508
        %1510 = vrot.lane.b32.xlu0 %v1470, 16
        %v1511 = vpop.permute.xlu0 %1510
        %1512 = vrot.lane.b32.xlu0 %v1471, 16
        %v1513 = vpop.permute.xlu0 %1512
        %1514 = vrot.lane.b32.xlu0 %v1472, 16
        %v1515 = vpop.permute.xlu0 %1514
        %1516 = vrot.lane.b32.xlu0 %v1473, 16
        %v1517 = vpop.permute.xlu0 %1516
        %1518 = vrot.lane.b32.xlu0 %v1474, 16
        %v1519 = vpop.permute.xlu0 %1518
        %1520 = vrot.lane.b32.xlu0 %v1475, 16
        %v1521 = vpop.permute.xlu0 %1520
        %1522 = vrot.lane.b32.xlu0 %v1476, 16
        %v1523 = vpop.permute.xlu0 %1522
        %1524 = vrot.lane.b32.xlu0 %v1477, 16
        %v1525 = vpop.permute.xlu0 %1524
        %vm1542 = vcmask 261248
        %1543 = vst.msk [vmem:[#allocation4] sm:$0xff] %vm1542, %v1495
        %1544 = vst.msk [vmem:[#allocation4 + $0x8] sm:$0xff] %vm1542, %v1497
        %1545 = vst.msk [vmem:[#allocation4 + $0x10] sm:$0xff] %vm1542, %v1499
        %1546 = vst.msk [vmem:[#allocation4 + $0x18] sm:$0xff] %vm1542, %v1501
        %1547 = vst.msk [vmem:[#allocation4 + $0x20] sm:$0xff] %vm1542, %v1503
        %1548 = vst.msk [vmem:[#allocation4 + $0x28] sm:$0xff] %vm1542, %v1505
        %1549 = vst.msk [vmem:[#allocation4 + $0x30] sm:$0xff] %vm1542, %v1507
        %1550 = vst.msk [vmem:[#allocation4 + $0x38] sm:$0xff] %vm1542, %v1509
        %1551 = vst.msk [vmem:[#allocation4 + $0x40] sm:$0xff] %vm1542, %v1511
        %1552 = vst.msk [vmem:[#allocation4 + $0x48] sm:$0xff] %vm1542, %v1513
        %1553 = vst.msk [vmem:[#allocation4 + $0x50] sm:$0xff] %vm1542, %v1515
        %1554 = vst.msk [vmem:[#allocation4 + $0x58] sm:$0xff] %vm1542, %v1517
        %1555 = vst.msk [vmem:[#allocation4 + $0x60] sm:$0xff] %vm1542, %v1519
        %1556 = vst.msk [vmem:[#allocation4 + $0x68] sm:$0xff] %vm1542, %v1521
        %1557 = vst.msk [vmem:[#allocation4 + $0x70] sm:$0xff] %vm1542, %v1523
        %1558 = vst.msk [vmem:[#allocation4 + $0x78] sm:$0xff] %vm1542, %v1525
        %v1559 = vunpack.c.l.bf16 %v1462
        %v1560 = vunpack.c.h.bf16 %v1462
        %v1561 = vunpack.c.l.bf16 %v1463
        %v1562 = vunpack.c.h.bf16 %v1463
        %v1563 = vunpack.c.l.bf16 %v1464
        %v1564 = vunpack.c.h.bf16 %v1464
        %v1565 = vunpack.c.l.bf16 %v1465
        %v1566 = vunpack.c.h.bf16 %v1465
        %v1567 = vunpack.c.l.bf16 %v1466
        %v1568 = vunpack.c.h.bf16 %v1466
        %v1569 = vunpack.c.l.bf16 %v1467
        %v1570 = vunpack.c.h.bf16 %v1467
        %v1571 = vunpack.c.l.bf16 %v1468
        %v1572 = vunpack.c.h.bf16 %v1468
        %v1573 = vunpack.c.l.bf16 %v1469
        %v1574 = vunpack.c.h.bf16 %v1469
        %v1575 = vunpack.c.l.bf16 %v1470
        %v1576 = vunpack.c.h.bf16 %v1470
        %v1577 = vunpack.c.l.bf16 %v1471
        %v1578 = vunpack.c.h.bf16 %v1471
        %v1579 = vunpack.c.l.bf16 %v1472
        %v1580 = vunpack.c.h.bf16 %v1472
        %v1581 = vunpack.c.l.bf16 %v1473
        %v1582 = vunpack.c.h.bf16 %v1473
        %v1583 = vunpack.c.l.bf16 %v1474
        %v1584 = vunpack.c.h.bf16 %v1474
        %v1585 = vunpack.c.l.bf16 %v1475
        %v1586 = vunpack.c.h.bf16 %v1475
        %v1587 = vunpack.c.l.bf16 %v1476
        %v1588 = vunpack.c.h.bf16 %v1476
        %v1589 = vunpack.c.l.bf16 %v1477
        %v1590 = vunpack.c.h.bf16 %v1477
        %1591 = vst.msk [vmem:[#allocation2 + $0x2] sm:$0xff] %vm891, %v1559
        %1592 = vst.msk [vmem:[#allocation2 + $0xa] sm:$0xff] %vm891, %v1560
        %1593 = vst.msk [vmem:[#allocation2 + $0x1a] sm:$0xff] %vm891, %v1561
        %1594 = vst.msk [vmem:[#allocation2 + $0x22] sm:$0xff] %vm891, %v1562
        %1595 = vst.msk [vmem:[#allocation2 + $0x32] sm:$0xff] %vm891, %v1563
        %1596 = vst.msk [vmem:[#allocation2 + $0x3a] sm:$0xff] %vm891, %v1564
        %1597 = vst.msk [vmem:[#allocation2 + $0x4a] sm:$0xff] %vm891, %v1565
        %1598 = vst.msk [vmem:[#allocation2 + $0x52] sm:$0xff] %vm891, %v1566
        %1599 = vst.msk [vmem:[#allocation2 + $0x62] sm:$0xff] %vm891, %v1567
        %1600 = vst.msk [vmem:[#allocation2 + $0x6a] sm:$0xff] %vm891, %v1568
        %1601 = vst.msk [vmem:[#allocation2 + $0x7a] sm:$0xff] %vm891, %v1569
        %1602 = vst.msk [vmem:[#allocation2 + $0x82] sm:$0xff] %vm891, %v1570
        %1603 = vst.msk [vmem:[#allocation2 + $0x92] sm:$0xff] %vm891, %v1571
        %1604 = vst.msk [vmem:[#allocation2 + $0x9a] sm:$0xff] %vm891, %v1572
        %1605 = vst.msk [vmem:[#allocation2 + $0xaa] sm:$0xff] %vm891, %v1573
        %1606 = vst.msk [vmem:[#allocation2 + $0xb2] sm:$0xff] %vm891, %v1574
        %1607 = vst.msk [vmem:[#allocation2 + $0xc2] sm:$0xff] %vm891, %v1575
        %1608 = vst.msk [vmem:[#allocation2 + $0xca] sm:$0xff] %vm891, %v1576
        %1609 = vst.msk [vmem:[#allocation2 + $0xda] sm:$0xff] %vm891, %v1577
        %1610 = vst.msk [vmem:[#allocation2 + $0xe2] sm:$0xff] %vm891, %v1578
        %1611 = vst.msk [vmem:[#allocation2 + $0xf2] sm:$0xff] %vm891, %v1579
        %1612 = vst.msk [vmem:[#allocation2 + $0xfa] sm:$0xff] %vm891, %v1580
        %1613 = vst.msk [vmem:[#allocation2 + $0x10a] sm:$0xff] %vm891, %v1581
        %1614 = vst.msk [vmem:[#allocation2 + $0x112] sm:$0xff] %vm891, %v1582
        %1615 = vst.msk [vmem:[#allocation2 + $0x122] sm:$0xff] %vm891, %v1583
        %1616 = vst.msk [vmem:[#allocation2 + $0x12a] sm:$0xff] %vm891, %v1584
        %1617 = vst.msk [vmem:[#allocation2 + $0x13a] sm:$0xff] %vm891, %v1585
        %1618 = vst.msk [vmem:[#allocation2 + $0x142] sm:$0xff] %vm891, %v1586
        %1619 = vst.msk [vmem:[#allocation2 + $0x152] sm:$0xff] %vm891, %v1587
        %1620 = vst.msk [vmem:[#allocation2 + $0x15a] sm:$0xff] %vm891, %v1588
        %1621 = vst.msk [vmem:[#allocation2 + $0x16a] sm:$0xff] %vm891, %v1589
        %1622 = vst.msk [vmem:[#allocation2 + $0x172] sm:$0xff] %vm891, %v1590
        %v1623 = vld [vmem:[#allocation2] sm:$0xff]
        %v1624 = vld [vmem:[#allocation2 + $0x8] sm:$0xff]
        %v1625 = vld [vmem:[#allocation2 + $0x18] sm:$0xff]
        %v1626 = vld [vmem:[#allocation2 + $0x20] sm:$0xff]
        %v1627 = vld [vmem:[#allocation2 + $0x30] sm:$0xff]
        %v1628 = vld [vmem:[#allocation2 + $0x38] sm:$0xff]
        %v1629 = vld [vmem:[#allocation2 + $0x48] sm:$0xff]
        %v1630 = vld [vmem:[#allocation2 + $0x50] sm:$0xff]
        %v1631 = vld [vmem:[#allocation2 + $0x60] sm:$0xff]
        %v1632 = vld [vmem:[#allocation2 + $0x68] sm:$0xff]
        %v1633 = vld [vmem:[#allocation2 + $0x78] sm:$0xff]
        %v1634 = vld [vmem:[#allocation2 + $0x80] sm:$0xff]
        %v1635 = vld [vmem:[#allocation2 + $0x90] sm:$0xff]
        %v1636 = vld [vmem:[#allocation2 + $0x98] sm:$0xff]
        %v1637 = vld [vmem:[#allocation2 + $0xa8] sm:$0xff]
        %v1638 = vld [vmem:[#allocation2 + $0xb0] sm:$0xff]
        %v1639 = vld [vmem:[#allocation2 + $0xc0] sm:$0xff]
        %v1640 = vld [vmem:[#allocation2 + $0xc8] sm:$0xff]
        %v1641 = vld [vmem:[#allocation2 + $0xd8] sm:$0xff]
        %v1642 = vld [vmem:[#allocation2 + $0xe0] sm:$0xff]
        %v1643 = vld [vmem:[#allocation2 + $0xf0] sm:$0xff]
        %v1644 = vld [vmem:[#allocation2 + $0xf8] sm:$0xff]
        %v1645 = vld [vmem:[#allocation2 + $0x108] sm:$0xff]
        %v1646 = vld [vmem:[#allocation2 + $0x110] sm:$0xff]
        %v1647 = vld [vmem:[#allocation2 + $0x120] sm:$0xff]
        %v1648 = vld [vmem:[#allocation2 + $0x128] sm:$0xff]
        %v1649 = vld [vmem:[#allocation2 + $0x138] sm:$0xff]
        %v1650 = vld [vmem:[#allocation2 + $0x140] sm:$0xff]
        %v1651 = vld [vmem:[#allocation2 + $0x150] sm:$0xff]
        %v1652 = vld [vmem:[#allocation2 + $0x158] sm:$0xff]
        %v1653 = vld [vmem:[#allocation2 + $0x168] sm:$0xff]
        %v1654 = vld [vmem:[#allocation2 + $0x170] sm:$0xff]
        %v1655 = vld [vmem:[#allocation2 + $0x1] sm:$0xff]
        %v1656 = vld [vmem:[#allocation2 + $0x9] sm:$0xff]
        %v1657 = vld [vmem:[#allocation2 + $0x19] sm:$0xff]
        %v1658 = vld [vmem:[#allocation2 + $0x21] sm:$0xff]
        %v1659 = vld [vmem:[#allocation2 + $0x31] sm:$0xff]
        %v1660 = vld [vmem:[#allocation2 + $0x39] sm:$0xff]
        %v1661 = vld [vmem:[#allocation2 + $0x49] sm:$0xff]
        %v1662 = vld [vmem:[#allocation2 + $0x51] sm:$0xff]
        %v1663 = vld [vmem:[#allocation2 + $0x61] sm:$0xff]
        %v1664 = vld [vmem:[#allocation2 + $0x69] sm:$0xff]
        %v1665 = vld [vmem:[#allocation2 + $0x79] sm:$0xff]
        %v1666 = vld [vmem:[#allocation2 + $0x81] sm:$0xff]
        %v1667 = vld [vmem:[#allocation2 + $0x91] sm:$0xff]
        %v1668 = vld [vmem:[#allocation2 + $0x99] sm:$0xff]
        %v1669 = vld [vmem:[#allocation2 + $0xa9] sm:$0xff]
        %v1670 = vld [vmem:[#allocation2 + $0xb1] sm:$0xff]
        %v1671 = vld [vmem:[#allocation2 + $0xc1] sm:$0xff]
        %v1672 = vld [vmem:[#allocation2 + $0xc9] sm:$0xff]
        %v1673 = vld [vmem:[#allocation2 + $0xd9] sm:$0xff]
        %v1674 = vld [vmem:[#allocation2 + $0xe1] sm:$0xff]
        %v1675 = vld [vmem:[#allocation2 + $0xf1] sm:$0xff]
        %v1676 = vld [vmem:[#allocation2 + $0xf9] sm:$0xff]
        %v1677 = vld [vmem:[#allocation2 + $0x109] sm:$0xff]
        %v1678 = vld [vmem:[#allocation2 + $0x111] sm:$0xff]
        %v1679 = vld [vmem:[#allocation2 + $0x121] sm:$0xff]
        %v1680 = vld [vmem:[#allocation2 + $0x129] sm:$0xff]
        %v1681 = vld [vmem:[#allocation2 + $0x139] sm:$0xff]
        %v1682 = vld [vmem:[#allocation2 + $0x141] sm:$0xff]
        %v1683 = vld [vmem:[#allocation2 + $0x151] sm:$0xff]
        %v1684 = vld [vmem:[#allocation2 + $0x159] sm:$0xff]
        %v1685 = vld [vmem:[#allocation2 + $0x169] sm:$0xff]
        %v1686 = vld [vmem:[#allocation2 + $0x171] sm:$0xff]
        %v1687 = vmax.f32 %v1623, %v1655
        %v1688 = vmax.f32 %v1624, %v1656
        %v1689 = vmax.f32 %v1625, %v1657
        %v1690 = vmax.f32 %v1626, %v1658
        %v1691 = vmax.f32 %v1627, %v1659
        %v1692 = vmax.f32 %v1628, %v1660
        %v1693 = vmax.f32 %v1629, %v1661
        %v1694 = vmax.f32 %v1630, %v1662
        %v1695 = vmax.f32 %v1631, %v1663
        %v1696 = vmax.f32 %v1632, %v1664
        %v1697 = vmax.f32 %v1633, %v1665
        %v1698 = vmax.f32 %v1634, %v1666
        %v1699 = vmax.f32 %v1635, %v1667
        %v1700 = vmax.f32 %v1636, %v1668
        %v1701 = vmax.f32 %v1637, %v1669
        %v1702 = vmax.f32 %v1638, %v1670
        %v1703 = vmax.f32 %v1639, %v1671
        %v1704 = vmax.f32 %v1640, %v1672
        %v1705 = vmax.f32 %v1641, %v1673
        %v1706 = vmax.f32 %v1642, %v1674
        %v1707 = vmax.f32 %v1643, %v1675
        %v1708 = vmax.f32 %v1644, %v1676
        %v1709 = vmax.f32 %v1645, %v1677
        %v1710 = vmax.f32 %v1646, %v1678
        %v1711 = vmax.f32 %v1647, %v1679
        %v1712 = vmax.f32 %v1648, %v1680
        %v1713 = vmax.f32 %v1649, %v1681
        %v1714 = vmax.f32 %v1650, %v1682
        %v1715 = vmax.f32 %v1651, %v1683
        %v1716 = vmax.f32 %v1652, %v1684
        %v1717 = vmax.f32 %v1653, %v1685
        %v1718 = vmax.f32 %v1654, %v1686
        %v1719 = vld [vmem:[#allocation2 + $0x2] sm:$0xff]
        %v1720 = vld [vmem:[#allocation2 + $0xa] sm:$0xff]
        %v1721 = vld [vmem:[#allocation2 + $0x1a] sm:$0xff]
        %v1722 = vld [vmem:[#allocation2 + $0x22] sm:$0xff]
        %v1723 = vld [vmem:[#allocation2 + $0x32] sm:$0xff]
        %v1724 = vld [vmem:[#allocation2 + $0x3a] sm:$0xff]
        %v1725 = vld [vmem:[#allocation2 + $0x4a] sm:$0xff]
        %v1726 = vld [vmem:[#allocation2 + $0x52] sm:$0xff]
        %v1727 = vld [vmem:[#allocation2 + $0x62] sm:$0xff]
        %v1728 = vld [vmem:[#allocation2 + $0x6a] sm:$0xff]
        %v1729 = vld [vmem:[#allocation2 + $0x7a] sm:$0xff]
        %v1730 = vld [vmem:[#allocation2 + $0x82] sm:$0xff]
        %v1731 = vld [vmem:[#allocation2 + $0x92] sm:$0xff]
        %v1732 = vld [vmem:[#allocation2 + $0x9a] sm:$0xff]
        %v1733 = vld [vmem:[#allocation2 + $0xaa] sm:$0xff]
        %v1734 = vld [vmem:[#allocation2 + $0xb2] sm:$0xff]
        %v1735 = vld [vmem:[#allocation2 + $0xc2] sm:$0xff]
        %v1736 = vld [vmem:[#allocation2 + $0xca] sm:$0xff]
        %v1737 = vld [vmem:[#allocation2 + $0xda] sm:$0xff]
        %v1738 = vld [vmem:[#allocation2 + $0xe2] sm:$0xff]
        %v1739 = vld [vmem:[#allocation2 + $0xf2] sm:$0xff]
        %v1740 = vld [vmem:[#allocation2 + $0xfa] sm:$0xff]
        %v1741 = vld [vmem:[#allocation2 + $0x10a] sm:$0xff]
        %v1742 = vld [vmem:[#allocation2 + $0x112] sm:$0xff]
        %v1743 = vld [vmem:[#allocation2 + $0x122] sm:$0xff]
        %v1744 = vld [vmem:[#allocation2 + $0x12a] sm:$0xff]
        %v1745 = vld [vmem:[#allocation2 + $0x13a] sm:$0xff]
        %v1746 = vld [vmem:[#allocation2 + $0x142] sm:$0xff]
        %v1747 = vld [vmem:[#allocation2 + $0x152] sm:$0xff]
        %v1748 = vld [vmem:[#allocation2 + $0x15a] sm:$0xff]
        %v1749 = vld [vmem:[#allocation2 + $0x16a] sm:$0xff]
        %v1750 = vld [vmem:[#allocation2 + $0x172] sm:$0xff]
        %v1751 = vmax.f32 %v1687, %v1719
        %v1752 = vmax.f32 %v1688, %v1720
        %v1753 = vmax.f32 %v1689, %v1721
        %v1754 = vmax.f32 %v1690, %v1722
        %v1755 = vmax.f32 %v1691, %v1723
        %v1756 = vmax.f32 %v1692, %v1724
        %v1757 = vmax.f32 %v1693, %v1725
        %v1758 = vmax.f32 %v1694, %v1726
        %v1759 = vmax.f32 %v1695, %v1727
        %v1760 = vmax.f32 %v1696, %v1728
        %v1761 = vmax.f32 %v1697, %v1729
        %v1762 = vmax.f32 %v1698, %v1730
        %v1763 = vmax.f32 %v1699, %v1731
        %v1764 = vmax.f32 %v1700, %v1732
        %v1765 = vmax.f32 %v1701, %v1733
        %v1766 = vmax.f32 %v1702, %v1734
        %v1767 = vmax.f32 %v1703, %v1735
        %v1768 = vmax.f32 %v1704, %v1736
        %v1769 = vmax.f32 %v1705, %v1737
        %v1770 = vmax.f32 %v1706, %v1738
        %v1771 = vmax.f32 %v1707, %v1739
        %v1772 = vmax.f32 %v1708, %v1740
        %v1773 = vmax.f32 %v1709, %v1741
        %v1774 = vmax.f32 %v1710, %v1742
        %v1775 = vmax.f32 %v1711, %v1743
        %v1776 = vmax.f32 %v1712, %v1744
        %v1777 = vmax.f32 %v1713, %v1745
        %v1778 = vmax.f32 %v1714, %v1746
        %v1779 = vmax.f32 %v1715, %v1747
        %v1780 = vmax.f32 %v1716, %v1748
        %v1781 = vmax.f32 %v1717, %v1749
        %v1782 = vmax.f32 %v1718, %v1750
        %v1783 = vld [vmem:[#allocation2 + $0x3] sm:$0xff]
        %v1784 = vld [vmem:[#allocation2 + $0xb] sm:$0xff]
        %v1785 = vld [vmem:[#allocation2 + $0x1b] sm:$0xff]
        %v1786 = vld [vmem:[#allocation2 + $0x23] sm:$0xff]
        %v1787 = vld [vmem:[#allocation2 + $0x33] sm:$0xff]
        %v1788 = vld [vmem:[#allocation2 + $0x3b] sm:$0xff]
        %v1789 = vld [vmem:[#allocation2 + $0x4b] sm:$0xff]
        %v1790 = vld [vmem:[#allocation2 + $0x53] sm:$0xff]
        %v1791 = vld [vmem:[#allocation2 + $0x63] sm:$0xff]
        %v1792 = vld [vmem:[#allocation2 + $0x6b] sm:$0xff]
        %v1793 = vld [vmem:[#allocation2 + $0x7b] sm:$0xff]
        %v1794 = vld [vmem:[#allocation2 + $0x83] sm:$0xff]
        %v1795 = vld [vmem:[#allocation2 + $0x93] sm:$0xff]
        %v1796 = vld [vmem:[#allocation2 + $0x9b] sm:$0xff]
        %v1797 = vld [vmem:[#allocation2 + $0xab] sm:$0xff]
        %v1798 = vld [vmem:[#allocation2 + $0xb3] sm:$0xff]
        %v1799 = vld [vmem:[#allocation2 + $0xc3] sm:$0xff]
        %v1800 = vld [vmem:[#allocation2 + $0xcb] sm:$0xff]
        %v1801 = vld [vmem:[#allocation2 + $0xdb] sm:$0xff]
        %v1802 = vld [vmem:[#allocation2 + $0xe3] sm:$0xff]
        %v1803 = vld [vmem:[#allocation2 + $0xf3] sm:$0xff]
        %v1804 = vld [vmem:[#allocation2 + $0xfb] sm:$0xff]
        %v1805 = vld [vmem:[#allocation2 + $0x10b] sm:$0xff]
        %v1806 = vld [vmem:[#allocation2 + $0x113] sm:$0xff]
        %v1807 = vld [vmem:[#allocation2 + $0x123] sm:$0xff]
        %v1808 = vld [vmem:[#allocation2 + $0x12b] sm:$0xff]
        %v1809 = vld [vmem:[#allocation2 + $0x13b] sm:$0xff]
        %v1810 = vld [vmem:[#allocation2 + $0x143] sm:$0xff]
        %v1811 = vld [vmem:[#allocation2 + $0x153] sm:$0xff]
        %v1812 = vld [vmem:[#allocation2 + $0x15b] sm:$0xff]
        %v1813 = vld [vmem:[#allocation2 + $0x16b] sm:$0xff]
        %v1814 = vld [vmem:[#allocation2 + $0x173] sm:$0xff]
        %v1815 = vmax.f32 %v1751, %v1783
        %v1816 = vmax.f32 %v1752, %v1784
        %v1817 = vmax.f32 %v1753, %v1785
        %v1818 = vmax.f32 %v1754, %v1786
        %v1819 = vmax.f32 %v1755, %v1787
        %v1820 = vmax.f32 %v1756, %v1788
        %v1821 = vmax.f32 %v1757, %v1789
        %v1822 = vmax.f32 %v1758, %v1790
        %v1823 = vmax.f32 %v1759, %v1791
        %v1824 = vmax.f32 %v1760, %v1792
        %v1825 = vmax.f32 %v1761, %v1793
        %v1826 = vmax.f32 %v1762, %v1794
        %v1827 = vmax.f32 %v1763, %v1795
        %v1828 = vmax.f32 %v1764, %v1796
        %v1829 = vmax.f32 %v1765, %v1797
        %v1830 = vmax.f32 %v1766, %v1798
        %v1831 = vmax.f32 %v1767, %v1799
        %v1832 = vmax.f32 %v1768, %v1800
        %v1833 = vmax.f32 %v1769, %v1801
        %v1834 = vmax.f32 %v1770, %v1802
        %v1835 = vmax.f32 %v1771, %v1803
        %v1836 = vmax.f32 %v1772, %v1804
        %v1837 = vmax.f32 %v1773, %v1805
        %v1838 = vmax.f32 %v1774, %v1806
        %v1839 = vmax.f32 %v1775, %v1807
        %v1840 = vmax.f32 %v1776, %v1808
        %v1841 = vmax.f32 %v1777, %v1809
        %v1842 = vmax.f32 %v1778, %v1810
        %v1843 = vmax.f32 %v1779, %v1811
        %v1844 = vmax.f32 %v1780, %v1812
        %v1845 = vmax.f32 %v1781, %v1813
        %v1846 = vmax.f32 %v1782, %v1814
        %v1847 = vld [vmem:[#allocation2 + $0x4] sm:$0xff]
        %v1848 = vld [vmem:[#allocation2 + $0xc] sm:$0xff]
        %v1849 = vld [vmem:[#allocation2 + $0x1c] sm:$0xff]
        %v1850 = vld [vmem:[#allocation2 + $0x24] sm:$0xff]
        %v1851 = vld [vmem:[#allocation2 + $0x34] sm:$0xff]
        %v1852 = vld [vmem:[#allocation2 + $0x3c] sm:$0xff]
        %v1853 = vld [vmem:[#allocation2 + $0x4c] sm:$0xff]
        %v1854 = vld [vmem:[#allocation2 + $0x54] sm:$0xff]
        %v1855 = vld [vmem:[#allocation2 + $0x64] sm:$0xff]
        %v1856 = vld [vmem:[#allocation2 + $0x6c] sm:$0xff]
        %v1857 = vld [vmem:[#allocation2 + $0x7c] sm:$0xff]
        %v1858 = vld [vmem:[#allocation2 + $0x84] sm:$0xff]
        %v1859 = vld [vmem:[#allocation2 + $0x94] sm:$0xff]
        %v1860 = vld [vmem:[#allocation2 + $0x9c] sm:$0xff]
        %v1861 = vld [vmem:[#allocation2 + $0xac] sm:$0xff]
        %v1862 = vld [vmem:[#allocation2 + $0xb4] sm:$0xff]
        %v1863 = vld [vmem:[#allocation2 + $0xc4] sm:$0xff]
        %v1864 = vld [vmem:[#allocation2 + $0xcc] sm:$0xff]
        %v1865 = vld [vmem:[#allocation2 + $0xdc] sm:$0xff]
        %v1866 = vld [vmem:[#allocation2 + $0xe4] sm:$0xff]
        %v1867 = vld [vmem:[#allocation2 + $0xf4] sm:$0xff]
        %v1868 = vld [vmem:[#allocation2 + $0xfc] sm:$0xff]
        %v1869 = vld [vmem:[#allocation2 + $0x10c] sm:$0xff]
        %v1870 = vld [vmem:[#allocation2 + $0x114] sm:$0xff]
        %v1871 = vld [vmem:[#allocation2 + $0x124] sm:$0xff]
        %v1872 = vld [vmem:[#allocation2 + $0x12c] sm:$0xff]
        %v1873 = vld [vmem:[#allocation2 + $0x13c] sm:$0xff]
        %v1874 = vld [vmem:[#allocation2 + $0x144] sm:$0xff]
        %v1875 = vld [vmem:[#allocation2 + $0x154] sm:$0xff]
        %v1876 = vld [vmem:[#allocation2 + $0x15c] sm:$0xff]
        %v1877 = vld [vmem:[#allocation2 + $0x16c] sm:$0xff]
        %v1878 = vld [vmem:[#allocation2 + $0x174] sm:$0xff]
        %v1879 = vmax.f32 %v1815, %v1847
        %v1880 = vmax.f32 %v1816, %v1848
        %v1881 = vmax.f32 %v1817, %v1849
        %v1882 = vmax.f32 %v1818, %v1850
        %v1883 = vmax.f32 %v1819, %v1851
        %v1884 = vmax.f32 %v1820, %v1852
        %v1885 = vmax.f32 %v1821, %v1853
        %v1886 = vmax.f32 %v1822, %v1854
        %v1887 = vmax.f32 %v1823, %v1855
        %v1888 = vmax.f32 %v1824, %v1856
        %v1889 = vmax.f32 %v1825, %v1857
        %v1890 = vmax.f32 %v1826, %v1858
        %v1891 = vmax.f32 %v1827, %v1859
        %v1892 = vmax.f32 %v1828, %v1860
        %v1893 = vmax.f32 %v1829, %v1861
        %v1894 = vmax.f32 %v1830, %v1862
        %v1895 = vmax.f32 %v1831, %v1863
        %v1896 = vmax.f32 %v1832, %v1864
        %v1897 = vmax.f32 %v1833, %v1865
        %v1898 = vmax.f32 %v1834, %v1866
        %v1899 = vmax.f32 %v1835, %v1867
        %v1900 = vmax.f32 %v1836, %v1868
        %v1901 = vmax.f32 %v1837, %v1869
        %v1902 = vmax.f32 %v1838, %v1870
        %v1903 = vmax.f32 %v1839, %v1871
        %v1904 = vmax.f32 %v1840, %v1872
        %v1905 = vmax.f32 %v1841, %v1873
        %v1906 = vmax.f32 %v1842, %v1874
        %v1907 = vmax.f32 %v1843, %v1875
        %v1908 = vmax.f32 %v1844, %v1876
        %v1909 = vmax.f32 %v1845, %v1877
        %v1910 = vmax.f32 %v1846, %v1878
        %v1911 = vpack.c.bf16 %v1880, %v1879
        %v1912 = vpack.c.bf16 %v1882, %v1881
        %v1913 = vpack.c.bf16 %v1884, %v1883
        %v1914 = vpack.c.bf16 %v1886, %v1885
        %v1915 = vpack.c.bf16 %v1888, %v1887
        %v1916 = vpack.c.bf16 %v1890, %v1889
        %v1917 = vpack.c.bf16 %v1892, %v1891
        %v1918 = vpack.c.bf16 %v1894, %v1893
        %v1919 = vpack.c.bf16 %v1896, %v1895
        %v1920 = vpack.c.bf16 %v1898, %v1897
        %v1921 = vpack.c.bf16 %v1900, %v1899
        %v1922 = vpack.c.bf16 %v1902, %v1901
        %v1923 = vpack.c.bf16 %v1904, %v1903
        %v1924 = vpack.c.bf16 %v1906, %v1905
        %v1925 = vpack.c.bf16 %v1908, %v1907
        %v1926 = vpack.c.bf16 %v1910, %v1909
        %1927 = vst.msk [vmem:[%s1314] sm:$0xff] %vm891, %v1911
        %1928 = vst.msk [vmem:[%s1314 + $0x8] sm:$0xff] %vm891, %v1912
        %1929 = vst.msk [vmem:[%s1314 + $0x10] sm:$0xff] %vm891, %v1913
        %1930 = vst.msk [vmem:[%s1314 + $0x18] sm:$0xff] %vm891, %v1914
        %1931 = vst.msk [vmem:[%s1314 + $0x20] sm:$0xff] %vm891, %v1915
        %1932 = vst.msk [vmem:[%s1314 + $0x28] sm:$0xff] %vm891, %v1916
        %1933 = vst.msk [vmem:[%s1314 + $0x30] sm:$0xff] %vm891, %v1917
        %1934 = vst.msk [vmem:[%s1314 + $0x38] sm:$0xff] %vm891, %v1918
        %1935 = vst.msk [vmem:[%s1314 + $0x40] sm:$0xff] %vm891, %v1919
        %1936 = vst.msk [vmem:[%s1314 + $0x48] sm:$0xff] %vm891, %v1920
        %1937 = vst.msk [vmem:[%s1314 + $0x50] sm:$0xff] %vm891, %v1921
        %1938 = vst.msk [vmem:[%s1314 + $0x58] sm:$0xff] %vm891, %v1922
        %1939 = vst.msk [vmem:[%s1314 + $0x60] sm:$0xff] %vm891, %v1923
        %1940 = vst.msk [vmem:[%s1314 + $0x68] sm:$0xff] %vm891, %v1924
        %1941 = vst.msk [vmem:[%s1314 + $0x70] sm:$0xff] %vm891, %v1925
        %1942 = vst.msk [vmem:[%s1314 + $0x78] sm:$0xff] %vm891, %v1926
        %v1943 = vld [vmem:[#allocation3] sm:$0xff]
        %v1944 = vld [vmem:[#allocation3 + $0x8] sm:$0xff]
        %v1945 = vld [vmem:[#allocation3 + $0x10] sm:$0xff]
        %v1946 = vld [vmem:[#allocation3 + $0x18] sm:$0xff]
        %v1947 = vld [vmem:[#allocation3 + $0x20] sm:$0xff]
        %v1948 = vld [vmem:[#allocation3 + $0x28] sm:$0xff]
        %v1949 = vld [vmem:[#allocation3 + $0x30] sm:$0xff]
        %v1950 = vld [vmem:[#allocation3 + $0x38] sm:$0xff]
        %v1951 = vld [vmem:[#allocation3 + $0x40] sm:$0xff]
        %v1952 = vld [vmem:[#allocation3 + $0x48] sm:$0xff]
        %v1953 = vld [vmem:[#allocation3 + $0x50] sm:$0xff]
        %v1954 = vld [vmem:[#allocation3 + $0x58] sm:$0xff]
        %v1955 = vld [vmem:[#allocation3 + $0x60] sm:$0xff]
        %v1956 = vld [vmem:[#allocation3 + $0x68] sm:$0xff]
        %v1957 = vld [vmem:[#allocation3 + $0x70] sm:$0xff]
        %v1958 = vld [vmem:[#allocation3 + $0x78] sm:$0xff]
        %v1959 = vld [vmem:[%s1347] sm:$0xff]
        %v1960 = vld [vmem:[%s1347 + $0x8] sm:$0xff]
        %v1961 = vld [vmem:[%s1347 + $0x10] sm:$0xff]
        %v1962 = vld [vmem:[%s1347 + $0x18] sm:$0xff]
        %v1963 = vld [vmem:[%s1347 + $0x20] sm:$0xff]
        %v1964 = vld [vmem:[%s1347 + $0x28] sm:$0xff]
        %v1965 = vld [vmem:[%s1347 + $0x30] sm:$0xff]
        %v1966 = vld [vmem:[%s1347 + $0x38] sm:$0xff]
        %v1967 = vld [vmem:[%s1347 + $0x40] sm:$0xff]
        %v1968 = vld [vmem:[%s1347 + $0x48] sm:$0xff]
        %v1969 = vld [vmem:[%s1347 + $0x50] sm:$0xff]
        %v1970 = vld [vmem:[%s1347 + $0x58] sm:$0xff]
        %v1971 = vld [vmem:[%s1347 + $0x60] sm:$0xff]
        %v1972 = vld [vmem:[%s1347 + $0x68] sm:$0xff]
        %v1973 = vld [vmem:[%s1347 + $0x70] sm:$0xff]
        %v1974 = vld [vmem:[%s1347 + $0x78] sm:$0xff]
        %v1975 = vmax.bf16 %v1943, %v1959
        %v1976 = vmax.bf16 %v1944, %v1960
        %v1977 = vmax.bf16 %v1945, %v1961
        %v1978 = vmax.bf16 %v1946, %v1962
        %v1979 = vmax.bf16 %v1947, %v1963
        %v1980 = vmax.bf16 %v1948, %v1964
        %v1981 = vmax.bf16 %v1949, %v1965
        %v1982 = vmax.bf16 %v1950, %v1966
        %v1983 = vmax.bf16 %v1951, %v1967
        %v1984 = vmax.bf16 %v1952, %v1968
        %v1985 = vmax.bf16 %v1953, %v1969
        %v1986 = vmax.bf16 %v1954, %v1970
        %v1987 = vmax.bf16 %v1955, %v1971
        %v1988 = vmax.bf16 %v1956, %v1972
        %v1989 = vmax.bf16 %v1957, %v1973
        %v1990 = vmax.bf16 %v1958, %v1974
        %v1991 = vld [vmem:[%s1314] sm:$0xff]
        %v1992 = vld [vmem:[%s1314 + $0x8] sm:$0xff]
        %v1993 = vld [vmem:[%s1314 + $0x10] sm:$0xff]
        %v1994 = vld [vmem:[%s1314 + $0x18] sm:$0xff]
        %v1995 = vld [vmem:[%s1314 + $0x20] sm:$0xff]
        %v1996 = vld [vmem:[%s1314 + $0x28] sm:$0xff]
        %v1997 = vld [vmem:[%s1314 + $0x30] sm:$0xff]
        %v1998 = vld [vmem:[%s1314 + $0x38] sm:$0xff]
        %v1999 = vld [vmem:[%s1314 + $0x40] sm:$0xff]
        %v2000 = vld [vmem:[%s1314 + $0x48] sm:$0xff]
        %v2001 = vld [vmem:[%s1314 + $0x50] sm:$0xff]
        %v2002 = vld [vmem:[%s1314 + $0x58] sm:$0xff]
        %v2003 = vld [vmem:[%s1314 + $0x60] sm:$0xff]
        %v2004 = vld [vmem:[%s1314 + $0x68] sm:$0xff]
        %v2005 = vld [vmem:[%s1314 + $0x70] sm:$0xff]
        %v2006 = vld [vmem:[%s1314 + $0x78] sm:$0xff]
        %v2007 = vmax.bf16 %v1975, %v1991
        %v2008 = vmax.bf16 %v1976, %v1992
        %v2009 = vmax.bf16 %v1977, %v1993
        %v2010 = vmax.bf16 %v1978, %v1994
        %v2011 = vmax.bf16 %v1979, %v1995
        %v2012 = vmax.bf16 %v1980, %v1996
        %v2013 = vmax.bf16 %v1981, %v1997
        %v2014 = vmax.bf16 %v1982, %v1998
        %v2015 = vmax.bf16 %v1983, %v1999
        %v2016 = vmax.bf16 %v1984, %v2000
        %v2017 = vmax.bf16 %v1985, %v2001
        %v2018 = vmax.bf16 %v1986, %v2002
        %v2019 = vmax.bf16 %v1987, %v2003
        %v2020 = vmax.bf16 %v1988, %v2004
        %v2021 = vmax.bf16 %v1989, %v2005
        %v2022 = vmax.bf16 %v1990, %v2006
        %v2023 = vld [vmem:[%s1412] sm:$0xff]
        %v2024 = vld [vmem:[%s1412 + $0x8] sm:$0xff]
        %v2025 = vld [vmem:[%s1412 + $0x10] sm:$0xff]
        %v2026 = vld [vmem:[%s1412 + $0x18] sm:$0xff]
        %v2027 = vld [vmem:[%s1412 + $0x20] sm:$0xff]
        %v2028 = vld [vmem:[%s1412 + $0x28] sm:$0xff]
        %v2029 = vld [vmem:[%s1412 + $0x30] sm:$0xff]
        %v2030 = vld [vmem:[%s1412 + $0x38] sm:$0xff]
        %v2031 = vld [vmem:[%s1412 + $0x40] sm:$0xff]
        %v2032 = vld [vmem:[%s1412 + $0x48] sm:$0xff]
        %v2033 = vld [vmem:[%s1412 + $0x50] sm:$0xff]
        %v2034 = vld [vmem:[%s1412 + $0x58] sm:$0xff]
        %v2035 = vld [vmem:[%s1412 + $0x60] sm:$0xff]
        %v2036 = vld [vmem:[%s1412 + $0x68] sm:$0xff]
        %v2037 = vld [vmem:[%s1412 + $0x70] sm:$0xff]
        %v2038 = vld [vmem:[%s1412 + $0x78] sm:$0xff]
        %v2039 = vmax.bf16 %v2007, %v2023
        %v2040 = vmax.bf16 %v2008, %v2024
        %v2041 = vmax.bf16 %v2009, %v2025
        %v2042 = vmax.bf16 %v2010, %v2026
        %v2043 = vmax.bf16 %v2011, %v2027
        %v2044 = vmax.bf16 %v2012, %v2028
        %v2045 = vmax.bf16 %v2013, %v2029
        %v2046 = vmax.bf16 %v2014, %v2030
        %v2047 = vmax.bf16 %v2015, %v2031
        %v2048 = vmax.bf16 %v2016, %v2032
        %v2049 = vmax.bf16 %v2017, %v2033
        %v2050 = vmax.bf16 %v2018, %v2034
        %v2051 = vmax.bf16 %v2019, %v2035
        %v2052 = vmax.bf16 %v2020, %v2036
        %v2053 = vmax.bf16 %v2021, %v2037
        %v2054 = vmax.bf16 %v2022, %v2038
        %v2055 = vld [vmem:[%s1445] sm:$0xff]
        %v2056 = vld [vmem:[%s1445 + $0x8] sm:$0xff]
        %v2057 = vld [vmem:[%s1445 + $0x10] sm:$0xff]
        %v2058 = vld [vmem:[%s1445 + $0x18] sm:$0xff]
        %v2059 = vld [vmem:[%s1445 + $0x20] sm:$0xff]
        %v2060 = vld [vmem:[%s1445 + $0x28] sm:$0xff]
        %v2061 = vld [vmem:[%s1445 + $0x30] sm:$0xff]
        %v2062 = vld [vmem:[%s1445 + $0x38] sm:$0xff]
        %v2063 = vld [vmem:[%s1445 + $0x40] sm:$0xff]
        %v2064 = vld [vmem:[%s1445 + $0x48] sm:$0xff]
        %v2065 = vld [vmem:[%s1445 + $0x50] sm:$0xff]
        %v2066 = vld [vmem:[%s1445 + $0x58] sm:$0xff]
        %v2067 = vld [vmem:[%s1445 + $0x60] sm:$0xff]
        %v2068 = vld [vmem:[%s1445 + $0x68] sm:$0xff]
        %v2069 = vld [vmem:[%s1445 + $0x70] sm:$0xff]
        %v2070 = vld [vmem:[%s1445 + $0x78] sm:$0xff]
        %v2071 = vmax.bf16 %v2039, %v2055
        %v2072 = vmax.bf16 %v2040, %v2056
        %v2073 = vmax.bf16 %v2041, %v2057
        %v2074 = vmax.bf16 %v2042, %v2058
        %v2075 = vmax.bf16 %v2043, %v2059
        %v2076 = vmax.bf16 %v2044, %v2060
        %v2077 = vmax.bf16 %v2045, %v2061
        %v2078 = vmax.bf16 %v2046, %v2062
        %v2079 = vmax.bf16 %v2047, %v2063
        %v2080 = vmax.bf16 %v2048, %v2064
        %v2081 = vmax.bf16 %v2049, %v2065
        %v2082 = vmax.bf16 %v2050, %v2066
        %v2083 = vmax.bf16 %v2051, %v2067
        %v2084 = vmax.bf16 %v2052, %v2068
        %v2085 = vmax.bf16 %v2053, %v2069
        %v2086 = vmax.bf16 %v2054, %v2070
        %2103 = vrot.lane.b32.xlu0 %v2071, 32
        %v2104 = vpop.permute.xlu0 %2103
        %2105 = vrot.lane.b32.xlu0 %v2072, 32
        %v2106 = vpop.permute.xlu0 %2105
        %2107 = vrot.lane.b32.xlu0 %v2073, 32
        %v2108 = vpop.permute.xlu0 %2107
        %2109 = vrot.lane.b32.xlu0 %v2074, 32
        %v2110 = vpop.permute.xlu0 %2109
        %2111 = vrot.lane.b32.xlu0 %v2075, 32
        %v2112 = vpop.permute.xlu0 %2111
        %2113 = vrot.lane.b32.xlu0 %v2076, 32
        %v2114 = vpop.permute.xlu0 %2113
        %2115 = vrot.lane.b32.xlu0 %v2077, 32
        %v2116 = vpop.permute.xlu0 %2115
        %2117 = vrot.lane.b32.xlu0 %v2078, 32
        %v2118 = vpop.permute.xlu0 %2117
        %2119 = vrot.lane.b32.xlu0 %v2079, 32
        %v2120 = vpop.permute.xlu0 %2119
        %2121 = vrot.lane.b32.xlu0 %v2080, 32
        %v2122 = vpop.permute.xlu0 %2121
        %2123 = vrot.lane.b32.xlu0 %v2081, 32
        %v2124 = vpop.permute.xlu0 %2123
        %2125 = vrot.lane.b32.xlu0 %v2082, 32
        %v2126 = vpop.permute.xlu0 %2125
        %2127 = vrot.lane.b32.xlu0 %v2083, 32
        %v2128 = vpop.permute.xlu0 %2127
        %2129 = vrot.lane.b32.xlu0 %v2084, 32
        %v2130 = vpop.permute.xlu0 %2129
        %2131 = vrot.lane.b32.xlu0 %v2085, 32
        %v2132 = vpop.permute.xlu0 %2131
        %2133 = vrot.lane.b32.xlu0 %v2086, 32
        %v2134 = vpop.permute.xlu0 %2133
        %vm2151 = vcmask 392448
        %2152 = vst.msk [vmem:[#allocation4] sm:$0xff] %vm2151, %v2104
        %2153 = vst.msk [vmem:[#allocation4 + $0x8] sm:$0xff] %vm2151, %v2106
        %2154 = vst.msk [vmem:[#allocation4 + $0x10] sm:$0xff] %vm2151, %v2108
        %2155 = vst.msk [vmem:[#allocation4 + $0x18] sm:$0xff] %vm2151, %v2110
        %2156 = vst.msk [vmem:[#allocation4 + $0x20] sm:$0xff] %vm2151, %v2112
        %2157 = vst.msk [vmem:[#allocation4 + $0x28] sm:$0xff] %vm2151, %v2114
        %2158 = vst.msk [vmem:[#allocation4 + $0x30] sm:$0xff] %vm2151, %v2116
        %2159 = vst.msk [vmem:[#allocation4 + $0x38] sm:$0xff] %vm2151, %v2118
        %2160 = vst.msk [vmem:[#allocation4 + $0x40] sm:$0xff] %vm2151, %v2120
        %2161 = vst.msk [vmem:[#allocation4 + $0x48] sm:$0xff] %vm2151, %v2122
        %2162 = vst.msk [vmem:[#allocation4 + $0x50] sm:$0xff] %vm2151, %v2124
        %2163 = vst.msk [vmem:[#allocation4 + $0x58] sm:$0xff] %vm2151, %v2126
        %2164 = vst.msk [vmem:[#allocation4 + $0x60] sm:$0xff] %vm2151, %v2128
        %2165 = vst.msk [vmem:[#allocation4 + $0x68] sm:$0xff] %vm2151, %v2130
        %2166 = vst.msk [vmem:[#allocation4 + $0x70] sm:$0xff] %vm2151, %v2132
        %2167 = vst.msk [vmem:[#allocation4 + $0x78] sm:$0xff] %vm2151, %v2134
        %v2168 = vunpack.c.l.bf16 %v2071
        %v2169 = vunpack.c.h.bf16 %v2071
        %v2170 = vunpack.c.l.bf16 %v2072
        %v2171 = vunpack.c.h.bf16 %v2072
        %v2172 = vunpack.c.l.bf16 %v2073
        %v2173 = vunpack.c.h.bf16 %v2073
        %v2174 = vunpack.c.l.bf16 %v2074
        %v2175 = vunpack.c.h.bf16 %v2074
        %v2176 = vunpack.c.l.bf16 %v2075
        %v2177 = vunpack.c.h.bf16 %v2075
        %v2178 = vunpack.c.l.bf16 %v2076
        %v2179 = vunpack.c.h.bf16 %v2076
        %v2180 = vunpack.c.l.bf16 %v2077
        %v2181 = vunpack.c.h.bf16 %v2077
        %v2182 = vunpack.c.l.bf16 %v2078
        %v2183 = vunpack.c.h.bf16 %v2078
        %v2184 = vunpack.c.l.bf16 %v2079
        %v2185 = vunpack.c.h.bf16 %v2079
        %v2186 = vunpack.c.l.bf16 %v2080
        %v2187 = vunpack.c.h.bf16 %v2080
        %v2188 = vunpack.c.l.bf16 %v2081
        %v2189 = vunpack.c.h.bf16 %v2081
        %v2190 = vunpack.c.l.bf16 %v2082
        %v2191 = vunpack.c.h.bf16 %v2082
        %v2192 = vunpack.c.l.bf16 %v2083
        %v2193 = vunpack.c.h.bf16 %v2083
        %v2194 = vunpack.c.l.bf16 %v2084
        %v2195 = vunpack.c.h.bf16 %v2084
        %v2196 = vunpack.c.l.bf16 %v2085
        %v2197 = vunpack.c.h.bf16 %v2085
        %v2198 = vunpack.c.l.bf16 %v2086
        %v2199 = vunpack.c.h.bf16 %v2086
        %2200 = vst.msk [vmem:[#allocation2 + $0x2] sm:$0xff] %vm891, %v2168
        %2201 = vst.msk [vmem:[#allocation2 + $0xa] sm:$0xff] %vm891, %v2169
        %2202 = vst.msk [vmem:[#allocation2 + $0x1a] sm:$0xff] %vm891, %v2170
        %2203 = vst.msk [vmem:[#allocation2 + $0x22] sm:$0xff] %vm891, %v2171
        %2204 = vst.msk [vmem:[#allocation2 + $0x32] sm:$0xff] %vm891, %v2172
        %2205 = vst.msk [vmem:[#allocation2 + $0x3a] sm:$0xff] %vm891, %v2173
        %2206 = vst.msk [vmem:[#allocation2 + $0x4a] sm:$0xff] %vm891, %v2174
        %2207 = vst.msk [vmem:[#allocation2 + $0x52] sm:$0xff] %vm891, %v2175
        %2208 = vst.msk [vmem:[#allocation2 + $0x62] sm:$0xff] %vm891, %v2176
        %2209 = vst.msk [vmem:[#allocation2 + $0x6a] sm:$0xff] %vm891, %v2177
        %2210 = vst.msk [vmem:[#allocation2 + $0x7a] sm:$0xff] %vm891, %v2178
        %2211 = vst.msk [vmem:[#allocation2 + $0x82] sm:$0xff] %vm891, %v2179
        %2212 = vst.msk [vmem:[#allocation2 + $0x92] sm:$0xff] %vm891, %v2180
        %2213 = vst.msk [vmem:[#allocation2 + $0x9a] sm:$0xff] %vm891, %v2181
        %2214 = vst.msk [vmem:[#allocation2 + $0xaa] sm:$0xff] %vm891, %v2182
        %2215 = vst.msk [vmem:[#allocation2 + $0xb2] sm:$0xff] %vm891, %v2183
        %2216 = vst.msk [vmem:[#allocation2 + $0xc2] sm:$0xff] %vm891, %v2184
        %2217 = vst.msk [vmem:[#allocation2 + $0xca] sm:$0xff] %vm891, %v2185
        %2218 = vst.msk [vmem:[#allocation2 + $0xda] sm:$0xff] %vm891, %v2186
        %2219 = vst.msk [vmem:[#allocation2 + $0xe2] sm:$0xff] %vm891, %v2187
        %2220 = vst.msk [vmem:[#allocation2 + $0xf2] sm:$0xff] %vm891, %v2188
        %2221 = vst.msk [vmem:[#allocation2 + $0xfa] sm:$0xff] %vm891, %v2189
        %2222 = vst.msk [vmem:[#allocation2 + $0x10a] sm:$0xff] %vm891, %v2190
        %2223 = vst.msk [vmem:[#allocation2 + $0x112] sm:$0xff] %vm891, %v2191
        %2224 = vst.msk [vmem:[#allocation2 + $0x122] sm:$0xff] %vm891, %v2192
        %2225 = vst.msk [vmem:[#allocation2 + $0x12a] sm:$0xff] %vm891, %v2193
        %2226 = vst.msk [vmem:[#allocation2 + $0x13a] sm:$0xff] %vm891, %v2194
        %2227 = vst.msk [vmem:[#allocation2 + $0x142] sm:$0xff] %vm891, %v2195
        %2228 = vst.msk [vmem:[#allocation2 + $0x152] sm:$0xff] %vm891, %v2196
        %2229 = vst.msk [vmem:[#allocation2 + $0x15a] sm:$0xff] %vm891, %v2197
        %2230 = vst.msk [vmem:[#allocation2 + $0x16a] sm:$0xff] %vm891, %v2198
        %2231 = vst.msk [vmem:[#allocation2 + $0x172] sm:$0xff] %vm891, %v2199
        %v2232 = vld [vmem:[#allocation2] sm:$0xff]
        %v2233 = vld [vmem:[#allocation2 + $0x8] sm:$0xff]
        %v2234 = vld [vmem:[#allocation2 + $0x18] sm:$0xff]
        %v2235 = vld [vmem:[#allocation2 + $0x20] sm:$0xff]
        %v2236 = vld [vmem:[#allocation2 + $0x30] sm:$0xff]
        %v2237 = vld [vmem:[#allocation2 + $0x38] sm:$0xff]
        %v2238 = vld [vmem:[#allocation2 + $0x48] sm:$0xff]
        %v2239 = vld [vmem:[#allocation2 + $0x50] sm:$0xff]
        %v2240 = vld [vmem:[#allocation2 + $0x60] sm:$0xff]
        %v2241 = vld [vmem:[#allocation2 + $0x68] sm:$0xff]
        %v2242 = vld [vmem:[#allocation2 + $0x78] sm:$0xff]
        %v2243 = vld [vmem:[#allocation2 + $0x80] sm:$0xff]
        %v2244 = vld [vmem:[#allocation2 + $0x90] sm:$0xff]
        %v2245 = vld [vmem:[#allocation2 + $0x98] sm:$0xff]
        %v2246 = vld [vmem:[#allocation2 + $0xa8] sm:$0xff]
        %v2247 = vld [vmem:[#allocation2 + $0xb0] sm:$0xff]
        %v2248 = vld [vmem:[#allocation2 + $0xc0] sm:$0xff]
        %v2249 = vld [vmem:[#allocation2 + $0xc8] sm:$0xff]
        %v2250 = vld [vmem:[#allocation2 + $0xd8] sm:$0xff]
        %v2251 = vld [vmem:[#allocation2 + $0xe0] sm:$0xff]
        %v2252 = vld [vmem:[#allocation2 + $0xf0] sm:$0xff]
        %v2253 = vld [vmem:[#allocation2 + $0xf8] sm:$0xff]
        %v2254 = vld [vmem:[#allocation2 + $0x108] sm:$0xff]
        %v2255 = vld [vmem:[#allocation2 + $0x110] sm:$0xff]
        %v2256 = vld [vmem:[#allocation2 + $0x120] sm:$0xff]
        %v2257 = vld [vmem:[#allocation2 + $0x128] sm:$0xff]
        %v2258 = vld [vmem:[#allocation2 + $0x138] sm:$0xff]
        %v2259 = vld [vmem:[#allocation2 + $0x140] sm:$0xff]
        %v2260 = vld [vmem:[#allocation2 + $0x150] sm:$0xff]
        %v2261 = vld [vmem:[#allocation2 + $0x158] sm:$0xff]
        %v2262 = vld [vmem:[#allocation2 + $0x168] sm:$0xff]
        %v2263 = vld [vmem:[#allocation2 + $0x170] sm:$0xff]
        %v2264 = vld [vmem:[#allocation2 + $0x1] sm:$0xff]
        %v2265 = vld [vmem:[#allocation2 + $0x9] sm:$0xff]
        %v2266 = vld [vmem:[#allocation2 + $0x19] sm:$0xff]
        %v2267 = vld [vmem:[#allocation2 + $0x21] sm:$0xff]
        %v2268 = vld [vmem:[#allocation2 + $0x31] sm:$0xff]
        %v2269 = vld [vmem:[#allocation2 + $0x39] sm:$0xff]
        %v2270 = vld [vmem:[#allocation2 + $0x49] sm:$0xff]
        %v2271 = vld [vmem:[#allocation2 + $0x51] sm:$0xff]
        %v2272 = vld [vmem:[#allocation2 + $0x61] sm:$0xff]
        %v2273 = vld [vmem:[#allocation2 + $0x69] sm:$0xff]
        %v2274 = vld [vmem:[#allocation2 + $0x79] sm:$0xff]
        %v2275 = vld [vmem:[#allocation2 + $0x81] sm:$0xff]
        %v2276 = vld [vmem:[#allocation2 + $0x91] sm:$0xff]
        %v2277 = vld [vmem:[#allocation2 + $0x99] sm:$0xff]
        %v2278 = vld [vmem:[#allocation2 + $0xa9] sm:$0xff]
        %v2279 = vld [vmem:[#allocation2 + $0xb1] sm:$0xff]
        %v2280 = vld [vmem:[#allocation2 + $0xc1] sm:$0xff]
        %v2281 = vld [vmem:[#allocation2 + $0xc9] sm:$0xff]
        %v2282 = vld [vmem:[#allocation2 + $0xd9] sm:$0xff]
        %v2283 = vld [vmem:[#allocation2 + $0xe1] sm:$0xff]
        %v2284 = vld [vmem:[#allocation2 + $0xf1] sm:$0xff]
        %v2285 = vld [vmem:[#allocation2 + $0xf9] sm:$0xff]
        %v2286 = vld [vmem:[#allocation2 + $0x109] sm:$0xff]
        %v2287 = vld [vmem:[#allocation2 + $0x111] sm:$0xff]
        %v2288 = vld [vmem:[#allocation2 + $0x121] sm:$0xff]
        %v2289 = vld [vmem:[#allocation2 + $0x129] sm:$0xff]
        %v2290 = vld [vmem:[#allocation2 + $0x139] sm:$0xff]
        %v2291 = vld [vmem:[#allocation2 + $0x141] sm:$0xff]
        %v2292 = vld [vmem:[#allocation2 + $0x151] sm:$0xff]
        %v2293 = vld [vmem:[#allocation2 + $0x159] sm:$0xff]
        %v2294 = vld [vmem:[#allocation2 + $0x169] sm:$0xff]
        %v2295 = vld [vmem:[#allocation2 + $0x171] sm:$0xff]
        %v2296 = vmax.f32 %v2232, %v2264
        %v2297 = vmax.f32 %v2233, %v2265
        %v2298 = vmax.f32 %v2234, %v2266
        %v2299 = vmax.f32 %v2235, %v2267
        %v2300 = vmax.f32 %v2236, %v2268
        %v2301 = vmax.f32 %v2237, %v2269
        %v2302 = vmax.f32 %v2238, %v2270
        %v2303 = vmax.f32 %v2239, %v2271
        %v2304 = vmax.f32 %v2240, %v2272
        %v2305 = vmax.f32 %v2241, %v2273
        %v2306 = vmax.f32 %v2242, %v2274
        %v2307 = vmax.f32 %v2243, %v2275
        %v2308 = vmax.f32 %v2244, %v2276
        %v2309 = vmax.f32 %v2245, %v2277
        %v2310 = vmax.f32 %v2246, %v2278
        %v2311 = vmax.f32 %v2247, %v2279
        %v2312 = vmax.f32 %v2248, %v2280
        %v2313 = vmax.f32 %v2249, %v2281
        %v2314 = vmax.f32 %v2250, %v2282
        %v2315 = vmax.f32 %v2251, %v2283
        %v2316 = vmax.f32 %v2252, %v2284
        %v2317 = vmax.f32 %v2253, %v2285
        %v2318 = vmax.f32 %v2254, %v2286
        %v2319 = vmax.f32 %v2255, %v2287
        %v2320 = vmax.f32 %v2256, %v2288
        %v2321 = vmax.f32 %v2257, %v2289
        %v2322 = vmax.f32 %v2258, %v2290
        %v2323 = vmax.f32 %v2259, %v2291
        %v2324 = vmax.f32 %v2260, %v2292
        %v2325 = vmax.f32 %v2261, %v2293
        %v2326 = vmax.f32 %v2262, %v2294
        %v2327 = vmax.f32 %v2263, %v2295
        %v2328 = vld [vmem:[#allocation2 + $0x2] sm:$0xff]
        %v2329 = vld [vmem:[#allocation2 + $0xa] sm:$0xff]
        %v2330 = vld [vmem:[#allocation2 + $0x1a] sm:$0xff]
        %v2331 = vld [vmem:[#allocation2 + $0x22] sm:$0xff]
        %v2332 = vld [vmem:[#allocation2 + $0x32] sm:$0xff]
        %v2333 = vld [vmem:[#allocation2 + $0x3a] sm:$0xff]
        %v2334 = vld [vmem:[#allocation2 + $0x4a] sm:$0xff]
        %v2335 = vld [vmem:[#allocation2 + $0x52] sm:$0xff]
        %v2336 = vld [vmem:[#allocation2 + $0x62] sm:$0xff]
        %v2337 = vld [vmem:[#allocation2 + $0x6a] sm:$0xff]
        %v2338 = vld [vmem:[#allocation2 + $0x7a] sm:$0xff]
        %v2339 = vld [vmem:[#allocation2 + $0x82] sm:$0xff]
        %v2340 = vld [vmem:[#allocation2 + $0x92] sm:$0xff]
        %v2341 = vld [vmem:[#allocation2 + $0x9a] sm:$0xff]
        %v2342 = vld [vmem:[#allocation2 + $0xaa] sm:$0xff]
        %v2343 = vld [vmem:[#allocation2 + $0xb2] sm:$0xff]
        %v2344 = vld [vmem:[#allocation2 + $0xc2] sm:$0xff]
        %v2345 = vld [vmem:[#allocation2 + $0xca] sm:$0xff]
        %v2346 = vld [vmem:[#allocation2 + $0xda] sm:$0xff]
        %v2347 = vld [vmem:[#allocation2 + $0xe2] sm:$0xff]
        %v2348 = vld [vmem:[#allocation2 + $0xf2] sm:$0xff]
        %v2349 = vld [vmem:[#allocation2 + $0xfa] sm:$0xff]
        %v2350 = vld [vmem:[#allocation2 + $0x10a] sm:$0xff]
        %v2351 = vld [vmem:[#allocation2 + $0x112] sm:$0xff]
        %v2352 = vld [vmem:[#allocation2 + $0x122] sm:$0xff]
        %v2353 = vld [vmem:[#allocation2 + $0x12a] sm:$0xff]
        %v2354 = vld [vmem:[#allocation2 + $0x13a] sm:$0xff]
        %v2355 = vld [vmem:[#allocation2 + $0x142] sm:$0xff]
        %v2356 = vld [vmem:[#allocation2 + $0x152] sm:$0xff]
        %v2357 = vld [vmem:[#allocation2 + $0x15a] sm:$0xff]
        %v2358 = vld [vmem:[#allocation2 + $0x16a] sm:$0xff]
        %v2359 = vld [vmem:[#allocation2 + $0x172] sm:$0xff]
        %v2360 = vmax.f32 %v2296, %v2328
        %v2361 = vmax.f32 %v2297, %v2329
        %v2362 = vmax.f32 %v2298, %v2330
        %v2363 = vmax.f32 %v2299, %v2331
        %v2364 = vmax.f32 %v2300, %v2332
        %v2365 = vmax.f32 %v2301, %v2333
        %v2366 = vmax.f32 %v2302, %v2334
        %v2367 = vmax.f32 %v2303, %v2335
        %v2368 = vmax.f32 %v2304, %v2336
        %v2369 = vmax.f32 %v2305, %v2337
        %v2370 = vmax.f32 %v2306, %v2338
        %v2371 = vmax.f32 %v2307, %v2339
        %v2372 = vmax.f32 %v2308, %v2340
        %v2373 = vmax.f32 %v2309, %v2341
        %v2374 = vmax.f32 %v2310, %v2342
        %v2375 = vmax.f32 %v2311, %v2343
        %v2376 = vmax.f32 %v2312, %v2344
        %v2377 = vmax.f32 %v2313, %v2345
        %v2378 = vmax.f32 %v2314, %v2346
        %v2379 = vmax.f32 %v2315, %v2347
        %v2380 = vmax.f32 %v2316, %v2348
        %v2381 = vmax.f32 %v2317, %v2349
        %v2382 = vmax.f32 %v2318, %v2350
        %v2383 = vmax.f32 %v2319, %v2351
        %v2384 = vmax.f32 %v2320, %v2352
        %v2385 = vmax.f32 %v2321, %v2353
        %v2386 = vmax.f32 %v2322, %v2354
        %v2387 = vmax.f32 %v2323, %v2355
        %v2388 = vmax.f32 %v2324, %v2356
        %v2389 = vmax.f32 %v2325, %v2357
        %v2390 = vmax.f32 %v2326, %v2358
        %v2391 = vmax.f32 %v2327, %v2359
        %v2392 = vld [vmem:[#allocation2 + $0x3] sm:$0xff]
        %v2393 = vld [vmem:[#allocation2 + $0xb] sm:$0xff]
        %v2394 = vld [vmem:[#allocation2 + $0x1b] sm:$0xff]
        %v2395 = vld [vmem:[#allocation2 + $0x23] sm:$0xff]
        %v2396 = vld [vmem:[#allocation2 + $0x33] sm:$0xff]
        %v2397 = vld [vmem:[#allocation2 + $0x3b] sm:$0xff]
        %v2398 = vld [vmem:[#allocation2 + $0x4b] sm:$0xff]
        %v2399 = vld [vmem:[#allocation2 + $0x53] sm:$0xff]
        %v2400 = vld [vmem:[#allocation2 + $0x63] sm:$0xff]
        %v2401 = vld [vmem:[#allocation2 + $0x6b] sm:$0xff]
        %v2402 = vld [vmem:[#allocation2 + $0x7b] sm:$0xff]
        %v2403 = vld [vmem:[#allocation2 + $0x83] sm:$0xff]
        %v2404 = vld [vmem:[#allocation2 + $0x93] sm:$0xff]
        %v2405 = vld [vmem:[#allocation2 + $0x9b] sm:$0xff]
        %v2406 = vld [vmem:[#allocation2 + $0xab] sm:$0xff]
        %v2407 = vld [vmem:[#allocation2 + $0xb3] sm:$0xff]
        %v2408 = vld [vmem:[#allocation2 + $0xc3] sm:$0xff]
        %v2409 = vld [vmem:[#allocation2 + $0xcb] sm:$0xff]
        %v2410 = vld [vmem:[#allocation2 + $0xdb] sm:$0xff]
        %v2411 = vld [vmem:[#allocation2 + $0xe3] sm:$0xff]
        %v2412 = vld [vmem:[#allocation2 + $0xf3] sm:$0xff]
        %v2413 = vld [vmem:[#allocation2 + $0xfb] sm:$0xff]
        %v2414 = vld [vmem:[#allocation2 + $0x10b] sm:$0xff]
        %v2415 = vld [vmem:[#allocation2 + $0x113] sm:$0xff]
        %v2416 = vld [vmem:[#allocation2 + $0x123] sm:$0xff]
        %v2417 = vld [vmem:[#allocation2 + $0x12b] sm:$0xff]
        %v2418 = vld [vmem:[#allocation2 + $0x13b] sm:$0xff]
        %v2419 = vld [vmem:[#allocation2 + $0x143] sm:$0xff]
        %v2420 = vld [vmem:[#allocation2 + $0x153] sm:$0xff]
        %v2421 = vld [vmem:[#allocation2 + $0x15b] sm:$0xff]
        %v2422 = vld [vmem:[#allocation2 + $0x16b] sm:$0xff]
        %v2423 = vld [vmem:[#allocation2 + $0x173] sm:$0xff]
        %v2424 = vmax.f32 %v2360, %v2392
        %v2425 = vmax.f32 %v2361, %v2393
        %v2426 = vmax.f32 %v2362, %v2394
        %v2427 = vmax.f32 %v2363, %v2395
        %v2428 = vmax.f32 %v2364, %v2396
        %v2429 = vmax.f32 %v2365, %v2397
        %v2430 = vmax.f32 %v2366, %v2398
        %v2431 = vmax.f32 %v2367, %v2399
        %v2432 = vmax.f32 %v2368, %v2400
        %v2433 = vmax.f32 %v2369, %v2401
        %v2434 = vmax.f32 %v2370, %v2402
        %v2435 = vmax.f32 %v2371, %v2403
        %v2436 = vmax.f32 %v2372, %v2404
        %v2437 = vmax.f32 %v2373, %v2405
        %v2438 = vmax.f32 %v2374, %v2406
        %v2439 = vmax.f32 %v2375, %v2407
        %v2440 = vmax.f32 %v2376, %v2408
        %v2441 = vmax.f32 %v2377, %v2409
        %v2442 = vmax.f32 %v2378, %v2410
        %v2443 = vmax.f32 %v2379, %v2411
        %v2444 = vmax.f32 %v2380, %v2412
        %v2445 = vmax.f32 %v2381, %v2413
        %v2446 = vmax.f32 %v2382, %v2414
        %v2447 = vmax.f32 %v2383, %v2415
        %v2448 = vmax.f32 %v2384, %v2416
        %v2449 = vmax.f32 %v2385, %v2417
        %v2450 = vmax.f32 %v2386, %v2418
        %v2451 = vmax.f32 %v2387, %v2419
        %v2452 = vmax.f32 %v2388, %v2420
        %v2453 = vmax.f32 %v2389, %v2421
        %v2454 = vmax.f32 %v2390, %v2422
        %v2455 = vmax.f32 %v2391, %v2423
        %v2456 = vld [vmem:[#allocation2 + $0x4] sm:$0xff]
        %v2457 = vld [vmem:[#allocation2 + $0xc] sm:$0xff]
        %v2458 = vld [vmem:[#allocation2 + $0x1c] sm:$0xff]
        %v2459 = vld [vmem:[#allocation2 + $0x24] sm:$0xff]
        %v2460 = vld [vmem:[#allocation2 + $0x34] sm:$0xff]
        %v2461 = vld [vmem:[#allocation2 + $0x3c] sm:$0xff]
        %v2462 = vld [vmem:[#allocation2 + $0x4c] sm:$0xff]
        %v2463 = vld [vmem:[#allocation2 + $0x54] sm:$0xff]
        %v2464 = vld [vmem:[#allocation2 + $0x64] sm:$0xff]
        %v2465 = vld [vmem:[#allocation2 + $0x6c] sm:$0xff]
        %v2466 = vld [vmem:[#allocation2 + $0x7c] sm:$0xff]
        %v2467 = vld [vmem:[#allocation2 + $0x84] sm:$0xff]
        %v2468 = vld [vmem:[#allocation2 + $0x94] sm:$0xff]
        %v2469 = vld [vmem:[#allocation2 + $0x9c] sm:$0xff]
        %v2470 = vld [vmem:[#allocation2 + $0xac] sm:$0xff]
        %v2471 = vld [vmem:[#allocation2 + $0xb4] sm:$0xff]
        %v2472 = vld [vmem:[#allocation2 + $0xc4] sm:$0xff]
        %v2473 = vld [vmem:[#allocation2 + $0xcc] sm:$0xff]
        %v2474 = vld [vmem:[#allocation2 + $0xdc] sm:$0xff]
        %v2475 = vld [vmem:[#allocation2 + $0xe4] sm:$0xff]
        %v2476 = vld [vmem:[#allocation2 + $0xf4] sm:$0xff]
        %v2477 = vld [vmem:[#allocation2 + $0xfc] sm:$0xff]
        %v2478 = vld [vmem:[#allocation2 + $0x10c] sm:$0xff]
        %v2479 = vld [vmem:[#allocation2 + $0x114] sm:$0xff]
        %v2480 = vld [vmem:[#allocation2 + $0x124] sm:$0xff]
        %v2481 = vld [vmem:[#allocation2 + $0x12c] sm:$0xff]
        %v2482 = vld [vmem:[#allocation2 + $0x13c] sm:$0xff]
        %v2483 = vld [vmem:[#allocation2 + $0x144] sm:$0xff]
        %v2484 = vld [vmem:[#allocation2 + $0x154] sm:$0xff]
        %v2485 = vld [vmem:[#allocation2 + $0x15c] sm:$0xff]
        %v2486 = vld [vmem:[#allocation2 + $0x16c] sm:$0xff]
        %v2487 = vld [vmem:[#allocation2 + $0x174] sm:$0xff]
        %v2488 = vmax.f32 %v2424, %v2456
        %v2489 = vmax.f32 %v2425, %v2457
        %v2490 = vmax.f32 %v2426, %v2458
        %v2491 = vmax.f32 %v2427, %v2459
        %v2492 = vmax.f32 %v2428, %v2460
        %v2493 = vmax.f32 %v2429, %v2461
        %v2494 = vmax.f32 %v2430, %v2462
        %v2495 = vmax.f32 %v2431, %v2463
        %v2496 = vmax.f32 %v2432, %v2464
        %v2497 = vmax.f32 %v2433, %v2465
        %v2498 = vmax.f32 %v2434, %v2466
        %v2499 = vmax.f32 %v2435, %v2467
        %v2500 = vmax.f32 %v2436, %v2468
        %v2501 = vmax.f32 %v2437, %v2469
        %v2502 = vmax.f32 %v2438, %v2470
        %v2503 = vmax.f32 %v2439, %v2471
        %v2504 = vmax.f32 %v2440, %v2472
        %v2505 = vmax.f32 %v2441, %v2473
        %v2506 = vmax.f32 %v2442, %v2474
        %v2507 = vmax.f32 %v2443, %v2475
        %v2508 = vmax.f32 %v2444, %v2476
        %v2509 = vmax.f32 %v2445, %v2477
        %v2510 = vmax.f32 %v2446, %v2478
        %v2511 = vmax.f32 %v2447, %v2479
        %v2512 = vmax.f32 %v2448, %v2480
        %v2513 = vmax.f32 %v2449, %v2481
        %v2514 = vmax.f32 %v2450, %v2482
        %v2515 = vmax.f32 %v2451, %v2483
        %v2516 = vmax.f32 %v2452, %v2484
        %v2517 = vmax.f32 %v2453, %v2485
        %v2518 = vmax.f32 %v2454, %v2486
        %v2519 = vmax.f32 %v2455, %v2487
        %v2520 = vpack.c.bf16 %v2489, %v2488
        %v2521 = vpack.c.bf16 %v2491, %v2490
        %v2522 = vpack.c.bf16 %v2493, %v2492
        %v2523 = vpack.c.bf16 %v2495, %v2494
        %v2524 = vpack.c.bf16 %v2497, %v2496
        %v2525 = vpack.c.bf16 %v2499, %v2498
        %v2526 = vpack.c.bf16 %v2501, %v2500
        %v2527 = vpack.c.bf16 %v2503, %v2502
        %v2528 = vpack.c.bf16 %v2505, %v2504
        %v2529 = vpack.c.bf16 %v2507, %v2506
        %v2530 = vpack.c.bf16 %v2509, %v2508
        %v2531 = vpack.c.bf16 %v2511, %v2510
        %v2532 = vpack.c.bf16 %v2513, %v2512
        %v2533 = vpack.c.bf16 %v2515, %v2514
        %v2534 = vpack.c.bf16 %v2517, %v2516
        %v2535 = vpack.c.bf16 %v2519, %v2518
        %2536 = vst.msk [vmem:[%s1314] sm:$0xff] %vm891, %v2520
        %2537 = vst.msk [vmem:[%s1314 + $0x8] sm:$0xff] %vm891, %v2521
        %2538 = vst.msk [vmem:[%s1314 + $0x10] sm:$0xff] %vm891, %v2522
        %2539 = vst.msk [vmem:[%s1314 + $0x18] sm:$0xff] %vm891, %v2523
        %2540 = vst.msk [vmem:[%s1314 + $0x20] sm:$0xff] %vm891, %v2524
        %2541 = vst.msk [vmem:[%s1314 + $0x28] sm:$0xff] %vm891, %v2525
        %2542 = vst.msk [vmem:[%s1314 + $0x30] sm:$0xff] %vm891, %v2526
        %2543 = vst.msk [vmem:[%s1314 + $0x38] sm:$0xff] %vm891, %v2527
        %2544 = vst.msk [vmem:[%s1314 + $0x40] sm:$0xff] %vm891, %v2528
        %2545 = vst.msk [vmem:[%s1314 + $0x48] sm:$0xff] %vm891, %v2529
        %2546 = vst.msk [vmem:[%s1314 + $0x50] sm:$0xff] %vm891, %v2530
        %2547 = vst.msk [vmem:[%s1314 + $0x58] sm:$0xff] %vm891, %v2531
        %2548 = vst.msk [vmem:[%s1314 + $0x60] sm:$0xff] %vm891, %v2532
        %2549 = vst.msk [vmem:[%s1314 + $0x68] sm:$0xff] %vm891, %v2533
        %2550 = vst.msk [vmem:[%s1314 + $0x70] sm:$0xff] %vm891, %v2534
        %2551 = vst.msk [vmem:[%s1314 + $0x78] sm:$0xff] %vm891, %v2535
        %v2552 = vld [vmem:[#allocation3] sm:$0xff]
        %v2553 = vld [vmem:[#allocation3 + $0x8] sm:$0xff]
        %v2554 = vld [vmem:[#allocation3 + $0x10] sm:$0xff]
        %v2555 = vld [vmem:[#allocation3 + $0x18] sm:$0xff]
        %v2556 = vld [vmem:[#allocation3 + $0x20] sm:$0xff]
        %v2557 = vld [vmem:[#allocation3 + $0x28] sm:$0xff]
        %v2558 = vld [vmem:[#allocation3 + $0x30] sm:$0xff]
        %v2559 = vld [vmem:[#allocation3 + $0x38] sm:$0xff]
        %v2560 = vld [vmem:[#allocation3 + $0x40] sm:$0xff]
        %v2561 = vld [vmem:[#allocation3 + $0x48] sm:$0xff]
        %v2562 = vld [vmem:[#allocation3 + $0x50] sm:$0xff]
        %v2563 = vld [vmem:[#allocation3 + $0x58] sm:$0xff]
        %v2564 = vld [vmem:[#allocation3 + $0x60] sm:$0xff]
        %v2565 = vld [vmem:[#allocation3 + $0x68] sm:$0xff]
        %v2566 = vld [vmem:[#allocation3 + $0x70] sm:$0xff]
        %v2567 = vld [vmem:[#allocation3 + $0x78] sm:$0xff]
        %v2568 = vld [vmem:[%s1347] sm:$0xff]
        %v2569 = vld [vmem:[%s1347 + $0x8] sm:$0xff]
        %v2570 = vld [vmem:[%s1347 + $0x10] sm:$0xff]
        %v2571 = vld [vmem:[%s1347 + $0x18] sm:$0xff]
        %v2572 = vld [vmem:[%s1347 + $0x20] sm:$0xff]
        %v2573 = vld [vmem:[%s1347 + $0x28] sm:$0xff]
        %v2574 = vld [vmem:[%s1347 + $0x30] sm:$0xff]
        %v2575 = vld [vmem:[%s1347 + $0x38] sm:$0xff]
        %v2576 = vld [vmem:[%s1347 + $0x40] sm:$0xff]
        %v2577 = vld [vmem:[%s1347 + $0x48] sm:$0xff]
        %v2578 = vld [vmem:[%s1347 + $0x50] sm:$0xff]
        %v2579 = vld [vmem:[%s1347 + $0x58] sm:$0xff]
        %v2580 = vld [vmem:[%s1347 + $0x60] sm:$0xff]
        %v2581 = vld [vmem:[%s1347 + $0x68] sm:$0xff]
        %v2582 = vld [vmem:[%s1347 + $0x70] sm:$0xff]
        %v2583 = vld [vmem:[%s1347 + $0x78] sm:$0xff]
        %v2584 = vmax.bf16 %v2552, %v2568
        %v2585 = vmax.bf16 %v2553, %v2569
        %v2586 = vmax.bf16 %v2554, %v2570
        %v2587 = vmax.bf16 %v2555, %v2571
        %v2588 = vmax.bf16 %v2556, %v2572
        %v2589 = vmax.bf16 %v2557, %v2573
        %v2590 = vmax.bf16 %v2558, %v2574
        %v2591 = vmax.bf16 %v2559, %v2575
        %v2592 = vmax.bf16 %v2560, %v2576
        %v2593 = vmax.bf16 %v2561, %v2577
        %v2594 = vmax.bf16 %v2562, %v2578
        %v2595 = vmax.bf16 %v2563, %v2579
        %v2596 = vmax.bf16 %v2564, %v2580
        %v2597 = vmax.bf16 %v2565, %v2581
        %v2598 = vmax.bf16 %v2566, %v2582
        %v2599 = vmax.bf16 %v2567, %v2583
        %v2600 = vld [vmem:[%s1314] sm:$0xff]
        %v2601 = vld [vmem:[%s1314 + $0x8] sm:$0xff]
        %v2602 = vld [vmem:[%s1314 + $0x10] sm:$0xff]
        %v2603 = vld [vmem:[%s1314 + $0x18] sm:$0xff]
        %v2604 = vld [vmem:[%s1314 + $0x20] sm:$0xff]
        %v2605 = vld [vmem:[%s1314 + $0x28] sm:$0xff]
        %v2606 = vld [vmem:[%s1314 + $0x30] sm:$0xff]
        %v2607 = vld [vmem:[%s1314 + $0x38] sm:$0xff]
        %v2608 = vld [vmem:[%s1314 + $0x40] sm:$0xff]
        %v2609 = vld [vmem:[%s1314 + $0x48] sm:$0xff]
        %v2610 = vld [vmem:[%s1314 + $0x50] sm:$0xff]
        %v2611 = vld [vmem:[%s1314 + $0x58] sm:$0xff]
        %v2612 = vld [vmem:[%s1314 + $0x60] sm:$0xff]
        %v2613 = vld [vmem:[%s1314 + $0x68] sm:$0xff]
        %v2614 = vld [vmem:[%s1314 + $0x70] sm:$0xff]
        %v2615 = vld [vmem:[%s1314 + $0x78] sm:$0xff]
        %v2616 = vmax.bf16 %v2584, %v2600
        %v2617 = vmax.bf16 %v2585, %v2601
        %v2618 = vmax.bf16 %v2586, %v2602
        %v2619 = vmax.bf16 %v2587, %v2603
        %v2620 = vmax.bf16 %v2588, %v2604
        %v2621 = vmax.bf16 %v2589, %v2605
        %v2622 = vmax.bf16 %v2590, %v2606
        %v2623 = vmax.bf16 %v2591, %v2607
        %v2624 = vmax.bf16 %v2592, %v2608
        %v2625 = vmax.bf16 %v2593, %v2609
        %v2626 = vmax.bf16 %v2594, %v2610
        %v2627 = vmax.bf16 %v2595, %v2611
        %v2628 = vmax.bf16 %v2596, %v2612
        %v2629 = vmax.bf16 %v2597, %v2613
        %v2630 = vmax.bf16 %v2598, %v2614
        %v2631 = vmax.bf16 %v2599, %v2615
        %v2632 = vld [vmem:[%s1412] sm:$0xff]
        %v2633 = vld [vmem:[%s1412 + $0x8] sm:$0xff]
        %v2634 = vld [vmem:[%s1412 + $0x10] sm:$0xff]
        %v2635 = vld [vmem:[%s1412 + $0x18] sm:$0xff]
        %v2636 = vld [vmem:[%s1412 + $0x20] sm:$0xff]
        %v2637 = vld [vmem:[%s1412 + $0x28] sm:$0xff]
        %v2638 = vld [vmem:[%s1412 + $0x30] sm:$0xff]
        %v2639 = vld [vmem:[%s1412 + $0x38] sm:$0xff]
        %v2640 = vld [vmem:[%s1412 + $0x40] sm:$0xff]
        %v2641 = vld [vmem:[%s1412 + $0x48] sm:$0xff]
        %v2642 = vld [vmem:[%s1412 + $0x50] sm:$0xff]
        %v2643 = vld [vmem:[%s1412 + $0x58] sm:$0xff]
        %v2644 = vld [vmem:[%s1412 + $0x60] sm:$0xff]
        %v2645 = vld [vmem:[%s1412 + $0x68] sm:$0xff]
        %v2646 = vld [vmem:[%s1412 + $0x70] sm:$0xff]
        %v2647 = vld [vmem:[%s1412 + $0x78] sm:$0xff]
        %v2648 = vmax.bf16 %v2616, %v2632
        %v2649 = vmax.bf16 %v2617, %v2633
        %v2650 = vmax.bf16 %v2618, %v2634
        %v2651 = vmax.bf16 %v2619, %v2635
        %v2652 = vmax.bf16 %v2620, %v2636
        %v2653 = vmax.bf16 %v2621, %v2637
        %v2654 = vmax.bf16 %v2622, %v2638
        %v2655 = vmax.bf16 %v2623, %v2639
        %v2656 = vmax.bf16 %v2624, %v2640
        %v2657 = vmax.bf16 %v2625, %v2641
        %v2658 = vmax.bf16 %v2626, %v2642
        %v2659 = vmax.bf16 %v2627, %v2643
        %v2660 = vmax.bf16 %v2628, %v2644
        %v2661 = vmax.bf16 %v2629, %v2645
        %v2662 = vmax.bf16 %v2630, %v2646
        %v2663 = vmax.bf16 %v2631, %v2647
        %v2664 = vld [vmem:[%s1445] sm:$0xff]
        %v2665 = vld [vmem:[%s1445 + $0x8] sm:$0xff]
        %v2666 = vld [vmem:[%s1445 + $0x10] sm:$0xff]
        %v2667 = vld [vmem:[%s1445 + $0x18] sm:$0xff]
        %v2668 = vld [vmem:[%s1445 + $0x20] sm:$0xff]
        %v2669 = vld [vmem:[%s1445 + $0x28] sm:$0xff]
        %v2670 = vld [vmem:[%s1445 + $0x30] sm:$0xff]
        %v2671 = vld [vmem:[%s1445 + $0x38] sm:$0xff]
        %v2672 = vld [vmem:[%s1445 + $0x40] sm:$0xff]
        %v2673 = vld [vmem:[%s1445 + $0x48] sm:$0xff]
        %v2674 = vld [vmem:[%s1445 + $0x50] sm:$0xff]
        %v2675 = vld [vmem:[%s1445 + $0x58] sm:$0xff]
        %v2676 = vld [vmem:[%s1445 + $0x60] sm:$0xff]
        %v2677 = vld [vmem:[%s1445 + $0x68] sm:$0xff]
        %v2678 = vld [vmem:[%s1445 + $0x70] sm:$0xff]
        %v2679 = vld [vmem:[%s1445 + $0x78] sm:$0xff]
        %v2680 = vmax.bf16 %v2648, %v2664
        %v2681 = vmax.bf16 %v2649, %v2665
        %v2682 = vmax.bf16 %v2650, %v2666
        %v2683 = vmax.bf16 %v2651, %v2667
        %v2684 = vmax.bf16 %v2652, %v2668
        %v2685 = vmax.bf16 %v2653, %v2669
        %v2686 = vmax.bf16 %v2654, %v2670
        %v2687 = vmax.bf16 %v2655, %v2671
        %v2688 = vmax.bf16 %v2656, %v2672
        %v2689 = vmax.bf16 %v2657, %v2673
        %v2690 = vmax.bf16 %v2658, %v2674
        %v2691 = vmax.bf16 %v2659, %v2675
        %v2692 = vmax.bf16 %v2660, %v2676
        %v2693 = vmax.bf16 %v2661, %v2677
        %v2694 = vmax.bf16 %v2662, %v2678
        %v2695 = vmax.bf16 %v2663, %v2679
        %2712 = vrot.lane.b32.xlu0 %v2680, 48
        %v2713 = vpop.permute.xlu0 %2712
        %2714 = vrot.lane.b32.xlu0 %v2681, 48
        %v2715 = vpop.permute.xlu0 %2714
        %2716 = vrot.lane.b32.xlu0 %v2682, 48
        %v2717 = vpop.permute.xlu0 %2716
        %2718 = vrot.lane.b32.xlu0 %v2683, 48
        %v2719 = vpop.permute.xlu0 %2718
        %2720 = vrot.lane.b32.xlu0 %v2684, 48
        %v2721 = vpop.permute.xlu0 %2720
        %2722 = vrot.lane.b32.xlu0 %v2685, 48
        %v2723 = vpop.permute.xlu0 %2722
        %2724 = vrot.lane.b32.xlu0 %v2686, 48
        %v2725 = vpop.permute.xlu0 %2724
        %2726 = vrot.lane.b32.xlu0 %v2687, 48
        %v2727 = vpop.permute.xlu0 %2726
        %2728 = vrot.lane.b32.xlu0 %v2688, 48
        %v2729 = vpop.permute.xlu0 %2728
        %2730 = vrot.lane.b32.xlu0 %v2689, 48
        %v2731 = vpop.permute.xlu0 %2730
        %2732 = vrot.lane.b32.xlu0 %v2690, 48
        %v2733 = vpop.permute.xlu0 %2732
        %2734 = vrot.lane.b32.xlu0 %v2691, 48
        %v2735 = vpop.permute.xlu0 %2734
        %2736 = vrot.lane.b32.xlu0 %v2692, 48
        %v2737 = vpop.permute.xlu0 %2736
        %2738 = vrot.lane.b32.xlu0 %v2693, 48
        %v2739 = vpop.permute.xlu0 %2738
        %2740 = vrot.lane.b32.xlu0 %v2694, 48
        %v2741 = vpop.permute.xlu0 %2740
        %2742 = vrot.lane.b32.xlu0 %v2695, 48
        %v2743 = vpop.permute.xlu0 %2742
        %vm2760 = vcmask 523648
        %2761 = vst.msk [vmem:[#allocation4] sm:$0xff] %vm2760, %v2713
        %2762 = vst.msk [vmem:[#allocation4 + $0x8] sm:$0xff] %vm2760, %v2715
        %2763 = vst.msk [vmem:[#allocation4 + $0x10] sm:$0xff] %vm2760, %v2717
        %2764 = vst.msk [vmem:[#allocation4 + $0x18] sm:$0xff] %vm2760, %v2719
        %2765 = vst.msk [vmem:[#allocation4 + $0x20] sm:$0xff] %vm2760, %v2721
        %2766 = vst.msk [vmem:[#allocation4 + $0x28] sm:$0xff] %vm2760, %v2723
        %2767 = vst.msk [vmem:[#allocation4 + $0x30] sm:$0xff] %vm2760, %v2725
        %2768 = vst.msk [vmem:[#allocation4 + $0x38] sm:$0xff] %vm2760, %v2727
        %2769 = vst.msk [vmem:[#allocation4 + $0x40] sm:$0xff] %vm2760, %v2729
        %2770 = vst.msk [vmem:[#allocation4 + $0x48] sm:$0xff] %vm2760, %v2731
        %2771 = vst.msk [vmem:[#allocation4 + $0x50] sm:$0xff] %vm2760, %v2733
        %2772 = vst.msk [vmem:[#allocation4 + $0x58] sm:$0xff] %vm2760, %v2735
        %2773 = vst.msk [vmem:[#allocation4 + $0x60] sm:$0xff] %vm2760, %v2737
        %2774 = vst.msk [vmem:[#allocation4 + $0x68] sm:$0xff] %vm2760, %v2739
        %2775 = vst.msk [vmem:[#allocation4 + $0x70] sm:$0xff] %vm2760, %v2741
        %2776 = vst.msk [vmem:[#allocation4 + $0x78] sm:$0xff] %vm2760, %v2743
        %v2777 = vld [vmem:[#allocation4] sm:$0xff]
        %v2778 = vld [vmem:[#allocation4 + $0x8] sm:$0xff]
        %v2779 = vld [vmem:[#allocation4 + $0x10] sm:$0xff]
        %v2780 = vld [vmem:[#allocation4 + $0x18] sm:$0xff]
        %v2781 = vld [vmem:[#allocation4 + $0x20] sm:$0xff]
        %v2782 = vld [vmem:[#allocation4 + $0x28] sm:$0xff]
        %v2783 = vld [vmem:[#allocation4 + $0x30] sm:$0xff]
        %v2784 = vld [vmem:[#allocation4 + $0x38] sm:$0xff]
        %v2785 = vld [vmem:[#allocation4 + $0x40] sm:$0xff]
        %v2786 = vld [vmem:[#allocation4 + $0x48] sm:$0xff]
        %v2787 = vld [vmem:[#allocation4 + $0x50] sm:$0xff]
        %v2788 = vld [vmem:[#allocation4 + $0x58] sm:$0xff]
        %v2789 = vld [vmem:[#allocation4 + $0x60] sm:$0xff]
        %v2790 = vld [vmem:[#allocation4 + $0x68] sm:$0xff]
        %v2791 = vld [vmem:[#allocation4 + $0x70] sm:$0xff]
        %v2792 = vld [vmem:[#allocation4 + $0x78] sm:$0xff]
        %v2793 = vld [vmem:[%s4] sm:$0xf]
        %v2794 = vld [vmem:[%s4 + $0x4] sm:$0xf]
        %v2795 = vld [vmem:[%s4 + $0x8] sm:$0xf]
        %v2796 = vld [vmem:[%s4 + $0xc] sm:$0xf]
        %v2797 = vld [vmem:[%s4 + $0x10] sm:$0xf]
        %v2798 = vld [vmem:[%s4 + $0x14] sm:$0xf]
        %v2799 = vld [vmem:[%s4 + $0x18] sm:$0xf]
        %v2800 = vld [vmem:[%s4 + $0x1c] sm:$0xf]
        %v2809 = vunpack.c.l.b16 %v2793
        %v2810 = vunpack.c.l.b16 %v2794
        %v2811 = vunpack.c.l.b16 %v2795
        %v2812 = vunpack.c.l.b16 %v2796
        %v2813 = vunpack.c.l.b16 %v2797
        %v2814 = vunpack.c.l.b16 %v2798
        %v2815 = vunpack.c.l.b16 %v2799
        %v2816 = vunpack.c.l.b16 %v2800
        %v2817 = vpack.c.b16 %v2810, %v2809
        %v2818 = vpack.c.b16 %v2812, %v2811
        %v2819 = vpack.c.b16 %v2814, %v2813
        %v2820 = vpack.c.b16 %v2816, %v2815
        %vm2825 = vcmask 523264
        %v2827 = vsel %vm2825, %v2777, 0
        %v2830 = vsel %vm2825, %v2778, 0
        %v2833 = vsel %vm2825, %v2779, 0
        %v2836 = vsel %vm2825, %v2780, 0
        %v2839 = vsel %vm2825, %v2781, 0
        %v2842 = vsel %vm2825, %v2782, 0
        %v2845 = vsel %vm2825, %v2783, 0
        %v2848 = vsel %vm2825, %v2784, 0
        %v2851 = vsel %vm2825, %v2785, 0
        %v2854 = vsel %vm2825, %v2786, 0
        %v2857 = vsel %vm2825, %v2787, 0
        %v2860 = vsel %vm2825, %v2788, 0
        %v2863 = vsel %vm2825, %v2789, 0
        %v2866 = vsel %vm2825, %v2790, 0
        %v2869 = vsel %vm2825, %v2791, 0
        %v2872 = vsel %vm2825, %v2792, 0
        %2874 = vmatprep.subr.bf16.mxu0 0
        %2875 = vmatpush1.bf16.msra.mxu0 %v2817
        %2876 = vmatprep.subr.bf16.mxu0 0
        %2877 = vmatpush1.bf16.msra.mxu0 %v2818
        %2878 = vmatprep.subr.bf16.mxu0 0
        %2879 = vmatpush1.bf16.msra.mxu0 %v2819
        %2880 = vmatprep.subr.bf16.mxu0 0
        %2881 = vmatpush1.bf16.msra.mxu0 %v2820
        %2882 = vmatprep.subr.bf16.mxu0 0
        %2883 = vmatpush1.bf16.msra.mxu0 0
        %2884 = vmatprep.subr.bf16.mxu0 0
        %2885 = vmatpush1.bf16.msra.mxu0 0
        %2886 = vmatprep.subr.bf16.mxu0 0
        %2887 = vmatpush1.bf16.msra.mxu0 0
        %2888 = vmatprep.subr.bf16.mxu0 0
        %2889 = vmatpush1.bf16.msra.mxu0 0
        %2890 = vmatprep.subr.bf16.mxu0 0
        %2891 = vmatpush1.bf16.msra.mxu0 0
        %2892 = vmatprep.subr.bf16.mxu0 0
        %2893 = vmatpush1.bf16.msra.mxu0 0
        %2894 = vmatprep.subr.bf16.mxu0 0
        %2895 = vmatpush1.bf16.msra.mxu0 0
        %2896 = vmatprep.subr.bf16.mxu0 0
        %2897 = vmatpush1.bf16.msra.mxu0 0
        %2898 = vmatprep.subr.bf16.mxu0 0
        %2899 = vmatpush1.bf16.msra.mxu0 0
        %2900 = vmatprep.subr.bf16.mxu0 0
        %2901 = vmatpush1.bf16.msra.mxu0 0
        %2902 = vmatprep.subr.bf16.mxu0 0
        %2903 = vmatpush1.bf16.msra.mxu0 0
        %2904 = vmatprep.subr.bf16.mxu0 0
        %2905 = vmatpush1.bf16.msra.mxu0 0
        %2906 = vmatprep.mubr.bf16.mxu0 0
        %2907 = vmatmul.mubr.bf16.gmra.mrb[0].mxu0 %v2827
        %v2908 = vpop.f32.mrb[0].mxu0
        %v2909 = vadd.f32 0.0, %v2908
        %v2910 = vpop.f32.mrb[0].mxu0
        %v2911 = vpop.f32.mrb[0].mxu0
        %v2912 = vadd.f32 0.0, %v2911
        %v2913 = vpop.f32.mrb[0].mxu0
        %2914 = vmatprep.mubr.bf16.mxu0 0
        %2915 = vmatmul.mubr.bf16.gmra.mrb[0].mxu0 %v2830
        %v2916 = vpop.f32.mrb[0].mxu0
        %v2917 = vadd.f32 0.0, %v2916
        %v2918 = vpop.f32.mrb[0].mxu0
        %v2919 = vpop.f32.mrb[0].mxu0
        %v2920 = vadd.f32 0.0, %v2919
        %v2921 = vpop.f32.mrb[0].mxu0
        %2922 = vmatprep.mubr.bf16.mxu0 0
        %2923 = vmatmul.mubr.bf16.gmra.mrb[0].mxu0 %v2833
        %v2924 = vpop.f32.mrb[0].mxu0
        %v2925 = vadd.f32 0.0, %v2924
        %v2926 = vpop.f32.mrb[0].mxu0
        %v2927 = vpop.f32.mrb[0].mxu0
        %v2928 = vadd.f32 0.0, %v2927
        %v2929 = vpop.f32.mrb[0].mxu0
        %2930 = vmatprep.mubr.bf16.mxu0 0
        %2931 = vmatmul.mubr.bf16.gmra.mrb[0].mxu0 %v2836
        %v2932 = vpop.f32.mrb[0].mxu0
        %v2933 = vadd.f32 0.0, %v2932
        %v2934 = vpop.f32.mrb[0].mxu0
        %v2935 = vpop.f32.mrb[0].mxu0
        %v2936 = vadd.f32 0.0, %v2935
        %v2937 = vpop.f32.mrb[0].mxu0
        %2938 = vmatprep.mubr.bf16.mxu0 0
        %2939 = vmatmul.mubr.bf16.gmra.mrb[0].mxu0 %v2839
        %v2940 = vpop.f32.mrb[0].mxu0
        %v2941 = vadd.f32 0.0, %v2940
        %v2942 = vpop.f32.mrb[0].mxu0
        %v2943 = vpop.f32.mrb[0].mxu0
        %v2944 = vadd.f32 0.0, %v2943
        %v2945 = vpop.f32.mrb[0].mxu0
        %2946 = vmatprep.mubr.bf16.mxu0 0
        %2947 = vmatmul.mubr.bf16.gmra.mrb[0].mxu0 %v2842
        %v2948 = vpop.f32.mrb[0].mxu0
        %v2949 = vadd.f32 0.0, %v2948
        %v2950 = vpop.f32.mrb[0].mxu0
        %v2951 = vpop.f32.mrb[0].mxu0
        %v2952 = vadd.f32 0.0, %v2951
        %v2953 = vpop.f32.mrb[0].mxu0
        %2954 = vmatprep.mubr.bf16.mxu0 0
        %2955 = vmatmul.mubr.bf16.gmra.mrb[0].mxu0 %v2845
        %v2956 = vpop.f32.mrb[0].mxu0
        %v2957 = vadd.f32 0.0, %v2956
        %v2958 = vpop.f32.mrb[0].mxu0
        %v2959 = vpop.f32.mrb[0].mxu0
        %v2960 = vadd.f32 0.0, %v2959
        %v2961 = vpop.f32.mrb[0].mxu0
        %2962 = vmatprep.mubr.bf16.mxu0 0
        %2963 = vmatmul.mubr.bf16.gmra.mrb[0].mxu0 %v2848
        %v2964 = vpop.f32.mrb[0].mxu0
        %v2965 = vadd.f32 0.0, %v2964
        %v2966 = vpop.f32.mrb[0].mxu0
        %v2967 = vpop.f32.mrb[0].mxu0
        %v2968 = vadd.f32 0.0, %v2967
        %v2969 = vpop.f32.mrb[0].mxu0
        %2970 = vmatprep.mubr.bf16.mxu0 0
        %2971 = vmatmul.mubr.bf16.gmra.mrb[0].mxu0 %v2851
        %v2972 = vpop.f32.mrb[0].mxu0
        %v2973 = vadd.f32 0.0, %v2972
        %v2974 = vpop.f32.mrb[0].mxu0
        %v2975 = vpop.f32.mrb[0].mxu0
        %v2976 = vadd.f32 0.0, %v2975
        %v2977 = vpop.f32.mrb[0].mxu0
        %2978 = vmatprep.mubr.bf16.mxu0 0
        %2979 = vmatmul.mubr.bf16.gmra.mrb[0].mxu0 %v2854
        %v2980 = vpop.f32.mrb[0].mxu0
        %v2981 = vadd.f32 0.0, %v2980
        %v2982 = vpop.f32.mrb[0].mxu0
        %v2983 = vpop.f32.mrb[0].mxu0
        %v2984 = vadd.f32 0.0, %v2983
        %v2985 = vpop.f32.mrb[0].mxu0
        %2986 = vmatprep.mubr.bf16.mxu0 0
        %2987 = vmatmul.mubr.bf16.gmra.mrb[0].mxu0 %v2857
        %v2988 = vpop.f32.mrb[0].mxu0
        %v2989 = vadd.f32 0.0, %v2988
        %v2990 = vpop.f32.mrb[0].mxu0
        %v2991 = vpop.f32.mrb[0].mxu0
        %v2992 = vadd.f32 0.0, %v2991
        %v2993 = vpop.f32.mrb[0].mxu0
        %2994 = vmatprep.mubr.bf16.mxu0 0
        %2995 = vmatmul.mubr.bf16.gmra.mrb[0].mxu0 %v2860
        %v2996 = vpop.f32.mrb[0].mxu0
        %v2997 = vadd.f32 0.0, %v2996
        %v2998 = vpop.f32.mrb[0].mxu0
        %v2999 = vpop.f32.mrb[0].mxu0
        %v3000 = vadd.f32 0.0, %v2999
        %v3001 = vpop.f32.mrb[0].mxu0
        %3002 = vmatprep.mubr.bf16.mxu0 0
        %3003 = vmatmul.mubr.bf16.gmra.mrb[0].mxu0 %v2863
        %v3004 = vpop.f32.mrb[0].mxu0
        %v3005 = vadd.f32 0.0, %v3004
        %v3006 = vpop.f32.mrb[0].mxu0
        %v3007 = vpop.f32.mrb[0].mxu0
        %v3008 = vadd.f32 0.0, %v3007
        %v3009 = vpop.f32.mrb[0].mxu0
        %3010 = vmatprep.mubr.bf16.mxu0 0
        %3011 = vmatmul.mubr.bf16.gmra.mrb[0].mxu0 %v2866
        %v3012 = vpop.f32.mrb[0].mxu0
        %v3013 = vadd.f32 0.0, %v3012
        %v3014 = vpop.f32.mrb[0].mxu0
        %v3015 = vpop.f32.mrb[0].mxu0
        %v3016 = vadd.f32 0.0, %v3015
        %v3017 = vpop.f32.mrb[0].mxu0
        %3018 = vmatprep.mubr.bf16.mxu0 0
        %3019 = vmatmul.mubr.bf16.gmra.mrb[0].mxu0 %v2869
        %v3020 = vpop.f32.mrb[0].mxu0
        %v3021 = vadd.f32 0.0, %v3020
        %v3022 = vpop.f32.mrb[0].mxu0
        %v3023 = vpop.f32.mrb[0].mxu0
        %v3024 = vadd.f32 0.0, %v3023
        %v3025 = vpop.f32.mrb[0].mxu0
        %3026 = vmatprep.mubr.bf16.mxu0 0
        %3027 = vmatmul.mubr.bf16.gmra.mrb[0].mxu0 %v2872
        %v3028 = vpop.f32.mrb[0].mxu0
        %v3029 = vadd.f32 0.0, %v3028
        %v3030 = vpop.f32.mrb[0].mxu0
        %v3031 = vpop.f32.mrb[0].mxu0
        %v3032 = vadd.f32 0.0, %v3031
        %v3033 = vpop.f32.mrb[0].mxu0
        %3034 = vdwg.mxu0
        %v3035 = vld [vmem:[%s5] sm:$0x1]
        %v3037 = vlaneseq
        %v3038 = vshrl.u32 %v3037, 7
        %v3039 = vsub.s32 0, %v3038
        %v3040 = vrot.slane %v3035, %v3039
        %v3042 = vmul.f32 %v2909, %v3040
        %v3043 = vmul.f32 %v2912, %v3040
        %v3044 = vmul.f32 %v2917, %v3040
        %v3045 = vmul.f32 %v2920, %v3040
        %v3046 = vmul.f32 %v2925, %v3040
        %v3047 = vmul.f32 %v2928, %v3040
        %v3048 = vmul.f32 %v2933, %v3040
        %v3049 = vmul.f32 %v2936, %v3040
        %v3050 = vmul.f32 %v2941, %v3040
        %v3051 = vmul.f32 %v2944, %v3040
        %v3052 = vmul.f32 %v2949, %v3040
        %v3053 = vmul.f32 %v2952, %v3040
        %v3054 = vmul.f32 %v2957, %v3040
        %v3055 = vmul.f32 %v2960, %v3040
        %v3056 = vmul.f32 %v2965, %v3040
        %v3057 = vmul.f32 %v2968, %v3040
        %v3058 = vmul.f32 %v2973, %v3040
        %v3059 = vmul.f32 %v2976, %v3040
        %v3060 = vmul.f32 %v2981, %v3040
        %v3061 = vmul.f32 %v2984, %v3040
        %v3062 = vmul.f32 %v2989, %v3040
        %v3063 = vmul.f32 %v2992, %v3040
        %v3064 = vmul.f32 %v2997, %v3040
        %v3065 = vmul.f32 %v3000, %v3040
        %v3066 = vmul.f32 %v3005, %v3040
        %v3067 = vmul.f32 %v3008, %v3040
        %v3068 = vmul.f32 %v3013, %v3040
        %v3069 = vmul.f32 %v3016, %v3040
        %v3070 = vmul.f32 %v3021, %v3040
        %v3071 = vmul.f32 %v3024, %v3040
        %v3072 = vmul.f32 %v3029, %v3040
        %v3073 = vmul.f32 %v3032, %v3040
        %v3074 = vld [vmem:[%s6] sm:$0x1]
        %v3076 = vlaneseq
        %v3077 = vshrl.u32 %v3076, 7
        %v3078 = vsub.s32 0, %v3077
        %v3079 = vrot.slane %v3074, %v3078
        %v3081 = vadd.f32 %v3042, %v3079
        %v3082 = vadd.f32 %v3043, %v3079
        %v3083 = vadd.f32 %v3044, %v3079
        %v3084 = vadd.f32 %v3045, %v3079
        %v3085 = vadd.f32 %v3046, %v3079
        %v3086 = vadd.f32 %v3047, %v3079
        %v3087 = vadd.f32 %v3048, %v3079
        %v3088 = vadd.f32 %v3049, %v3079
        %v3089 = vadd.f32 %v3050, %v3079
        %v3090 = vadd.f32 %v3051, %v3079
        %v3091 = vadd.f32 %v3052, %v3079
        %v3092 = vadd.f32 %v3053, %v3079
        %v3093 = vadd.f32 %v3054, %v3079
        %v3094 = vadd.f32 %v3055, %v3079
        %v3095 = vadd.f32 %v3056, %v3079
        %v3096 = vadd.f32 %v3057, %v3079
        %v3097 = vadd.f32 %v3058, %v3079
        %v3098 = vadd.f32 %v3059, %v3079
        %v3099 = vadd.f32 %v3060, %v3079
        %v3100 = vadd.f32 %v3061, %v3079
        %v3101 = vadd.f32 %v3062, %v3079
        %v3102 = vadd.f32 %v3063, %v3079
        %v3103 = vadd.f32 %v3064, %v3079
        %v3104 = vadd.f32 %v3065, %v3079
        %v3105 = vadd.f32 %v3066, %v3079
        %v3106 = vadd.f32 %v3067, %v3079
        %v3107 = vadd.f32 %v3068, %v3079
        %v3108 = vadd.f32 %v3069, %v3079
        %v3109 = vadd.f32 %v3070, %v3079
        %v3110 = vadd.f32 %v3071, %v3079
        %v3111 = vadd.f32 %v3072, %v3079
        %v3112 = vadd.f32 %v3073, %v3079
        %v3113 = vxor.u32 %v3081, 2147483648
        %v3114 = vxor.u32 %v3082, 2147483648
        %v3115 = vxor.u32 %v3083, 2147483648
        %v3116 = vxor.u32 %v3084, 2147483648
        %v3117 = vxor.u32 %v3085, 2147483648
        %v3118 = vxor.u32 %v3086, 2147483648
        %v3119 = vxor.u32 %v3087, 2147483648
        %v3120 = vxor.u32 %v3088, 2147483648
        %v3121 = vxor.u32 %v3089, 2147483648
        %v3122 = vxor.u32 %v3090, 2147483648
        %v3123 = vxor.u32 %v3091, 2147483648
        %v3124 = vxor.u32 %v3092, 2147483648
        %v3125 = vxor.u32 %v3093, 2147483648
        %v3126 = vxor.u32 %v3094, 2147483648
        %v3127 = vxor.u32 %v3095, 2147483648
        %v3128 = vxor.u32 %v3096, 2147483648
        %v3129 = vxor.u32 %v3097, 2147483648
        %v3130 = vxor.u32 %v3098, 2147483648
        %v3131 = vxor.u32 %v3099, 2147483648
        %v3132 = vxor.u32 %v3100, 2147483648
        %v3133 = vxor.u32 %v3101, 2147483648
        %v3134 = vxor.u32 %v3102, 2147483648
        %v3135 = vxor.u32 %v3103, 2147483648
        %v3136 = vxor.u32 %v3104, 2147483648
        %v3137 = vxor.u32 %v3105, 2147483648
        %v3138 = vxor.u32 %v3106, 2147483648
        %v3139 = vxor.u32 %v3107, 2147483648
        %v3140 = vxor.u32 %v3108, 2147483648
        %v3141 = vxor.u32 %v3109, 2147483648
        %v3142 = vxor.u32 %v3110, 2147483648
        %v3143 = vxor.u32 %v3111, 2147483648
        %v3144 = vxor.u32 %v3112, 2147483648
        %v3145 = vmul.f32 %v3113, 1.442695
        %v3146 = vpow.pop %v3145
        %v3147 = vmul.f32 %v3114, 1.442695
        %v3148 = vpow.pop %v3147
        %v3149 = vmul.f32 %v3115, 1.442695
        %v3150 = vpow.pop %v3149
        %v3151 = vmul.f32 %v3116, 1.442695
        %v3152 = vpow.pop %v3151
        %v3153 = vmul.f32 %v3117, 1.442695
        %v3154 = vpow.pop %v3153
        %v3155 = vmul.f32 %v3118, 1.442695
        %v3156 = vpow.pop %v3155
        %v3157 = vmul.f32 %v3119, 1.442695
        %v3158 = vpow.pop %v3157
        %v3159 = vmul.f32 %v3120, 1.442695
        %v3160 = vpow.pop %v3159
        %v3161 = vmul.f32 %v3121, 1.442695
        %v3162 = vpow.pop %v3161
        %v3163 = vmul.f32 %v3122, 1.442695
        %v3164 = vpow.pop %v3163
        %v3165 = vmul.f32 %v3123, 1.442695
        %v3166 = vpow.pop %v3165
        %v3167 = vmul.f32 %v3124, 1.442695
        %v3168 = vpow.pop %v3167
        %v3169 = vmul.f32 %v3125, 1.442695
        %v3170 = vpow.pop %v3169
        %v3171 = vmul.f32 %v3126, 1.442695
        %v3172 = vpow.pop %v3171
        %v3173 = vmul.f32 %v3127, 1.442695
        %v3174 = vpow.pop %v3173
        %v3175 = vmul.f32 %v3128, 1.442695
        %v3176 = vpow.pop %v3175
        %v3177 = vmul.f32 %v3129, 1.442695
        %v3178 = vpow.pop %v3177
        %v3179 = vmul.f32 %v3130, 1.442695
        %v3180 = vpow.pop %v3179
        %v3181 = vmul.f32 %v3131, 1.442695
        %v3182 = vpow.pop %v3181
        %v3183 = vmul.f32 %v3132, 1.442695
        %v3184 = vpow.pop %v3183
        %v3185 = vmul.f32 %v3133, 1.442695
        %v3186 = vpow.pop %v3185
        %v3187 = vmul.f32 %v3134, 1.442695
        %v3188 = vpow.pop %v3187
        %v3189 = vmul.f32 %v3135, 1.442695
        %v3190 = vpow.pop %v3189
        %v3191 = vmul.f32 %v3136, 1.442695
        %v3192 = vpow.pop %v3191
        %v3193 = vmul.f32 %v3137, 1.442695
        %v3194 = vpow.pop %v3193
        %v3195 = vmul.f32 %v3138, 1.442695
        %v3196 = vpow.pop %v3195
        %v3197 = vmul.f32 %v3139, 1.442695
        %v3198 = vpow.pop %v3197
        %v3199 = vmul.f32 %v3140, 1.442695
        %v3200 = vpow.pop %v3199
        %v3201 = vmul.f32 %v3141, 1.442695
        %v3202 = vpow.pop %v3201
        %v3203 = vmul.f32 %v3142, 1.442695
        %v3204 = vpow.pop %v3203
        %v3205 = vmul.f32 %v3143, 1.442695
        %v3206 = vpow.pop %v3205
        %v3207 = vmul.f32 %v3144, 1.442695
        %v3208 = vpow.pop %v3207
        %v3209 = vadd.f32 %v3146, 1.0
        %v3210 = vadd.f32 %v3148, 1.0
        %v3211 = vadd.f32 %v3150, 1.0
        %v3212 = vadd.f32 %v3152, 1.0
        %v3213 = vadd.f32 %v3154, 1.0
        %v3214 = vadd.f32 %v3156, 1.0
        %v3215 = vadd.f32 %v3158, 1.0
        %v3216 = vadd.f32 %v3160, 1.0
        %v3217 = vadd.f32 %v3162, 1.0
        %v3218 = vadd.f32 %v3164, 1.0
        %v3219 = vadd.f32 %v3166, 1.0
        %v3220 = vadd.f32 %v3168, 1.0
        %v3221 = vadd.f32 %v3170, 1.0
        %v3222 = vadd.f32 %v3172, 1.0
        %v3223 = vadd.f32 %v3174, 1.0
        %v3224 = vadd.f32 %v3176, 1.0
        %v3225 = vadd.f32 %v3178, 1.0
        %v3226 = vadd.f32 %v3180, 1.0
        %v3227 = vadd.f32 %v3182, 1.0
        %v3228 = vadd.f32 %v3184, 1.0
        %v3229 = vadd.f32 %v3186, 1.0
        %v3230 = vadd.f32 %v3188, 1.0
        %v3231 = vadd.f32 %v3190, 1.0
        %v3232 = vadd.f32 %v3192, 1.0
        %v3233 = vadd.f32 %v3194, 1.0
        %v3234 = vadd.f32 %v3196, 1.0
        %v3235 = vadd.f32 %v3198, 1.0
        %v3236 = vadd.f32 %v3200, 1.0
        %v3237 = vadd.f32 %v3202, 1.0
        %v3238 = vadd.f32 %v3204, 1.0
        %v3239 = vadd.f32 %v3206, 1.0
        %v3240 = vadd.f32 %v3208, 1.0
        %v3241 = vrcp.pop %v3209
        %v3242 = vmul.f32 1.0, %v3241
        %v3243 = vrcp.pop %v3210
        %v3244 = vmul.f32 1.0, %v3243
        %v3245 = vrcp.pop %v3211
        %v3246 = vmul.f32 1.0, %v3245
        %v3247 = vrcp.pop %v3212
        %v3248 = vmul.f32 1.0, %v3247
        %v3249 = vrcp.pop %v3213
        %v3250 = vmul.f32 1.0, %v3249
        %v3251 = vrcp.pop %v3214
        %v3252 = vmul.f32 1.0, %v3251
        %v3253 = vrcp.pop %v3215
        %v3254 = vmul.f32 1.0, %v3253
        %v3255 = vrcp.pop %v3216
        %v3256 = vmul.f32 1.0, %v3255
        %v3257 = vrcp.pop %v3217
        %v3258 = vmul.f32 1.0, %v3257
        %v3259 = vrcp.pop %v3218
        %v3260 = vmul.f32 1.0, %v3259
        %v3261 = vrcp.pop %v3219
        %v3262 = vmul.f32 1.0, %v3261
        %v3263 = vrcp.pop %v3220
        %v3264 = vmul.f32 1.0, %v3263
        %v3265 = vrcp.pop %v3221
        %v3266 = vmul.f32 1.0, %v3265
        %v3267 = vrcp.pop %v3222
        %v3268 = vmul.f32 1.0, %v3267
        %v3269 = vrcp.pop %v3223
        %v3270 = vmul.f32 1.0, %v3269
        %v3271 = vrcp.pop %v3224
        %v3272 = vmul.f32 1.0, %v3271
        %v3273 = vrcp.pop %v3225
        %v3274 = vmul.f32 1.0, %v3273
        %v3275 = vrcp.pop %v3226
        %v3276 = vmul.f32 1.0, %v3275
        %v3277 = vrcp.pop %v3227
        %v3278 = vmul.f32 1.0, %v3277
        %v3279 = vrcp.pop %v3228
        %v3280 = vmul.f32 1.0, %v3279
        %v3281 = vrcp.pop %v3229
        %v3282 = vmul.f32 1.0, %v3281
        %v3283 = vrcp.pop %v3230
        %v3284 = vmul.f32 1.0, %v3283
        %v3285 = vrcp.pop %v3231
        %v3286 = vmul.f32 1.0, %v3285
        %v3287 = vrcp.pop %v3232
        %v3288 = vmul.f32 1.0, %v3287
        %v3289 = vrcp.pop %v3233
        %v3290 = vmul.f32 1.0, %v3289
        %v3291 = vrcp.pop %v3234
        %v3292 = vmul.f32 1.0, %v3291
        %v3293 = vrcp.pop %v3235
        %v3294 = vmul.f32 1.0, %v3293
        %v3295 = vrcp.pop %v3236
        %v3296 = vmul.f32 1.0, %v3295
        %v3297 = vrcp.pop %v3237
        %v3298 = vmul.f32 1.0, %v3297
        %v3299 = vrcp.pop %v3238
        %v3300 = vmul.f32 1.0, %v3299
        %v3301 = vrcp.pop %v3239
        %v3302 = vmul.f32 1.0, %v3301
        %v3303 = vrcp.pop %v3240
        %v3304 = vmul.f32 1.0, %v3303
        %v3305 = vmul.f32 %v3081, %v3242
        %v3306 = vmul.f32 %v3082, %v3244
        %v3307 = vmul.f32 %v3083, %v3246
        %v3308 = vmul.f32 %v3084, %v3248
        %v3309 = vmul.f32 %v3085, %v3250
        %v3310 = vmul.f32 %v3086, %v3252
        %v3311 = vmul.f32 %v3087, %v3254
        %v3312 = vmul.f32 %v3088, %v3256
        %v3313 = vmul.f32 %v3089, %v3258
        %v3314 = vmul.f32 %v3090, %v3260
        %v3315 = vmul.f32 %v3091, %v3262
        %v3316 = vmul.f32 %v3092, %v3264
        %v3317 = vmul.f32 %v3093, %v3266
        %v3318 = vmul.f32 %v3094, %v3268
        %v3319 = vmul.f32 %v3095, %v3270
        %v3320 = vmul.f32 %v3096, %v3272
        %v3321 = vmul.f32 %v3097, %v3274
        %v3322 = vmul.f32 %v3098, %v3276
        %v3323 = vmul.f32 %v3099, %v3278
        %v3324 = vmul.f32 %v3100, %v3280
        %v3325 = vmul.f32 %v3101, %v3282
        %v3326 = vmul.f32 %v3102, %v3284
        %v3327 = vmul.f32 %v3103, %v3286
        %v3328 = vmul.f32 %v3104, %v3288
        %v3329 = vmul.f32 %v3105, %v3290
        %v3330 = vmul.f32 %v3106, %v3292
        %v3331 = vmul.f32 %v3107, %v3294
        %v3332 = vmul.f32 %v3108, %v3296
        %v3333 = vmul.f32 %v3109, %v3298
        %v3334 = vmul.f32 %v3110, %v3300
        %v3335 = vmul.f32 %v3111, %v3302
        %v3336 = vmul.f32 %v3112, %v3304
        %3337 = vst [vmem:[%s296] sm:$0xff] %v3305
        %3338 = vst [vmem:[%s296 + $0x8] sm:$0xff] %v3306
        %3339 = vst [vmem:[%s296 + $0x10] sm:$0xff] %v3307
        %3340 = vst [vmem:[%s296 + $0x18] sm:$0xff] %v3308
        %3341 = vst [vmem:[%s296 + $0x20] sm:$0xff] %v3309
        %3342 = vst [vmem:[%s296 + $0x28] sm:$0xff] %v3310
        %3343 = vst [vmem:[%s296 + $0x30] sm:$0xff] %v3311
        %3344 = vst [vmem:[%s296 + $0x38] sm:$0xff] %v3312
        %3345 = vst [vmem:[%s296 + $0x40] sm:$0xff] %v3313
        %3346 = vst [vmem:[%s296 + $0x48] sm:$0xff] %v3314
        %3347 = vst [vmem:[%s296 + $0x50] sm:$0xff] %v3315
        %3348 = vst [vmem:[%s296 + $0x58] sm:$0xff] %v3316
        %3349 = vst [vmem:[%s296 + $0x60] sm:$0xff] %v3317
        %3350 = vst [vmem:[%s296 + $0x68] sm:$0xff] %v3318
        %3351 = vst [vmem:[%s296 + $0x70] sm:$0xff] %v3319
        %3352 = vst [vmem:[%s296 + $0x78] sm:$0xff] %v3320
        %3353 = vst [vmem:[%s296 + $0x80] sm:$0xff] %v3321
        %3354 = vst [vmem:[%s296 + $0x88] sm:$0xff] %v3322
        %3355 = vst [vmem:[%s296 + $0x90] sm:$0xff] %v3323
        %3356 = vst [vmem:[%s296 + $0x98] sm:$0xff] %v3324
        %3357 = vst [vmem:[%s296 + $0xa0] sm:$0xff] %v3325
        %3358 = vst [vmem:[%s296 + $0xa8] sm:$0xff] %v3326
        %3359 = vst [vmem:[%s296 + $0xb0] sm:$0xff] %v3327
        %3360 = vst [vmem:[%s296 + $0xb8] sm:$0xff] %v3328
        %3361 = vst [vmem:[%s296 + $0xc0] sm:$0xff] %v3329
        %3362 = vst [vmem:[%s296 + $0xc8] sm:$0xff] %v3330
        %3363 = vst [vmem:[%s296 + $0xd0] sm:$0xff] %v3331
        %3364 = vst [vmem:[%s296 + $0xd8] sm:$0xff] %v3332
        %3365 = vst [vmem:[%s296 + $0xe0] sm:$0xff] %v3333
        %3366 = vst [vmem:[%s296 + $0xe8] sm:$0xff] %v3334
        %3367 = vst [vmem:[%s296 + $0xf0] sm:$0xff] %v3335
        %3368 = vst [vmem:[%s296 + $0xf8] sm:$0xff] %v3336
        %s3369 = sand.u32 %s184, 1
        %s3370 = scalar_lea.sflag [#allocation7], %s3369
        %s3371 = sand.u32 %s184, 1
        %s3372 = smul.addr %s3371, 256
        %s3373 = scalar_lea.vmem [#allocation8], %s3372
        // Predicated region
        $region53: #{sppf_forward.1} parent=47 // pred_check
          %p3374 = pneg %p194
        $region54: #{sppf_forward.1} parent=47 // pred_check_branch
          %3376 = sbr.rel (%p3374) target = $region56
        $region55: #{sppf_forward.1} parent=47 // pred_region
          %s3378 = ssub.s32 4096, 4096
          %3379 = vsyncadd %s3370, %s3378
          %s3380 = smul.addr %s24, 32
          %s3381 = smul.addr %s3380, 128
          %s3382 = scalar_lea.hbm %s7, %s3381
          %s3383 = sshll.u32 %s3373, 4
          %s3384 = int_to_ptr.vmem [resolvable:$true] %s3383
          %3389 = dma.vmem_to_hbm [thread:$0]  %s3384, 4096, %s3382, %s3370, 128, 128, 8
        $region56: #{sppf_forward.1} parent=47 // pred_fallthru
          _
      $region48: #{sppf_forward.1} parent=5 // pred_fallthru
        _
      %p3390 = scmp.le.s32.totalorder 2, %s19
      // Predicated region
      $region57: #{sppf_forward.1} parent=5 // pred_check
        %p3391 = pneg %p3390
      $region58: #{sppf_forward.1} parent=5 // pred_check_branch
        %3393 = sbr.rel (%p3391) target = $region60
      $region59: #{sppf_forward.1} parent=5 // pred_region
        %s3394 = ssub.s32 %s19, 2
        // Predicated region
        $region61: #{sppf_forward.1} parent=59 // pred_check
          %p3395 = pneg %p200
        $region62: #{sppf_forward.1} parent=59 // pred_check_branch
          %3397 = sbr.rel (%p3395) target = $region64
        $region63: #{sppf_forward.1} parent=59 // pred_region
          %s3398 = sand.u32 %s185, 1
          %s3399 = scalar_lea.sflag [#allocation7], %s3398
          %s3400 = sand.u32 %s185, 1
          %s3401 = smul.addr %s3400, 256
          %s3402 = scalar_lea.vmem [#allocation8], %s3401
          %3403 = dma.done %s3399, 4096
        $region64: #{sppf_forward.1} parent=59 // pred_fallthru
          _
      $region60: #{sppf_forward.1} parent=5 // pred_fallthru
        _
    $region6: #{sppf_forward.1} parent=1 // loop_footer
      %s23 = sadd.s32 1, %s19
    $region7: #{sppf_forward.1} parent=1 // loop_footer_branch
      %18 = sbr.rel target = $region3
    $region8: #{sppf_forward.1} parent=1 // loop_exit
      _
    %3404 = vsyncpa [#allocation6], 1
    %s3405 = scalar_lea.sflag [#allocation6], 1
    %3406 = vsyncpa %s3405, 1
    %3407 = vsyncpa [#allocation7], 1
    %s3408 = scalar_lea.sflag [#allocation7], 1
    %3409 = vsyncpa %s3408, 1

</llo_original>
